<compile_context>
chip_gen: v5e
topology: v5e:2x2
jax: 0.10.0
libtpu: 0.0.40
codegen_flags: <defaults>
</compile_context>

<pallas_src>
import functools

import jax
import jax.numpy as jnp
from jax import lax
from jax.experimental import pallas as pl
from jax.experimental.pallas import tpu as pltpu

LN_EPS = 1e-5


def _round_up(x, m):
    return (x + m - 1) // m * m


def _device_kind():
    try:
        return (jax.devices()[0].device_kind or "").lower()
    except Exception:
        return ""


def _vmem_capacity_bytes():
    """Physical VMEM per TensorCore (best effort, generation-aware fallback)."""
    try:
        info = pltpu.get_tpu_info()
        for name in ("vmem_capacity_bytes", "vmem_size_bytes", "vmem_bytes"):
            v = getattr(info, name, None)
            if v:
                return int(v)
    except Exception:
        pass
    kind = _device_kind()
    if "v7" in kind or "7x" in kind:
        return 64 * 2 ** 20
    return 128 * 2 ** 20


def _num_tensorcores():
    kind = _device_kind()
    return 2 if ("v7" in kind or "7x" in kind) else 1


def _pad_gate_cols(w, h, hp):
    """(rows, 4*h) -> (rows, 4*hp): zero-pad each of the 4 gate blocks to hp."""
    rows = w.shape[0]
    w4 = w.reshape(rows, 4, h)
    out = jnp.zeros((rows, 4, hp), w.dtype).at[:, :, :h].set(w4)
    return out.reshape(rows, 4 * hp)


def rnn_forward_kernel(x_ref, wih_ref, bx_ref, whh_ref, cg_ref, cb_ref,
                       wl_ref, bl_ref, out_ref, h_ref, c_ref, gx_ref,
                       *, hidden, bb, total_t, unroll):
    """One (batch block, time chunk) grid step.

    x_ref  : (tc*bb, D)    time-major rows (t-major, batch-minor) of this chunk
    wih_ref: (D, 4*Hp)     bf16, input-LN gamma folded in, gate blocks padded
    bx_ref : (1, 4*Hp)     f32, precomputed beta @ W_ih^T bias row
    whh_ref: (Hp, 4*Hp)    bf16, padded rows/cols are zero
    cg/cb  : (1, Hp)       cell-state LayerNorm params (zero padded)
    wl_ref : (Hp, C)       classifier weight^T (zero padded rows)
    out_ref: (bb, C)       log-probabilities (written at the last time chunk)
    h_ref  : (bb, Hp)      recurrent hidden state (bf16 carry)
    c_ref  : (bb, Hp)      recurrent cell state (f32 carry)
    gx_ref : (tc*bb, 4*Hp) precomputed input-projection gates for the chunk
    """
    t_idx = pl.program_id(1)
    n_t = pl.num_programs(1)
    hp = h_ref.shape[1]
    rows = x_ref.shape[0]
    tc = rows // bb
    mask_tail = (total_t % tc) != 0          # static: padded time steps exist

    @pl.when(t_idx == 0)
    def _init():
        h_ref[...] = jnp.zeros_like(h_ref)
        c_ref[...] = jnp.zeros_like(c_ref)

    # ---- hoisted input LayerNorm (gamma/beta folded into W_ih / bias row)
    # and input projection: one large MXU matmul per chunk, off the serial path.
    xc = x_ref[...].astype(jnp.float32)                        # (tc*bb, D)
    mu = jnp.mean(xc, axis=-1, keepdims=True)
    var = jnp.mean((xc - mu) ** 2, axis=-1, keepdims=True)
    xn = (xc - mu) * lax.rsqrt(var + LN_EPS)
    wih = wih_ref[...]                                         # (D, 4*hp) bf16
    gx_ref[...] = (jnp.dot(xn.astype(wih.dtype), wih,
                           preferred_element_type=jnp.float32)
                   + bx_ref[...])                              # (tc*bb, 4*hp)

    def step(i, carry):
        h, c = carry                                   # h bf16, c f32
        off = pl.multiple_of(i * bb, bb)
        # W_hh is re-read per iteration (not pinned in vregs across the unroll).
        gates = (gx_ref[pl.ds(off, bb), :]
                 + jnp.dot(h, whh_ref[...],
                           preferred_element_type=jnp.float32))   # (bb, 4*hp)
        gi = jax.nn.sigmoid(gates[:, 0 * hp:1 * hp])   # lane-aligned slices
        gf = jax.nn.sigmoid(gates[:, 1 * hp:2 * hp])
        gg = jnp.tanh(gates[:, 2 * hp:3 * hp])
        go = jax.nn.sigmoid(gates[:, 3 * hp:4 * hp])
        c_new = gf * c + gi * gg
        h_new = (go * jnp.tanh(c_new)).astype(h_ref.dtype)
        if mask_tail:
            valid = (t_idx * tc + i) < total_t
            c_new = jnp.where(valid, c_new, c)
            h_new = jnp.where(valid, h_new, h)
        return h_new, c_new

    h, c = lax.fori_loop(0, tc, step, (h_ref[...], c_ref[...]), unroll=unroll)
    h_ref[...] = h
    c_ref[...] = c

    @pl.when(t_idx == n_t - 1)
    def _finalize():
        # LayerNorm over the valid H lanes of c (mean and variance both masked,
        # so padded lanes need not be exactly zero).
        lane = lax.broadcasted_iota(jnp.int32, c.shape, 1)
        valid = lane < hidden
        inv_h = 1.0 / float(hidden)
        mu_c = jnp.sum(jnp.where(valid, c, 0.0), axis=-1, keepdims=True) * inv_h
        d = c - mu_c
        var_c = jnp.sum(jnp.where(valid, d * d, 0.0), axis=-1,
                        keepdims=True) * inv_h
        cn = d * lax.rsqrt(var_c + LN_EPS) * cg_ref[...] + cb_ref[...]
        logits = (jnp.dot(cn, wl_ref[...], preferred_element_type=jnp.float32)
                  + bl_ref[...])                                   # (bb, C)
        m = jnp.max(logits, axis=-1, keepdims=True)
        z = logits - m
        lse = jnp.log(jnp.sum(jnp.exp(z), axis=-1, keepdims=True))
        out_ref[...] = (z - lse).astype(out_ref.dtype)


def rnn_forward(x, params, *, matmul_dtype=jnp.bfloat16,
                stream_dtype=jnp.bfloat16, batch_block=None, unroll=None):
    """x: (B, T, D) float32 -> (B, nclasses) log-probabilities."""
    B, T, D = x.shape
    H = params["w_hh"].shape[1]
    C = params["w_l"].shape[0]
    HP = _round_up(H, 128)          # lane-aligned gate blocks, contraction >=128
    BP = _round_up(B, 8)            # sublane-aligned batch rows

    # Batch blocking: split only when there are 2 TensorCores AND each half
    # still fills the MXU rows; otherwise keep a single block (full occupancy).
    if batch_block is None:
        bb = BP
        if _num_tensorcores() >= 2 and BP % 16 == 0 and BP // 2 >= 256:
            bb = BP // 2
    else:
        bb = batch_block
    assert BP % bb == 0 and bb % 8 == 0
    nb = BP // bb

    # ---- generation-aware VMEM budget -> time-chunk size
    cap = _vmem_capacity_bytes()
    usable = (cap * 3) // 4              # ~48 MiB on v7x, ~96 MiB on v5e/v6e
    x_sz = jnp.dtype(stream_dtype).itemsize
    w_sz = jnp.dtype(matmul_dtype).itemsize
    fixed = ((D + HP) * 4 * HP * w_sz        # W_ih', W_hh (single-buffered)
             + (4 * HP + 2 * HP + C) * 4     # bias row, cLN gamma/beta, b_l
             + HP * C * 4                    # classifier weight
             + bb * HP * (4 + w_sz)          # c (f32) + h (bf16) carries
             + 2 * bb * C * 4                # double-buffered output block
             + (2 << 20))                    # misc / compiler headroom
    per_row = 4 * HP * 4 + 2 * D * x_sz      # gx scratch + double-buffered x
    chunk_budget = max(per_row * bb, (usable * 2) // 3 - fixed)
    max_rows = max(bb, min(4096, chunk_budget // per_row))
    tc_max = max(1, max_rows // bb)
    nt = int(pl.cdiv(T, tc_max))
    tc = int(pl.cdiv(T, nt))
    TP = tc * nt                             # padded time length (tail masked)

    est = fixed + per_row * tc * bb
    vmem_limit = int(min(usable, max(32 * 2 ** 20, int(est * 1.5))))

    if unroll is None:
        unroll_val = max(1, min(8, tc))
    else:
        unroll_val = max(1, min(int(unroll), tc))

    # ---- parameter packing / padding (once per call, outside the kernel)
    w_ih_t = params["w_ih"].T.astype(jnp.float32)                      # (D, 4H)
    wih_fold = w_ih_t * params["in_gamma"].astype(jnp.float32)[:, None]
    wih_p = _pad_gate_cols(wih_fold, H, HP).astype(matmul_dtype)       # (D, 4HP)
    bx = params["in_beta"].astype(jnp.float32)[None, :] @ w_ih_t       # (1, 4H)
    bx_p = _pad_gate_cols(bx, H, HP)                                   # (1, 4HP)

    whh_rows = jnp.zeros((HP, 4 * H), jnp.float32).at[:H, :].set(params["w_hh"].T)
    whh_p = _pad_gate_cols(whh_rows, H, HP).astype(matmul_dtype)       # (HP, 4HP)

    wl_p = jnp.zeros((HP, C), jnp.float32).at[:H, :].set(params["w_l"].T)
    cg_p = jnp.zeros((1, HP), jnp.float32).at[:, :H].set(params["c_gamma"][None, :])
    cb_p = jnp.zeros((1, HP), jnp.float32).at[:, :H].set(params["c_beta"][None, :])
    bl_p = params["b_l"].reshape(1, C).astype(jnp.float32)

    # Time-major, batch-blocked layout (nb, TP*bb, D), streamed in bf16: rows
    # are t-major within a block so per-timestep gate rows are contiguous.
    xs = x.astype(stream_dtype)
    if BP != B or TP != T:
        xs = jnp.zeros((BP, TP, D), stream_dtype).at[:B, :T].set(xs)
    xr = (xs.transpose(1, 0, 2)            # (TP, BP, D)
            .reshape(TP, nb, bb, D)
            .transpose(1, 0, 2, 3)         # (nb, TP, bb, D)
            .reshape(nb, TP * bb, D))

    kernel = functools.partial(rnn_forward_kernel, hidden=H, bb=bb,
                               total_t=T, unroll=unroll_val)

    def _build(single_buffer):
        def _invariant(arr):
            zeros = (0,) * arr.ndim
            if single_buffer and hasattr(pl, "Buffered"):
                return pl.BlockSpec(arr.shape, lambda b, t: zeros,
                                    pipeline_mode=pl.Buffered(1))
            return pl.BlockSpec(arr.shape, lambda b, t: zeros)

        grid_spec = pltpu.PrefetchScalarGridSpec(
            num_scalar_prefetch=0,
            grid=(nb, nt),
            in_specs=[
                pl.BlockSpec((None, tc * bb, D), lambda b, t: (b, t, 0)),  # x
                _invariant(wih_p), _invariant(bx_p),
                _invariant(whh_p),
                _invariant(cg_p), _invariant(cb_p),
                _invariant(wl_p), _invariant(bl_p),
            ],
            out_specs=pl.BlockSpec((bb, C), lambda b, t: (b, 0)),
            scratch_shapes=[
                pltpu.VMEM((bb, HP), matmul_dtype),             # h carry (bf16)
                pltpu.VMEM((bb, HP), jnp.float32),              # c carry
                pltpu.VMEM((tc * bb, 4 * HP), jnp.float32),     # gates scratch
            ],
        )
        return pl.pallas_call(
            kernel,
            grid_spec=grid_spec,
            out_shape=jax.ShapeDtypeStruct((BP, C), jnp.float32),
            compiler_params=pltpu.CompilerParams(
                dimension_semantics=("parallel", "arbitrary"),
                vmem_limit_bytes=vmem_limit),
        )

    args = (xr, wih_p, bx_p, whh_p, cg_p, cb_p, wl_p, bl_p)
    try:
        out = jax.block_until_ready(_build(True)(*args))
    except Exception:
        # Fallback if this JAX build rejects pipeline_mode=pl.Buffered(1).
        out = jax.block_until_ready(_build(False)(*args))
    return out[:B]


def init_params(key, input_dim, hidden_dims, nclasses):
    """Deterministic synthetic parameters with the PyTorch module's shapes."""
    k = 1.0 / float(hidden_dims) ** 0.5
    k0, k1, k2, k3 = jax.random.split(key, 4)
    return {
        "in_gamma": jnp.ones((input_dim,), jnp.float32),
        "in_beta": jnp.zeros((input_dim,), jnp.float32),
        # nn.LSTM (bias=False): weight_ih_l0 (4H, D), weight_hh_l0 (4H, H)
        "w_ih": jax.random.uniform(k0, (4 * hidden_dims, input_dim),
                                   jnp.float32, -k, k),
        "w_hh": jax.random.uniform(k1, (4 * hidden_dims, hidden_dims),
                                   jnp.float32, -k, k),
        "c_gamma": jnp.ones((hidden_dims,), jnp.float32),
        "c_beta": jnp.zeros((hidden_dims,), jnp.float32),
        # nn.Linear(hidden_dims, nclasses)
        "w_l": jax.random.uniform(k2, (nclasses, hidden_dims),
                                  jnp.float32, -k, k),
        "b_l": jax.random.uniform(k3, (nclasses,), jnp.float32, -k, k),
    }


def rnn_forward_ref(x, params, matmul_dtype=jnp.bfloat16,
                    stream_dtype=jnp.bfloat16):
    """Pure-JAX reference with the same operand casts as the kernel."""
    H = params["w_hh"].shape[1]
    x = x.astype(stream_dtype).astype(jnp.float32)
    mu = x.mean(-1, keepdims=True)
    var = ((x - mu) ** 2).mean(-1, keepdims=True)
    xn = ((x - mu) * lax.rsqrt(var + LN_EPS) * params["in_gamma"]
          + params["in_beta"])
    wih_t = params["w_ih"].T.astype(matmul_dtype)
    whh_t = params["w_hh"].T.astype(matmul_dtype)
    B, T, _ = x.shape
    h = jnp.zeros((B, H), jnp.float32)
    c = jnp.zeros((B, H), jnp.float32)
    for t in range(T):
        gates = (jnp.dot(xn[:, t, :].astype(matmul_dtype), wih_t,
                         preferred_element_type=jnp.float32)
                 + jnp.dot(h.astype(matmul_dtype), whh_t,
                           preferred_element_type=jnp.float32))
        gi = jax.nn.sigmoid(gates[:, :H])
        gf = jax.nn.sigmoid(gates[:, H:2 * H])
        gg = jnp.tanh(gates[:, 2 * H:3 * H])
        go = jax.nn.sigmoid(gates[:, 3 * H:])
        c = gf * c + gi * gg
        h = go * jnp.tanh(c)
    mu = c.mean(-1, keepdims=True)
    var = ((c - mu) ** 2).mean(-1, keepdims=True)
    cn = ((c - mu) * lax.rsqrt(var + LN_EPS) * params["c_gamma"]
          + params["c_beta"])
    logits = cn @ params["w_l"].T + params["b_l"]
    return jax.nn.log_softmax(logits, axis=-1)


if __name__ == "__main__":
    # Shapes consistent with RNN(input_dim=4, hidden_dims=32, nclasses=5,
    # num_rnn_layers=1, bidirectional=False, use_layernorm=True).
    B, T, D, H, C = 2, 8, 4, 32, 5

    key = jax.random.PRNGKey(0)
    kx, kp = jax.random.split(key)
    x = jax.random.normal(kx, (B, T, D), jnp.float32)
    params = init_params(kp, input_dim=D, hidden_dims=H, nclasses=C)

    out = jax.block_until_ready(rnn_forward(x, params))
    ref = rnn_forward_ref(x, params)

    assert out.shape == (B, C)
    assert bool(jnp.all(jnp.isfinite(out)))
    assert jnp.allclose(out, ref, atol=1e-3, rtol=1e-3), (out, ref)
    print("KERNEL_OK")
</pallas_src>

<mosaic_0001>
module attributes {stable_mosaic.version = 11 : i64} {
  func.func @rnn_forward_kernel(%arg0: i32, %arg1: i32, %arg2: memref<1x64x4xbf16, #tpu.memory_space<vmem>>, %arg3: memref<4x512xbf16, #tpu.memory_space<vmem>>, %arg4: memref<1x512xf32, #tpu.memory_space<vmem>>, %arg5: memref<128x512xbf16, #tpu.memory_space<vmem>>, %arg6: memref<1x128xf32, #tpu.memory_space<vmem>>, %arg7: memref<1x128xf32, #tpu.memory_space<vmem>>, %arg8: memref<128x5xf32, #tpu.memory_space<vmem>>, %arg9: memref<1x5xf32, #tpu.memory_space<vmem>>, %arg10: memref<8x5xf32, #tpu.memory_space<vmem>>, %arg11: memref<8x128xbf16, #tpu.memory_space<vmem>>, %arg12: memref<8x128xf32, #tpu.memory_space<vmem>>, %arg13: memref<64x512xf32, #tpu.memory_space<vmem>>) attributes {dimension_semantics = [#tpu.dimension_semantics<parallel>, #tpu.dimension_semantics<arbitrary>], iteration_bounds = array<i64: 1, 1>, scalar_prefetch = 0 : i64, scratch_operands = 3 : i64, tpu.core_type = #tpu.core_type<tc>, window_params = [{transform_indices = @transform_0, window_bounds = array<i64: 1, 64, 4>}, {pipeline_mode = #tpu.pipeline_mode<synchronous>, transform_indices = @transform_1, window_bounds = array<i64: 4, 512>}, {pipeline_mode = #tpu.pipeline_mode<synchronous>, transform_indices = @transform_2, window_bounds = array<i64: 1, 512>}, {pipeline_mode = #tpu.pipeline_mode<synchronous>, transform_indices = @transform_3, window_bounds = array<i64: 128, 512>}, {pipeline_mode = #tpu.pipeline_mode<synchronous>, transform_indices = @transform_4, window_bounds = array<i64: 1, 128>}, {pipeline_mode = #tpu.pipeline_mode<synchronous>, transform_indices = @transform_5, window_bounds = array<i64: 1, 128>}, {pipeline_mode = #tpu.pipeline_mode<synchronous>, transform_indices = @transform_6, window_bounds = array<i64: 128, 5>}, {pipeline_mode = #tpu.pipeline_mode<synchronous>, transform_indices = @transform_7, window_bounds = array<i64: 1, 5>}, {transform_indices = @transform_8, window_bounds = array<i64: 8, 5>}]} {
    %c0_i32 = arith.constant 0 : i32
    %0 = arith.cmpi eq, %arg1, %c0_i32 : i32
    %1 = arith.extui %0 : i1 to i32
    %c0_i32_0 = arith.constant 0 : i32
    %2 = arith.cmpi ne, %1, %c0_i32_0 : i32
    scf.if %2 {
      %cst_89 = arith.constant 0.000000e+00 : bf16
      %302 = vector.broadcast %cst_89 : bf16 to vector<8x128xbf16>
      %c0_90 = arith.constant 0 : index
      %c0_91 = arith.constant 0 : index
      %303 = vector.load %arg11[%c0_90, %c0_91] : memref<8x128xbf16, #tpu.memory_space<vmem>>, vector<8x128xbf16>
      tpu.vector_store %arg11[%c0_90, %c0_91], %302 {strides = array<i32>} : memref<8x128xbf16, #tpu.memory_space<vmem>>, vector<8x128xbf16>,
      %cst_92 = arith.constant 0.000000e+00 : f32
      %304 = vector.broadcast %cst_92 : f32 to vector<8x128xf32>
      %c0_93 = arith.constant 0 : index
      %c0_94 = arith.constant 0 : index
      %305 = vector.load %arg12[%c0_93, %c0_94] : memref<8x128xf32, #tpu.memory_space<vmem>>, vector<8x128xf32>
      tpu.vector_store %arg12[%c0_93, %c0_94], %304 {strides = array<i32>} : memref<8x128xf32, #tpu.memory_space<vmem>>, vector<8x128xf32>,
    } else {
    }
    %c0 = arith.constant 0 : index
    %c0_1 = arith.constant 0 : index
    %c0_2 = arith.constant 0 : index
    %3 = vector.load %arg2[%c0, %c0_1, %c0_2] : memref<1x64x4xbf16, #tpu.memory_space<vmem>>, vector<1x64x4xbf16>
    %4 = vector.shape_cast %3 : vector<1x64x4xbf16> to vector<64x4xbf16>
    %5 = arith.extf %4 : vector<64x4xbf16> to vector<64x4xf32>
    %cst = arith.constant dense<0.000000e+00> : vector<64xf32>
    %6 = vector.multi_reduction <add>, %5, %cst [1] : vector<64x4xf32> to vector<64xf32>
    %7 = vector.shape_cast %6 : vector<64xf32> to vector<64x1xf32>
    %cst_3 = arith.constant 4.000000e+00 : f32
    %8 = vector.broadcast %cst_3 : f32 to vector<64x1xf32>
    %9 = arith.divf %7, %8 : vector<64x1xf32>
    %10 = vector.broadcast %9 : vector<64x1xf32> to vector<64x4xf32>
    %11 = arith.subf %5, %10 : vector<64x4xf32>
    %12 = arith.mulf %11, %11 : vector<64x4xf32>
    %cst_4 = arith.constant dense<0.000000e+00> : vector<64xf32>
    %13 = vector.multi_reduction <add>, %12, %cst_4 [1] : vector<64x4xf32> to vector<64xf32>
    %14 = vector.shape_cast %13 : vector<64xf32> to vector<64x1xf32>
    %cst_5 = arith.constant 4.000000e+00 : f32
    %15 = vector.broadcast %cst_5 : f32 to vector<64x1xf32>
    %16 = arith.divf %14, %15 : vector<64x1xf32>
    %17 = vector.broadcast %9 : vector<64x1xf32> to vector<64x4xf32>
    %18 = arith.subf %5, %17 : vector<64x4xf32>
    %cst_6 = arith.constant 9.99999974E-6 : f32
    %19 = vector.broadcast %cst_6 : f32 to vector<64x1xf32>
    %20 = arith.addf %16, %19 : vector<64x1xf32>
    %21 = math.rsqrt %20 : vector<64x1xf32>
    %22 = vector.broadcast %21 : vector<64x1xf32> to vector<64x4xf32>
    %23 = arith.mulf %18, %22 : vector<64x4xf32>
    %c0_7 = arith.constant 0 : index
    %c0_8 = arith.constant 0 : index
    %24 = vector.load %arg3[%c0_7, %c0_8] : memref<4x512xbf16, #tpu.memory_space<vmem>>, vector<4x512xbf16>
    %25 = arith.truncf %23 : vector<64x4xf32> to vector<64x4xbf16>
    %cst_9 = arith.constant dense<0.000000e+00> : vector<64x512xf32>
    %26 = tpu.matmul %25, %24, %cst_9 {dimension_numbers = #tpu.dot_dimension_numbers<[1], [0], [0], [1], [0, 0, 1, 1], [], []>} : vector<64x4xbf16>, vector<4x512xbf16>, vector<64x512xf32> -> vector<64x512xf32>
    %c0_10 = arith.constant 0 : index
    %c0_11 = arith.constant 0 : index
    %27 = vector.load %arg4[%c0_10, %c0_11] : memref<1x512xf32, #tpu.memory_space<vmem>>, vector<1x512xf32>
    %28 = vector.broadcast %27 : vector<1x512xf32> to vector<64x512xf32>
    %29 = arith.addf %26, %28 : vector<64x512xf32>
    %c0_12 = arith.constant 0 : index
    %c0_13 = arith.constant 0 : index
    %30 = vector.load %arg13[%c0_12, %c0_13] : memref<64x512xf32, #tpu.memory_space<vmem>>, vector<64x512xf32>
    tpu.vector_store %arg13[%c0_12, %c0_13], %29 {strides = array<i32>} : memref<64x512xf32, #tpu.memory_space<vmem>>, vector<64x512xf32>,
    %c0_14 = arith.constant 0 : index
    %c0_15 = arith.constant 0 : index
    %31 = vector.load %arg11[%c0_14, %c0_15] : memref<8x128xbf16, #tpu.memory_space<vmem>>, vector<8x128xbf16>
    %c0_16 = arith.constant 0 : index
    %c0_17 = arith.constant 0 : index
    %32 = vector.load %arg12[%c0_16, %c0_17] : memref<8x128xf32, #tpu.memory_space<vmem>>, vector<8x128xf32>
    %c0_i32_18 = arith.constant 0 : i32
    %c8_i32 = arith.constant 8 : i32
    %33 = arith.muli %c0_i32_18, %c8_i32 : i32
    %34 = tpu.assume_multiple %33, 8 : i32
    %35 = arith.index_cast %34 : i32 to index
    %c0_19 = arith.constant 0 : index
    %36 = vector.load %arg13[%35, %c0_19] : memref<64x512xf32, #tpu.memory_space<vmem>>, vector<8x512xf32>
    %c0_20 = arith.constant 0 : index
    %c0_21 = arith.constant 0 : index
    %37 = vector.load %arg5[%c0_20, %c0_21] : memref<128x512xbf16, #tpu.memory_space<vmem>>, vector<128x512xbf16>
    %cst_22 = arith.constant dense<0.000000e+00> : vector<8x512xf32>
    %38 = tpu.matmul %31, %37, %cst_22 {dimension_numbers = #tpu.dot_dimension_numbers<[1], [0], [0], [1], [0, 0, 1, 1], [], []>} : vector<8x128xbf16>, vector<128x512xbf16>, vector<8x512xf32> -> vector<8x512xf32>
    %39 = arith.addf %36, %38 : vector<8x512xf32>
    %40 = vector.extract_strided_slice %39 {offsets = [0, 0], sizes = [8, 128], strides = [1, 1]} : vector<8x512xf32> to vector<8x128xf32>
    %41 = arith.negf %40 : vector<8x128xf32>
    %42 = math.exp %41 : vector<8x128xf32>
    %cst_23 = arith.constant 1.000000e+00 : f32
    %43 = vector.broadcast %cst_23 : f32 to vector<8x128xf32>
    %44 = arith.addf %43, %42 : vector<8x128xf32>
    %45 = arith.divf %43, %44 : vector<8x128xf32>
    %46 = vector.extract_strided_slice %39 {offsets = [0, 128], sizes = [8, 128], strides = [1, 1]} : vector<8x512xf32> to vector<8x128xf32>
    %47 = arith.negf %46 : vector<8x128xf32>
    %48 = math.exp %47 : vector<8x128xf32>
    %cst_24 = arith.constant 1.000000e+00 : f32
    %49 = vector.broadcast %cst_24 : f32 to vector<8x128xf32>
    %50 = arith.addf %49, %48 : vector<8x128xf32>
    %51 = arith.divf %49, %50 : vector<8x128xf32>
    %52 = vector.extract_strided_slice %39 {offsets = [0, 256], sizes = [8, 128], strides = [1, 1]} : vector<8x512xf32> to vector<8x128xf32>
    %53 = math.tanh %52 : vector<8x128xf32>
    %54 = vector.extract_strided_slice %39 {offsets = [0, 384], sizes = [8, 128], strides = [1, 1]} : vector<8x512xf32> to vector<8x128xf32>
    %55 = arith.negf %54 : vector<8x128xf32>
    %56 = math.exp %55 : vector<8x128xf32>
    %cst_25 = arith.constant 1.000000e+00 : f32
    %57 = vector.broadcast %cst_25 : f32 to vector<8x128xf32>
    %58 = arith.addf %57, %56 : vector<8x128xf32>
    %59 = arith.divf %57, %58 : vector<8x128xf32>
    %60 = arith.mulf %51, %32 : vector<8x128xf32>
    %61 = arith.mulf %45, %53 : vector<8x128xf32>
    %62 = arith.addf %60, %61 : vector<8x128xf32>
    %63 = math.tanh %62 : vector<8x128xf32>
    %64 = arith.mulf %59, %63 : vector<8x128xf32>
    %65 = arith.truncf %64 : vector<8x128xf32> to vector<8x128xbf16>
    %c1_i32 = arith.constant 1 : i32
    %c8_i32_26 = arith.constant 8 : i32
    %66 = arith.muli %c1_i32, %c8_i32_26 : i32
    %67 = tpu.assume_multiple %66, 8 : i32
    %68 = arith.index_cast %67 : i32 to index
    %c0_27 = arith.constant 0 : index
    %69 = vector.load %arg13[%68, %c0_27] : memref<64x512xf32, #tpu.memory_space<vmem>>, vector<8x512xf32>
    %c0_28 = arith.constant 0 : index
    %c0_29 = arith.constant 0 : index
    %70 = vector.load %arg5[%c0_28, %c0_29] : memref<128x512xbf16, #tpu.memory_space<vmem>>, vector<128x512xbf16>
    %cst_30 = arith.constant dense<0.000000e+00> : vector<8x512xf32>
    %71 = tpu.matmul %65, %70, %cst_30 {dimension_numbers = #tpu.dot_dimension_numbers<[1], [0], [0], [1], [0, 0, 1, 1], [], []>} : vector<8x128xbf16>, vector<128x512xbf16>, vector<8x512xf32> -> vector<8x512xf32>
    %72 = arith.addf %69, %71 : vector<8x512xf32>
    %73 = vector.extract_strided_slice %72 {offsets = [0, 0], sizes = [8, 128], strides = [1, 1]} : vector<8x512xf32> to vector<8x128xf32>
    %74 = arith.negf %73 : vector<8x128xf32>
    %75 = math.exp %74 : vector<8x128xf32>
    %cst_31 = arith.constant 1.000000e+00 : f32
    %76 = vector.broadcast %cst_31 : f32 to vector<8x128xf32>
    %77 = arith.addf %76, %75 : vector<8x128xf32>
    %78 = arith.divf %76, %77 : vector<8x128xf32>
    %79 = vector.extract_strided_slice %72 {offsets = [0, 128], sizes = [8, 128], strides = [1, 1]} : vector<8x512xf32> to vector<8x128xf32>
    %80 = arith.negf %79 : vector<8x128xf32>
    %81 = math.exp %80 : vector<8x128xf32>
    %cst_32 = arith.constant 1.000000e+00 : f32
    %82 = vector.broadcast %cst_32 : f32 to vector<8x128xf32>
    %83 = arith.addf %82, %81 : vector<8x128xf32>
    %84 = arith.divf %82, %83 : vector<8x128xf32>
    %85 = vector.extract_strided_slice %72 {offsets = [0, 256], sizes = [8, 128], strides = [1, 1]} : vector<8x512xf32> to vector<8x128xf32>
    %86 = math.tanh %85 : vector<8x128xf32>
    %87 = vector.extract_strided_slice %72 {offsets = [0, 384], sizes = [8, 128], strides = [1, 1]} : vector<8x512xf32> to vector<8x128xf32>
    %88 = arith.negf %87 : vector<8x128xf32>
    %89 = math.exp %88 : vector<8x128xf32>
    %cst_33 = arith.constant 1.000000e+00 : f32
    %90 = vector.broadcast %cst_33 : f32 to vector<8x128xf32>
    %91 = arith.addf %90, %89 : vector<8x128xf32>
    %92 = arith.divf %90, %91 : vector<8x128xf32>
    %93 = arith.mulf %84, %62 : vector<8x128xf32>
    %94 = arith.mulf %78, %86 : vector<8x128xf32>
    %95 = arith.addf %93, %94 : vector<8x128xf32>
    %96 = math.tanh %95 : vector<8x128xf32>
    %97 = arith.mulf %92, %96 : vector<8x128xf32>
    %98 = arith.truncf %97 : vector<8x128xf32> to vector<8x128xbf16>
    %c2_i32 = arith.constant 2 : i32
    %c8_i32_34 = arith.constant 8 : i32
    %99 = arith.muli %c2_i32, %c8_i32_34 : i32
    %100 = tpu.assume_multiple %99, 8 : i32
    %101 = arith.index_cast %100 : i32 to index
    %c0_35 = arith.constant 0 : index
    %102 = vector.load %arg13[%101, %c0_35] : memref<64x512xf32, #tpu.memory_space<vmem>>, vector<8x512xf32>
    %c0_36 = arith.constant 0 : index
    %c0_37 = arith.constant 0 : index
    %103 = vector.load %arg5[%c0_36, %c0_37] : memref<128x512xbf16, #tpu.memory_space<vmem>>, vector<128x512xbf16>
    %cst_38 = arith.constant dense<0.000000e+00> : vector<8x512xf32>
    %104 = tpu.matmul %98, %103, %cst_38 {dimension_numbers = #tpu.dot_dimension_numbers<[1], [0], [0], [1], [0, 0, 1, 1], [], []>} : vector<8x128xbf16>, vector<128x512xbf16>, vector<8x512xf32> -> vector<8x512xf32>
    %105 = arith.addf %102, %104 : vector<8x512xf32>
    %106 = vector.extract_strided_slice %105 {offsets = [0, 0], sizes = [8, 128], strides = [1, 1]} : vector<8x512xf32> to vector<8x128xf32>
    %107 = arith.negf %106 : vector<8x128xf32>
    %108 = math.exp %107 : vector<8x128xf32>
    %cst_39 = arith.constant 1.000000e+00 : f32
    %109 = vector.broadcast %cst_39 : f32 to vector<8x128xf32>
    %110 = arith.addf %109, %108 : vector<8x128xf32>
    %111 = arith.divf %109, %110 : vector<8x128xf32>
    %112 = vector.extract_strided_slice %105 {offsets = [0, 128], sizes = [8, 128], strides = [1, 1]} : vector<8x512xf32> to vector<8x128xf32>
    %113 = arith.negf %112 : vector<8x128xf32>
    %114 = math.exp %113 : vector<8x128xf32>
    %cst_40 = arith.constant 1.000000e+00 : f32
    %115 = vector.broadcast %cst_40 : f32 to vector<8x128xf32>
    %116 = arith.addf %115, %114 : vector<8x128xf32>
    %117 = arith.divf %115, %116 : vector<8x128xf32>
    %118 = vector.extract_strided_slice %105 {offsets = [0, 256], sizes = [8, 128], strides = [1, 1]} : vector<8x512xf32> to vector<8x128xf32>
    %119 = math.tanh %118 : vector<8x128xf32>
    %120 = vector.extract_strided_slice %105 {offsets = [0, 384], sizes = [8, 128], strides = [1, 1]} : vector<8x512xf32> to vector<8x128xf32>
    %121 = arith.negf %120 : vector<8x128xf32>
    %122 = math.exp %121 : vector<8x128xf32>
    %cst_41 = arith.constant 1.000000e+00 : f32
    %123 = vector.broadcast %cst_41 : f32 to vector<8x128xf32>
    %124 = arith.addf %123, %122 : vector<8x128xf32>
    %125 = arith.divf %123, %124 : vector<8x128xf32>
    %126 = arith.mulf %117, %95 : vector<8x128xf32>
    %127 = arith.mulf %111, %119 : vector<8x128xf32>
    %128 = arith.addf %126, %127 : vector<8x128xf32>
    %129 = math.tanh %128 : vector<8x128xf32>
    %130 = arith.mulf %125, %129 : vector<8x128xf32>
    %131 = arith.truncf %130 : vector<8x128xf32> to vector<8x128xbf16>
    %c3_i32 = arith.constant 3 : i32
    %c8_i32_42 = arith.constant 8 : i32
    %132 = arith.muli %c3_i32, %c8_i32_42 : i32
    %133 = tpu.assume_multiple %132, 8 : i32
    %134 = arith.index_cast %133 : i32 to index
    %c0_43 = arith.constant 0 : index
    %135 = vector.load %arg13[%134, %c0_43] : memref<64x512xf32, #tpu.memory_space<vmem>>, vector<8x512xf32>
    %c0_44 = arith.constant 0 : index
    %c0_45 = arith.constant 0 : index
    %136 = vector.load %arg5[%c0_44, %c0_45] : memref<128x512xbf16, #tpu.memory_space<vmem>>, vector<128x512xbf16>
    %cst_46 = arith.constant dense<0.000000e+00> : vector<8x512xf32>
    %137 = tpu.matmul %131, %136, %cst_46 {dimension_numbers = #tpu.dot_dimension_numbers<[1], [0], [0], [1], [0, 0, 1, 1], [], []>} : vector<8x128xbf16>, vector<128x512xbf16>, vector<8x512xf32> -> vector<8x512xf32>
    %138 = arith.addf %135, %137 : vector<8x512xf32>
    %139 = vector.extract_strided_slice %138 {offsets = [0, 0], sizes = [8, 128], strides = [1, 1]} : vector<8x512xf32> to vector<8x128xf32>
    %140 = arith.negf %139 : vector<8x128xf32>
    %141 = math.exp %140 : vector<8x128xf32>
    %cst_47 = arith.constant 1.000000e+00 : f32
    %142 = vector.broadcast %cst_47 : f32 to vector<8x128xf32>
    %143 = arith.addf %142, %141 : vector<8x128xf32>
    %144 = arith.divf %142, %143 : vector<8x128xf32>
    %145 = vector.extract_strided_slice %138 {offsets = [0, 128], sizes = [8, 128], strides = [1, 1]} : vector<8x512xf32> to vector<8x128xf32>
    %146 = arith.negf %145 : vector<8x128xf32>
    %147 = math.exp %146 : vector<8x128xf32>
    %cst_48 = arith.constant 1.000000e+00 : f32
    %148 = vector.broadcast %cst_48 : f32 to vector<8x128xf32>
    %149 = arith.addf %148, %147 : vector<8x128xf32>
    %150 = arith.divf %148, %149 : vector<8x128xf32>
    %151 = vector.extract_strided_slice %138 {offsets = [0, 256], sizes = [8, 128], strides = [1, 1]} : vector<8x512xf32> to vector<8x128xf32>
    %152 = math.tanh %151 : vector<8x128xf32>
    %153 = vector.extract_strided_slice %138 {offsets = [0, 384], sizes = [8, 128], strides = [1, 1]} : vector<8x512xf32> to vector<8x128xf32>
    %154 = arith.negf %153 : vector<8x128xf32>
    %155 = math.exp %154 : vector<8x128xf32>
    %cst_49 = arith.constant 1.000000e+00 : f32
    %156 = vector.broadcast %cst_49 : f32 to vector<8x128xf32>
    %157 = arith.addf %156, %155 : vector<8x128xf32>
    %158 = arith.divf %156, %157 : vector<8x128xf32>
    %159 = arith.mulf %150, %128 : vector<8x128xf32>
    %160 = arith.mulf %144, %152 : vector<8x128xf32>
    %161 = arith.addf %159, %160 : vector<8x128xf32>
    %162 = math.tanh %161 : vector<8x128xf32>
    %163 = arith.mulf %158, %162 : vector<8x128xf32>
    %164 = arith.truncf %163 : vector<8x128xf32> to vector<8x128xbf16>
    %c4_i32 = arith.constant 4 : i32
    %c8_i32_50 = arith.constant 8 : i32
    %165 = arith.muli %c4_i32, %c8_i32_50 : i32
    %166 = tpu.assume_multiple %165, 8 : i32
    %167 = arith.index_cast %166 : i32 to index
    %c0_51 = arith.constant 0 : index
    %168 = vector.load %arg13[%167, %c0_51] : memref<64x512xf32, #tpu.memory_space<vmem>>, vector<8x512xf32>
    %c0_52 = arith.constant 0 : index
    %c0_53 = arith.constant 0 : index
    %169 = vector.load %arg5[%c0_52, %c0_53] : memref<128x512xbf16, #tpu.memory_space<vmem>>, vector<128x512xbf16>
    %cst_54 = arith.constant dense<0.000000e+00> : vector<8x512xf32>
    %170 = tpu.matmul %164, %169, %cst_54 {dimension_numbers = #tpu.dot_dimension_numbers<[1], [0], [0], [1], [0, 0, 1, 1], [], []>} : vector<8x128xbf16>, vector<128x512xbf16>, vector<8x512xf32> -> vector<8x512xf32>
    %171 = arith.addf %168, %170 : vector<8x512xf32>
    %172 = vector.extract_strided_slice %171 {offsets = [0, 0], sizes = [8, 128], strides = [1, 1]} : vector<8x512xf32> to vector<8x128xf32>
    %173 = arith.negf %172 : vector<8x128xf32>
    %174 = math.exp %173 : vector<8x128xf32>
    %cst_55 = arith.constant 1.000000e+00 : f32
    %175 = vector.broadcast %cst_55 : f32 to vector<8x128xf32>
    %176 = arith.addf %175, %174 : vector<8x128xf32>
    %177 = arith.divf %175, %176 : vector<8x128xf32>
    %178 = vector.extract_strided_slice %171 {offsets = [0, 128], sizes = [8, 128], strides = [1, 1]} : vector<8x512xf32> to vector<8x128xf32>
    %179 = arith.negf %178 : vector<8x128xf32>
    %180 = math.exp %179 : vector<8x128xf32>
    %cst_56 = arith.constant 1.000000e+00 : f32
    %181 = vector.broadcast %cst_56 : f32 to vector<8x128xf32>
    %182 = arith.addf %181, %180 : vector<8x128xf32>
    %183 = arith.divf %181, %182 : vector<8x128xf32>
    %184 = vector.extract_strided_slice %171 {offsets = [0, 256], sizes = [8, 128], strides = [1, 1]} : vector<8x512xf32> to vector<8x128xf32>
    %185 = math.tanh %184 : vector<8x128xf32>
    %186 = vector.extract_strided_slice %171 {offsets = [0, 384], sizes = [8, 128], strides = [1, 1]} : vector<8x512xf32> to vector<8x128xf32>
    %187 = arith.negf %186 : vector<8x128xf32>
    %188 = math.exp %187 : vector<8x128xf32>
    %cst_57 = arith.constant 1.000000e+00 : f32
    %189 = vector.broadcast %cst_57 : f32 to vector<8x128xf32>
    %190 = arith.addf %189, %188 : vector<8x128xf32>
    %191 = arith.divf %189, %190 : vector<8x128xf32>
    %192 = arith.mulf %183, %161 : vector<8x128xf32>
    %193 = arith.mulf %177, %185 : vector<8x128xf32>
    %194 = arith.addf %192, %193 : vector<8x128xf32>
    %195 = math.tanh %194 : vector<8x128xf32>
    %196 = arith.mulf %191, %195 : vector<8x128xf32>
    %197 = arith.truncf %196 : vector<8x128xf32> to vector<8x128xbf16>
    %c5_i32 = arith.constant 5 : i32
    %c8_i32_58 = arith.constant 8 : i32
    %198 = arith.muli %c5_i32, %c8_i32_58 : i32
    %199 = tpu.assume_multiple %198, 8 : i32
    %200 = arith.index_cast %199 : i32 to index
    %c0_59 = arith.constant 0 : index
    %201 = vector.load %arg13[%200, %c0_59] : memref<64x512xf32, #tpu.memory_space<vmem>>, vector<8x512xf32>
    %c0_60 = arith.constant 0 : index
    %c0_61 = arith.constant 0 : index
    %202 = vector.load %arg5[%c0_60, %c0_61] : memref<128x512xbf16, #tpu.memory_space<vmem>>, vector<128x512xbf16>
    %cst_62 = arith.constant dense<0.000000e+00> : vector<8x512xf32>
    %203 = tpu.matmul %197, %202, %cst_62 {dimension_numbers = #tpu.dot_dimension_numbers<[1], [0], [0], [1], [0, 0, 1, 1], [], []>} : vector<8x128xbf16>, vector<128x512xbf16>, vector<8x512xf32> -> vector<8x512xf32>
    %204 = arith.addf %201, %203 : vector<8x512xf32>
    %205 = vector.extract_strided_slice %204 {offsets = [0, 0], sizes = [8, 128], strides = [1, 1]} : vector<8x512xf32> to vector<8x128xf32>
    %206 = arith.negf %205 : vector<8x128xf32>
    %207 = math.exp %206 : vector<8x128xf32>
    %cst_63 = arith.constant 1.000000e+00 : f32
    %208 = vector.broadcast %cst_63 : f32 to vector<8x128xf32>
    %209 = arith.addf %208, %207 : vector<8x128xf32>
    %210 = arith.divf %208, %209 : vector<8x128xf32>
    %211 = vector.extract_strided_slice %204 {offsets = [0, 128], sizes = [8, 128], strides = [1, 1]} : vector<8x512xf32> to vector<8x128xf32>
    %212 = arith.negf %211 : vector<8x128xf32>
    %213 = math.exp %212 : vector<8x128xf32>
    %cst_64 = arith.constant 1.000000e+00 : f32
    %214 = vector.broadcast %cst_64 : f32 to vector<8x128xf32>
    %215 = arith.addf %214, %213 : vector<8x128xf32>
    %216 = arith.divf %214, %215 : vector<8x128xf32>
    %217 = vector.extract_strided_slice %204 {offsets = [0, 256], sizes = [8, 128], strides = [1, 1]} : vector<8x512xf32> to vector<8x128xf32>
    %218 = math.tanh %217 : vector<8x128xf32>
    %219 = vector.extract_strided_slice %204 {offsets = [0, 384], sizes = [8, 128], strides = [1, 1]} : vector<8x512xf32> to vector<8x128xf32>
    %220 = arith.negf %219 : vector<8x128xf32>
    %221 = math.exp %220 : vector<8x128xf32>
    %cst_65 = arith.constant 1.000000e+00 : f32
    %222 = vector.broadcast %cst_65 : f32 to vector<8x128xf32>
    %223 = arith.addf %222, %221 : vector<8x128xf32>
    %224 = arith.divf %222, %223 : vector<8x128xf32>
    %225 = arith.mulf %216, %194 : vector<8x128xf32>
    %226 = arith.mulf %210, %218 : vector<8x128xf32>
    %227 = arith.addf %225, %226 : vector<8x128xf32>
    %228 = math.tanh %227 : vector<8x128xf32>
    %229 = arith.mulf %224, %228 : vector<8x128xf32>
    %230 = arith.truncf %229 : vector<8x128xf32> to vector<8x128xbf16>
    %c6_i32 = arith.constant 6 : i32
    %c8_i32_66 = arith.constant 8 : i32
    %231 = arith.muli %c6_i32, %c8_i32_66 : i32
    %232 = tpu.assume_multiple %231, 8 : i32
    %233 = arith.index_cast %232 : i32 to index
    %c0_67 = arith.constant 0 : index
    %234 = vector.load %arg13[%233, %c0_67] : memref<64x512xf32, #tpu.memory_space<vmem>>, vector<8x512xf32>
    %c0_68 = arith.constant 0 : index
    %c0_69 = arith.constant 0 : index
    %235 = vector.load %arg5[%c0_68, %c0_69] : memref<128x512xbf16, #tpu.memory_space<vmem>>, vector<128x512xbf16>
    %cst_70 = arith.constant dense<0.000000e+00> : vector<8x512xf32>
    %236 = tpu.matmul %230, %235, %cst_70 {dimension_numbers = #tpu.dot_dimension_numbers<[1], [0], [0], [1], [0, 0, 1, 1], [], []>} : vector<8x128xbf16>, vector<128x512xbf16>, vector<8x512xf32> -> vector<8x512xf32>
    %237 = arith.addf %234, %236 : vector<8x512xf32>
    %238 = vector.extract_strided_slice %237 {offsets = [0, 0], sizes = [8, 128], strides = [1, 1]} : vector<8x512xf32> to vector<8x128xf32>
    %239 = arith.negf %238 : vector<8x128xf32>
    %240 = math.exp %239 : vector<8x128xf32>
    %cst_71 = arith.constant 1.000000e+00 : f32
    %241 = vector.broadcast %cst_71 : f32 to vector<8x128xf32>
    %242 = arith.addf %241, %240 : vector<8x128xf32>
    %243 = arith.divf %241, %242 : vector<8x128xf32>
    %244 = vector.extract_strided_slice %237 {offsets = [0, 128], sizes = [8, 128], strides = [1, 1]} : vector<8x512xf32> to vector<8x128xf32>
    %245 = arith.negf %244 : vector<8x128xf32>
    %246 = math.exp %245 : vector<8x128xf32>
    %cst_72 = arith.constant 1.000000e+00 : f32
    %247 = vector.broadcast %cst_72 : f32 to vector<8x128xf32>
    %248 = arith.addf %247, %246 : vector<8x128xf32>
    %249 = arith.divf %247, %248 : vector<8x128xf32>
    %250 = vector.extract_strided_slice %237 {offsets = [0, 256], sizes = [8, 128], strides = [1, 1]} : vector<8x512xf32> to vector<8x128xf32>
    %251 = math.tanh %250 : vector<8x128xf32>
    %252 = vector.extract_strided_slice %237 {offsets = [0, 384], sizes = [8, 128], strides = [1, 1]} : vector<8x512xf32> to vector<8x128xf32>
    %253 = arith.negf %252 : vector<8x128xf32>
    %254 = math.exp %253 : vector<8x128xf32>
    %cst_73 = arith.constant 1.000000e+00 : f32
    %255 = vector.broadcast %cst_73 : f32 to vector<8x128xf32>
    %256 = arith.addf %255, %254 : vector<8x128xf32>
    %257 = arith.divf %255, %256 : vector<8x128xf32>
    %258 = arith.mulf %249, %227 : vector<8x128xf32>
    %259 = arith.mulf %243, %251 : vector<8x128xf32>
    %260 = arith.addf %258, %259 : vector<8x128xf32>
    %261 = math.tanh %260 : vector<8x128xf32>
    %262 = arith.mulf %257, %261 : vector<8x128xf32>
    %263 = arith.truncf %262 : vector<8x128xf32> to vector<8x128xbf16>
    %c7_i32 = arith.constant 7 : i32
    %c8_i32_74 = arith.constant 8 : i32
    %264 = arith.muli %c7_i32, %c8_i32_74 : i32
    %265 = tpu.assume_multiple %264, 8 : i32
    %266 = arith.index_cast %265 : i32 to index
    %c0_75 = arith.constant 0 : index
    %267 = vector.load %arg13[%266, %c0_75] : memref<64x512xf32, #tpu.memory_space<vmem>>, vector<8x512xf32>
    %c0_76 = arith.constant 0 : index
    %c0_77 = arith.constant 0 : index
    %268 = vector.load %arg5[%c0_76, %c0_77] : memref<128x512xbf16, #tpu.memory_space<vmem>>, vector<128x512xbf16>
    %cst_78 = arith.constant dense<0.000000e+00> : vector<8x512xf32>
    %269 = tpu.matmul %263, %268, %cst_78 {dimension_numbers = #tpu.dot_dimension_numbers<[1], [0], [0], [1], [0, 0, 1, 1], [], []>} : vector<8x128xbf16>, vector<128x512xbf16>, vector<8x512xf32> -> vector<8x512xf32>
    %270 = arith.addf %267, %269 : vector<8x512xf32>
    %271 = vector.extract_strided_slice %270 {offsets = [0, 0], sizes = [8, 128], strides = [1, 1]} : vector<8x512xf32> to vector<8x128xf32>
    %272 = arith.negf %271 : vector<8x128xf32>
    %273 = math.exp %272 : vector<8x128xf32>
    %cst_79 = arith.constant 1.000000e+00 : f32
    %274 = vector.broadcast %cst_79 : f32 to vector<8x128xf32>
    %275 = arith.addf %274, %273 : vector<8x128xf32>
    %276 = arith.divf %274, %275 : vector<8x128xf32>
    %277 = vector.extract_strided_slice %270 {offsets = [0, 128], sizes = [8, 128], strides = [1, 1]} : vector<8x512xf32> to vector<8x128xf32>
    %278 = arith.negf %277 : vector<8x128xf32>
    %279 = math.exp %278 : vector<8x128xf32>
    %cst_80 = arith.constant 1.000000e+00 : f32
    %280 = vector.broadcast %cst_80 : f32 to vector<8x128xf32>
    %281 = arith.addf %280, %279 : vector<8x128xf32>
    %282 = arith.divf %280, %281 : vector<8x128xf32>
    %283 = vector.extract_strided_slice %270 {offsets = [0, 256], sizes = [8, 128], strides = [1, 1]} : vector<8x512xf32> to vector<8x128xf32>
    %284 = math.tanh %283 : vector<8x128xf32>
    %285 = vector.extract_strided_slice %270 {offsets = [0, 384], sizes = [8, 128], strides = [1, 1]} : vector<8x512xf32> to vector<8x128xf32>
    %286 = arith.negf %285 : vector<8x128xf32>
    %287 = math.exp %286 : vector<8x128xf32>
    %cst_81 = arith.constant 1.000000e+00 : f32
    %288 = vector.broadcast %cst_81 : f32 to vector<8x128xf32>
    %289 = arith.addf %288, %287 : vector<8x128xf32>
    %290 = arith.divf %288, %289 : vector<8x128xf32>
    %291 = arith.mulf %282, %260 : vector<8x128xf32>
    %292 = arith.mulf %276, %284 : vector<8x128xf32>
    %293 = arith.addf %291, %292 : vector<8x128xf32>
    %294 = math.tanh %293 : vector<8x128xf32>
    %295 = arith.mulf %290, %294 : vector<8x128xf32>
    %296 = arith.truncf %295 : vector<8x128xf32> to vector<8x128xbf16>
    %c8_i32_82 = arith.constant 8 : i32
    %c0_83 = arith.constant 0 : index
    %c0_84 = arith.constant 0 : index
    %297 = vector.load %arg11[%c0_83, %c0_84] : memref<8x128xbf16, #tpu.memory_space<vmem>>, vector<8x128xbf16>
    tpu.vector_store %arg11[%c0_83, %c0_84], %296 {strides = array<i32>} : memref<8x128xbf16, #tpu.memory_space<vmem>>, vector<8x128xbf16>,
    %c0_85 = arith.constant 0 : index
    %c0_86 = arith.constant 0 : index
    %298 = vector.load %arg12[%c0_85, %c0_86] : memref<8x128xf32, #tpu.memory_space<vmem>>, vector<8x128xf32>
    tpu.vector_store %arg12[%c0_85, %c0_86], %293 {strides = array<i32>} : memref<8x128xf32, #tpu.memory_space<vmem>>, vector<8x128xf32>,
    %c0_i32_87 = arith.constant 0 : i32
    %299 = arith.cmpi eq, %arg1, %c0_i32_87 : i32
    %300 = arith.extui %299 : i1 to i32
    %c0_i32_88 = arith.constant 0 : i32
    %301 = arith.cmpi ne, %300, %c0_i32_88 : i32
    scf.if %301 {
      %302 = tpu.iota {dimensions = array<i32: 1>} : vector<8x128xi32>
      %c32_i32 = arith.constant 32 : i32
      %303 = vector.broadcast %c32_i32 : i32 to vector<8x128xi32>
      %304 = arith.cmpi slt, %302, %303 : vector<8x128xi32>
      %cst_89 = arith.constant 0.000000e+00 : f32
      %305 = vector.broadcast %cst_89 : f32 to vector<8x128xf32>
      %306 = arith.select %304, %293, %305 : vector<8x128xi1>, vector<8x128xf32>
      %cst_90 = arith.constant dense<0.000000e+00> : vector<8xf32>
      %307 = vector.multi_reduction <add>, %306, %cst_90 [1] : vector<8x128xf32> to vector<8xf32>
      %308 = vector.shape_cast %307 : vector<8xf32> to vector<8x1xf32>
      %cst_91 = arith.constant 3.125000e-02 : f32
      %309 = vector.broadcast %cst_91 : f32 to vector<8x1xf32>
      %310 = arith.mulf %308, %309 : vector<8x1xf32>
      %311 = vector.broadcast %310 : vector<8x1xf32> to vector<8x128xf32>
      %312 = arith.subf %293, %311 : vector<8x128xf32>
      %313 = arith.mulf %312, %312 : vector<8x128xf32>
      %cst_92 = arith.constant 0.000000e+00 : f32
      %314 = vector.broadcast %cst_92 : f32 to vector<8x128xf32>
      %315 = arith.select %304, %313, %314 : vector<8x128xi1>, vector<8x128xf32>
      %cst_93 = arith.constant dense<0.000000e+00> : vector<8xf32>
      %316 = vector.multi_reduction <add>, %315, %cst_93 [1] : vector<8x128xf32> to vector<8xf32>
      %317 = vector.shape_cast %316 : vector<8xf32> to vector<8x1xf32>
      %cst_94 = arith.constant 3.125000e-02 : f32
      %318 = vector.broadcast %cst_94 : f32 to vector<8x1xf32>
      %319 = arith.mulf %317, %318 : vector<8x1xf32>
      %cst_95 = arith.constant 9.99999974E-6 : f32
      %320 = vector.broadcast %cst_95 : f32 to vector<8x1xf32>
      %321 = arith.addf %319, %320 : vector<8x1xf32>
      %322 = math.rsqrt %321 : vector<8x1xf32>
      %323 = vector.broadcast %322 : vector<8x1xf32> to vector<8x128xf32>
      %324 = arith.mulf %312, %323 : vector<8x128xf32>
      %c0_96 = arith.constant 0 : index
      %c0_97 = arith.constant 0 : index
      %325 = vector.load %arg6[%c0_96, %c0_97] : memref<1x128xf32, #tpu.memory_space<vmem>>, vector<1x128xf32>
      %326 = vector.broadcast %325 : vector<1x128xf32> to vector<8x128xf32>
      %327 = arith.mulf %324, %326 : vector<8x128xf32>
      %c0_98 = arith.constant 0 : index
      %c0_99 = arith.constant 0 : index
      %328 = vector.load %arg7[%c0_98, %c0_99] : memref<1x128xf32, #tpu.memory_space<vmem>>, vector<1x128xf32>
      %329 = vector.broadcast %328 : vector<1x128xf32> to vector<8x128xf32>
      %330 = arith.addf %327, %329 : vector<8x128xf32>
      %c0_100 = arith.constant 0 : index
      %c0_101 = arith.constant 0 : index
      %331 = vector.load %arg8[%c0_100, %c0_101] : memref<128x5xf32, #tpu.memory_space<vmem>>, vector<128x5xf32>
      %cst_102 = arith.constant dense<0.000000e+00> : vector<8x5xf32>
      %332 = tpu.matmul %330, %331, %cst_102 {dimension_numbers = #tpu.dot_dimension_numbers<[1], [0], [0], [1], [0, 0, 1, 1], [], []>} : vector<8x128xf32>, vector<128x5xf32>, vector<8x5xf32> -> vector<8x5xf32>
      %c0_103 = arith.constant 0 : index
      %c0_104 = arith.constant 0 : index
      %333 = vector.load %arg9[%c0_103, %c0_104] : memref<1x5xf32, #tpu.memory_space<vmem>>, vector<1x5xf32>
      %334 = vector.broadcast %333 : vector<1x5xf32> to vector<8x5xf32>
      %335 = arith.addf %332, %334 : vector<8x5xf32>
      %cst_105 = arith.constant dense<0xFF800000> : vector<8xf32>
      %336 = vector.multi_reduction <maximumf>, %335, %cst_105 [1] : vector<8x5xf32> to vector<8xf32>
      %337 = vector.shape_cast %336 : vector<8xf32> to vector<8x1xf32>
      %338 = vector.broadcast %337 : vector<8x1xf32> to vector<8x5xf32>
      %339 = arith.subf %335, %338 : vector<8x5xf32>
      %340 = math.exp %339 : vector<8x5xf32>
      %cst_106 = arith.constant dense<0.000000e+00> : vector<8xf32>
      %341 = vector.multi_reduction <add>, %340, %cst_106 [1] : vector<8x5xf32> to vector<8xf32>
      %342 = vector.shape_cast %341 : vector<8xf32> to vector<8x1xf32>
      %343 = math.log %342 : vector<8x1xf32>
      %344 = vector.broadcast %343 : vector<8x1xf32> to vector<8x5xf32>
      %345 = arith.subf %339, %344 : vector<8x5xf32>
      %c0_107 = arith.constant 0 : index
      %c0_108 = arith.constant 0 : index
      %346 = vector.load %arg10[%c0_107, %c0_108] : memref<8x5xf32, #tpu.memory_space<vmem>>, vector<8x5xf32>
      tpu.vector_store %arg10[%c0_107, %c0_108], %345 {strides = array<i32>} : memref<8x5xf32, #tpu.memory_space<vmem>>, vector<8x5xf32>,
    } else {
    }
    return
  }
  func.func @transform_0(%arg0: i32, %arg1: i32) -> (i32, i32, i32) {
    %c0_i32 = arith.constant 0 : i32
    %c0_i32_0 = arith.constant 0 : i32
    return %arg0, %arg1, %c0_i32 : i32, i32, i32
  }
  func.func @transform_1(%arg0: i32, %arg1: i32) -> (i32, i32) {
    %c0_i32 = arith.constant 0 : i32
    %c0_i32_0 = arith.constant 0 : i32
    %c0_i32_1 = arith.constant 0 : i32
    return %c0_i32, %c0_i32_0 : i32, i32
  }
  func.func @transform_2(%arg0: i32, %arg1: i32) -> (i32, i32) {
    %c0_i32 = arith.constant 0 : i32
    %c0_i32_0 = arith.constant 0 : i32
    %c0_i32_1 = arith.constant 0 : i32
    return %c0_i32, %c0_i32_0 : i32, i32
  }
  func.func @transform_3(%arg0: i32, %arg1: i32) -> (i32, i32) {
    %c0_i32 = arith.constant 0 : i32
    %c0_i32_0 = arith.constant 0 : i32
    %c0_i32_1 = arith.constant 0 : i32
    return %c0_i32, %c0_i32_0 : i32, i32
  }
  func.func @transform_4(%arg0: i32, %arg1: i32) -> (i32, i32) {
    %c0_i32 = arith.constant 0 : i32
    %c0_i32_0 = arith.constant 0 : i32
    %c0_i32_1 = arith.constant 0 : i32
    return %c0_i32, %c0_i32_0 : i32, i32
  }
  func.func @transform_5(%arg0: i32, %arg1: i32) -> (i32, i32) {
    %c0_i32 = arith.constant 0 : i32
    %c0_i32_0 = arith.constant 0 : i32
    %c0_i32_1 = arith.constant 0 : i32
    return %c0_i32, %c0_i32_0 : i32, i32
  }
  func.func @transform_6(%arg0: i32, %arg1: i32) -> (i32, i32) {
    %c0_i32 = arith.constant 0 : i32
    %c0_i32_0 = arith.constant 0 : i32
    %c0_i32_1 = arith.constant 0 : i32
    return %c0_i32, %c0_i32_0 : i32, i32
  }
  func.func @transform_7(%arg0: i32, %arg1: i32) -> (i32, i32) {
    %c0_i32 = arith.constant 0 : i32
    %c0_i32_0 = arith.constant 0 : i32
    %c0_i32_1 = arith.constant 0 : i32
    return %c0_i32, %c0_i32_0 : i32, i32
  }
  func.func @transform_8(%arg0: i32, %arg1: i32) -> (i32, i32) {
    %c0_i32 = arith.constant 0 : i32
    %c0_i32_0 = arith.constant 0 : i32
    return %arg0, %c0_i32 : i32, i32
  }
}

module attributes {stable_mosaic.version = 11 : i64} {
  func.func @rnn_forward_kernel(%arg0: i32, %arg1: i32, %arg2: memref<1x64x4xbf16, #tpu.memory_space<vmem>>, %arg3: memref<4x512xbf16, #tpu.memory_space<vmem>>, %arg4: memref<1x512xf32, #tpu.memory_space<vmem>>, %arg5: memref<128x512xbf16, #tpu.memory_space<vmem>>, %arg6: memref<1x128xf32, #tpu.memory_space<vmem>>, %arg7: memref<1x128xf32, #tpu.memory_space<vmem>>, %arg8: memref<128x5xf32, #tpu.memory_space<vmem>>, %arg9: memref<1x5xf32, #tpu.memory_space<vmem>>, %arg10: memref<8x5xf32, #tpu.memory_space<vmem>>, %arg11: memref<8x128xbf16, #tpu.memory_space<vmem>>, %arg12: memref<8x128xf32, #tpu.memory_space<vmem>>, %arg13: memref<64x512xf32, #tpu.memory_space<vmem>>) attributes {dimension_semantics = [#tpu.dimension_semantics<parallel>, #tpu.dimension_semantics<arbitrary>], iteration_bounds = array<i64: 1, 1>, scalar_prefetch = 0 : i64, scratch_operands = 3 : i64, tpu.core_type = #tpu.core_type<tc>, window_params = [{transform_indices = @transform_0, window_bounds = array<i64: 1, 64, 4>}, {pipeline_mode = #tpu.pipeline_mode<synchronous>, transform_indices = @transform_1, window_bounds = array<i64: 4, 512>}, {pipeline_mode = #tpu.pipeline_mode<synchronous>, transform_indices = @transform_2, window_bounds = array<i64: 1, 512>}, {pipeline_mode = #tpu.pipeline_mode<synchronous>, transform_indices = @transform_3, window_bounds = array<i64: 128, 512>}, {pipeline_mode = #tpu.pipeline_mode<synchronous>, transform_indices = @transform_4, window_bounds = array<i64: 1, 128>}, {pipeline_mode = #tpu.pipeline_mode<synchronous>, transform_indices = @transform_5, window_bounds = array<i64: 1, 128>}, {pipeline_mode = #tpu.pipeline_mode<synchronous>, transform_indices = @transform_6, window_bounds = array<i64: 128, 5>}, {pipeline_mode = #tpu.pipeline_mode<synchronous>, transform_indices = @transform_7, window_bounds = array<i64: 1, 5>}, {transform_indices = @transform_8, window_bounds = array<i64: 8, 5>}]} {
    %c0_i32 = arith.constant 0 : i32
    %0 = arith.cmpi eq, %arg1, %c0_i32 : i32
    %1 = arith.extui %0 : i1 to i32
    %c0_i32_0 = arith.constant 0 : i32
    %2 = arith.cmpi ne, %1, %c0_i32_0 : i32
    scf.if %2 {
      %cst_89 = arith.constant 0.000000e+00 : bf16
      %302 = vector.broadcast %cst_89 : bf16 to vector<8x128xbf16>
      %c0_90 = arith.constant 0 : index
      %c0_91 = arith.constant 0 : index
      %303 = vector.load %arg11[%c0_90, %c0_91] : memref<8x128xbf16, #tpu.memory_space<vmem>>, vector<8x128xbf16>
      tpu.vector_store %arg11[%c0_90, %c0_91], %302 {strides = array<i32>} : memref<8x128xbf16, #tpu.memory_space<vmem>>, vector<8x128xbf16>,
      %cst_92 = arith.constant 0.000000e+00 : f32
      %304 = vector.broadcast %cst_92 : f32 to vector<8x128xf32>
      %c0_93 = arith.constant 0 : index
      %c0_94 = arith.constant 0 : index
      %305 = vector.load %arg12[%c0_93, %c0_94] : memref<8x128xf32, #tpu.memory_space<vmem>>, vector<8x128xf32>
      tpu.vector_store %arg12[%c0_93, %c0_94], %304 {strides = array<i32>} : memref<8x128xf32, #tpu.memory_space<vmem>>, vector<8x128xf32>,
    } else {
    }
    %c0 = arith.constant 0 : index
    %c0_1 = arith.constant 0 : index
    %c0_2 = arith.constant 0 : index
    %3 = vector.load %arg2[%c0, %c0_1, %c0_2] : memref<1x64x4xbf16, #tpu.memory_space<vmem>>, vector<1x64x4xbf16>
    %4 = vector.shape_cast %3 : vector<1x64x4xbf16> to vector<64x4xbf16>
    %5 = arith.extf %4 : vector<64x4xbf16> to vector<64x4xf32>
    %cst = arith.constant dense<0.000000e+00> : vector<64xf32>
    %6 = vector.multi_reduction <add>, %5, %cst [1] : vector<64x4xf32> to vector<64xf32>
    %7 = vector.shape_cast %6 : vector<64xf32> to vector<64x1xf32>
    %cst_3 = arith.constant 4.000000e+00 : f32
    %8 = vector.broadcast %cst_3 : f32 to vector<64x1xf32>
    %9 = arith.divf %7, %8 : vector<64x1xf32>
    %10 = vector.broadcast %9 : vector<64x1xf32> to vector<64x4xf32>
    %11 = arith.subf %5, %10 : vector<64x4xf32>
    %12 = arith.mulf %11, %11 : vector<64x4xf32>
    %cst_4 = arith.constant dense<0.000000e+00> : vector<64xf32>
    %13 = vector.multi_reduction <add>, %12, %cst_4 [1] : vector<64x4xf32> to vector<64xf32>
    %14 = vector.shape_cast %13 : vector<64xf32> to vector<64x1xf32>
    %cst_5 = arith.constant 4.000000e+00 : f32
    %15 = vector.broadcast %cst_5 : f32 to vector<64x1xf32>
    %16 = arith.divf %14, %15 : vector<64x1xf32>
    %17 = vector.broadcast %9 : vector<64x1xf32> to vector<64x4xf32>
    %18 = arith.subf %5, %17 : vector<64x4xf32>
    %cst_6 = arith.constant 9.99999974E-6 : f32
    %19 = vector.broadcast %cst_6 : f32 to vector<64x1xf32>
    %20 = arith.addf %16, %19 : vector<64x1xf32>
    %21 = math.rsqrt %20 : vector<64x1xf32>
    %22 = vector.broadcast %21 : vector<64x1xf32> to vector<64x4xf32>
    %23 = arith.mulf %18, %22 : vector<64x4xf32>
    %c0_7 = arith.constant 0 : index
    %c0_8 = arith.constant 0 : index
    %24 = vector.load %arg3[%c0_7, %c0_8] : memref<4x512xbf16, #tpu.memory_space<vmem>>, vector<4x512xbf16>
    %25 = arith.truncf %23 : vector<64x4xf32> to vector<64x4xbf16>
    %cst_9 = arith.constant dense<0.000000e+00> : vector<64x512xf32>
    %26 = tpu.matmul %25, %24, %cst_9 {dimension_numbers = #tpu.dot_dimension_numbers<[1], [0], [0], [1], [0, 0, 1, 1], [], []>} : vector<64x4xbf16>, vector<4x512xbf16>, vector<64x512xf32> -> vector<64x512xf32>
    %c0_10 = arith.constant 0 : index
    %c0_11 = arith.constant 0 : index
    %27 = vector.load %arg4[%c0_10, %c0_11] : memref<1x512xf32, #tpu.memory_space<vmem>>, vector<1x512xf32>
    %28 = vector.broadcast %27 : vector<1x512xf32> to vector<64x512xf32>
    %29 = arith.addf %26, %28 : vector<64x512xf32>
    %c0_12 = arith.constant 0 : index
    %c0_13 = arith.constant 0 : index
    %30 = vector.load %arg13[%c0_12, %c0_13] : memref<64x512xf32, #tpu.memory_space<vmem>>, vector<64x512xf32>
    tpu.vector_store %arg13[%c0_12, %c0_13], %29 {strides = array<i32>} : memref<64x512xf32, #tpu.memory_space<vmem>>, vector<64x512xf32>,
    %c0_14 = arith.constant 0 : index
    %c0_15 = arith.constant 0 : index
    %31 = vector.load %arg11[%c0_14, %c0_15] : memref<8x128xbf16, #tpu.memory_space<vmem>>, vector<8x128xbf16>
    %c0_16 = arith.constant 0 : index
    %c0_17 = arith.constant 0 : index
    %32 = vector.load %arg12[%c0_16, %c0_17] : memref<8x128xf32, #tpu.memory_space<vmem>>, vector<8x128xf32>
    %c0_i32_18 = arith.constant 0 : i32
    %c8_i32 = arith.constant 8 : i32
    %33 = arith.muli %c0_i32_18, %c8_i32 : i32
    %34 = tpu.assume_multiple %33, 8 : i32
    %35 = arith.index_cast %34 : i32 to index
    %c0_19 = arith.constant 0 : index
    %36 = vector.load %arg13[%35, %c0_19] : memref<64x512xf32, #tpu.memory_space<vmem>>, vector<8x512xf32>
    %c0_20 = arith.constant 0 : index
    %c0_21 = arith.constant 0 : index
    %37 = vector.load %arg5[%c0_20, %c0_21] : memref<128x512xbf16, #tpu.memory_space<vmem>>, vector<128x512xbf16>
    %cst_22 = arith.constant dense<0.000000e+00> : vector<8x512xf32>
    %38 = tpu.matmul %31, %37, %cst_22 {dimension_numbers = #tpu.dot_dimension_numbers<[1], [0], [0], [1], [0, 0, 1, 1], [], []>} : vector<8x128xbf16>, vector<128x512xbf16>, vector<8x512xf32> -> vector<8x512xf32>
    %39 = arith.addf %36, %38 : vector<8x512xf32>
    %40 = vector.extract_strided_slice %39 {offsets = [0, 0], sizes = [8, 128], strides = [1, 1]} : vector<8x512xf32> to vector<8x128xf32>
    %41 = arith.negf %40 : vector<8x128xf32>
    %42 = math.exp %41 : vector<8x128xf32>
    %cst_23 = arith.constant 1.000000e+00 : f32
    %43 = vector.broadcast %cst_23 : f32 to vector<8x128xf32>
    %44 = arith.addf %43, %42 : vector<8x128xf32>
    %45 = arith.divf %43, %44 : vector<8x128xf32>
    %46 = vector.extract_strided_slice %39 {offsets = [0, 128], sizes = [8, 128], strides = [1, 1]} : vector<8x512xf32> to vector<8x128xf32>
    %47 = arith.negf %46 : vector<8x128xf32>
    %48 = math.exp %47 : vector<8x128xf32>
    %cst_24 = arith.constant 1.000000e+00 : f32
    %49 = vector.broadcast %cst_24 : f32 to vector<8x128xf32>
    %50 = arith.addf %49, %48 : vector<8x128xf32>
    %51 = arith.divf %49, %50 : vector<8x128xf32>
    %52 = vector.extract_strided_slice %39 {offsets = [0, 256], sizes = [8, 128], strides = [1, 1]} : vector<8x512xf32> to vector<8x128xf32>
    %53 = math.tanh %52 : vector<8x128xf32>
    %54 = vector.extract_strided_slice %39 {offsets = [0, 384], sizes = [8, 128], strides = [1, 1]} : vector<8x512xf32> to vector<8x128xf32>
    %55 = arith.negf %54 : vector<8x128xf32>
    %56 = math.exp %55 : vector<8x128xf32>
    %cst_25 = arith.constant 1.000000e+00 : f32
    %57 = vector.broadcast %cst_25 : f32 to vector<8x128xf32>
    %58 = arith.addf %57, %56 : vector<8x128xf32>
    %59 = arith.divf %57, %58 : vector<8x128xf32>
    %60 = arith.mulf %51, %32 : vector<8x128xf32>
    %61 = arith.mulf %45, %53 : vector<8x128xf32>
    %62 = arith.addf %60, %61 : vector<8x128xf32>
    %63 = math.tanh %62 : vector<8x128xf32>
    %64 = arith.mulf %59, %63 : vector<8x128xf32>
    %65 = arith.truncf %64 : vector<8x128xf32> to vector<8x128xbf16>
    %c1_i32 = arith.constant 1 : i32
    %c8_i32_26 = arith.constant 8 : i32
    %66 = arith.muli %c1_i32, %c8_i32_26 : i32
    %67 = tpu.assume_multiple %66, 8 : i32
    %68 = arith.index_cast %67 : i32 to index
    %c0_27 = arith.constant 0 : index
    %69 = vector.load %arg13[%68, %c0_27] : memref<64x512xf32, #tpu.memory_space<vmem>>, vector<8x512xf32>
    %c0_28 = arith.constant 0 : index
    %c0_29 = arith.constant 0 : index
    %70 = vector.load %arg5[%c0_28, %c0_29] : memref<128x512xbf16, #tpu.memory_space<vmem>>, vector<128x512xbf16>
    %cst_30 = arith.constant dense<0.000000e+00> : vector<8x512xf32>
    %71 = tpu.matmul %65, %70, %cst_30 {dimension_numbers = #tpu.dot_dimension_numbers<[1], [0], [0], [1], [0, 0, 1, 1], [], []>} : vector<8x128xbf16>, vector<128x512xbf16>, vector<8x512xf32> -> vector<8x512xf32>
    %72 = arith.addf %69, %71 : vector<8x512xf32>
    %73 = vector.extract_strided_slice %72 {offsets = [0, 0], sizes = [8, 128], strides = [1, 1]} : vector<8x512xf32> to vector<8x128xf32>
    %74 = arith.negf %73 : vector<8x128xf32>
    %75 = math.exp %74 : vector<8x128xf32>
    %cst_31 = arith.constant 1.000000e+00 : f32
    %76 = vector.broadcast %cst_31 : f32 to vector<8x128xf32>
    %77 = arith.addf %76, %75 : vector<8x128xf32>
    %78 = arith.divf %76, %77 : vector<8x128xf32>
    %79 = vector.extract_strided_slice %72 {offsets = [0, 128], sizes = [8, 128], strides = [1, 1]} : vector<8x512xf32> to vector<8x128xf32>
    %80 = arith.negf %79 : vector<8x128xf32>
    %81 = math.exp %80 : vector<8x128xf32>
    %cst_32 = arith.constant 1.000000e+00 : f32
    %82 = vector.broadcast %cst_32 : f32 to vector<8x128xf32>
    %83 = arith.addf %82, %81 : vector<8x128xf32>
    %84 = arith.divf %82, %83 : vector<8x128xf32>
    %85 = vector.extract_strided_slice %72 {offsets = [0, 256], sizes = [8, 128], strides = [1, 1]} : vector<8x512xf32> to vector<8x128xf32>
    %86 = math.tanh %85 : vector<8x128xf32>
    %87 = vector.extract_strided_slice %72 {offsets = [0, 384], sizes = [8, 128], strides = [1, 1]} : vector<8x512xf32> to vector<8x128xf32>
    %88 = arith.negf %87 : vector<8x128xf32>
    %89 = math.exp %88 : vector<8x128xf32>
    %cst_33 = arith.constant 1.000000e+00 : f32
    %90 = vector.broadcast %cst_33 : f32 to vector<8x128xf32>
    %91 = arith.addf %90, %89 : vector<8x128xf32>
    %92 = arith.divf %90, %91 : vector<8x128xf32>
    %93 = arith.mulf %84, %62 : vector<8x128xf32>
    %94 = arith.mulf %78, %86 : vector<8x128xf32>
    %95 = arith.addf %93, %94 : vector<8x128xf32>
    %96 = math.tanh %95 : vector<8x128xf32>
    %97 = arith.mulf %92, %96 : vector<8x128xf32>
    %98 = arith.truncf %97 : vector<8x128xf32> to vector<8x128xbf16>
    %c2_i32 = arith.constant 2 : i32
    %c8_i32_34 = arith.constant 8 : i32
    %99 = arith.muli %c2_i32, %c8_i32_34 : i32
    %100 = tpu.assume_multiple %99, 8 : i32
    %101 = arith.index_cast %100 : i32 to index
    %c0_35 = arith.constant 0 : index
    %102 = vector.load %arg13[%101, %c0_35] : memref<64x512xf32, #tpu.memory_space<vmem>>, vector<8x512xf32>
    %c0_36 = arith.constant 0 : index
    %c0_37 = arith.constant 0 : index
    %103 = vector.load %arg5[%c0_36, %c0_37] : memref<128x512xbf16, #tpu.memory_space<vmem>>, vector<128x512xbf16>
    %cst_38 = arith.constant dense<0.000000e+00> : vector<8x512xf32>
    %104 = tpu.matmul %98, %103, %cst_38 {dimension_numbers = #tpu.dot_dimension_numbers<[1], [0], [0], [1], [0, 0, 1, 1], [], []>} : vector<8x128xbf16>, vector<128x512xbf16>, vector<8x512xf32> -> vector<8x512xf32>
    %105 = arith.addf %102, %104 : vector<8x512xf32>
    %106 = vector.extract_strided_slice %105 {offsets = [0, 0], sizes = [8, 128], strides = [1, 1]} : vector<8x512xf32> to vector<8x128xf32>
    %107 = arith.negf %106 : vector<8x128xf32>
    %108 = math.exp %107 : vector<8x128xf32>
    %cst_39 = arith.constant 1.000000e+00 : f32
    %109 = vector.broadcast %cst_39 : f32 to vector<8x128xf32>
    %110 = arith.addf %109, %108 : vector<8x128xf32>
    %111 = arith.divf %109, %110 : vector<8x128xf32>
    %112 = vector.extract_strided_slice %105 {offsets = [0, 128], sizes = [8, 128], strides = [1, 1]} : vector<8x512xf32> to vector<8x128xf32>
    %113 = arith.negf %112 : vector<8x128xf32>
    %114 = math.exp %113 : vector<8x128xf32>
    %cst_40 = arith.constant 1.000000e+00 : f32
    %115 = vector.broadcast %cst_40 : f32 to vector<8x128xf32>
    %116 = arith.addf %115, %114 : vector<8x128xf32>
    %117 = arith.divf %115, %116 : vector<8x128xf32>
    %118 = vector.extract_strided_slice %105 {offsets = [0, 256], sizes = [8, 128], strides = [1, 1]} : vector<8x512xf32> to vector<8x128xf32>
    %119 = math.tanh %118 : vector<8x128xf32>
    %120 = vector.extract_strided_slice %105 {offsets = [0, 384], sizes = [8, 128], strides = [1, 1]} : vector<8x512xf32> to vector<8x128xf32>
    %121 = arith.negf %120 : vector<8x128xf32>
    %122 = math.exp %121 : vector<8x128xf32>
    %cst_41 = arith.constant 1.000000e+00 : f32
    %123 = vector.broadcast %cst_41 : f32 to vector<8x128xf32>
    %124 = arith.addf %123, %122 : vector<8x128xf32>
    %125 = arith.divf %123, %124 : vector<8x128xf32>
    %126 = arith.mulf %117, %95 : vector<8x128xf32>
    %127 = arith.mulf %111, %119 : vector<8x128xf32>
    %128 = arith.addf %126, %127 : vector<8x128xf32>
    %129 = math.tanh %128 : vector<8x128xf32>
    %130 = arith.mulf %125, %129 : vector<8x128xf32>
    %131 = arith.truncf %130 : vector<8x128xf32> to vector<8x128xbf16>
    %c3_i32 = arith.constant 3 : i32
    %c8_i32_42 = arith.constant 8 : i32
    %132 = arith.muli %c3_i32, %c8_i32_42 : i32
    %133 = tpu.assume_multiple %132, 8 : i32
    %134 = arith.index_cast %133 : i32 to index
    %c0_43 = arith.constant 0 : index
    %135 = vector.load %arg13[%134, %c0_43] : memref<64x512xf32, #tpu.memory_space<vmem>>, vector<8x512xf32>
    %c0_44 = arith.constant 0 : index
    %c0_45 = arith.constant 0 : index
    %136 = vector.load %arg5[%c0_44, %c0_45] : memref<128x512xbf16, #tpu.memory_space<vmem>>, vector<128x512xbf16>
    %cst_46 = arith.constant dense<0.000000e+00> : vector<8x512xf32>
    %137 = tpu.matmul %131, %136, %cst_46 {dimension_numbers = #tpu.dot_dimension_numbers<[1], [0], [0], [1], [0, 0, 1, 1], [], []>} : vector<8x128xbf16>, vector<128x512xbf16>, vector<8x512xf32> -> vector<8x512xf32>
    %138 = arith.addf %135, %137 : vector<8x512xf32>
    %139 = vector.extract_strided_slice %138 {offsets = [0, 0], sizes = [8, 128], strides = [1, 1]} : vector<8x512xf32> to vector<8x128xf32>
    %140 = arith.negf %139 : vector<8x128xf32>
    %141 = math.exp %140 : vector<8x128xf32>
    %cst_47 = arith.constant 1.000000e+00 : f32
    %142 = vector.broadcast %cst_47 : f32 to vector<8x128xf32>
    %143 = arith.addf %142, %141 : vector<8x128xf32>
    %144 = arith.divf %142, %143 : vector<8x128xf32>
    %145 = vector.extract_strided_slice %138 {offsets = [0, 128], sizes = [8, 128], strides = [1, 1]} : vector<8x512xf32> to vector<8x128xf32>
    %146 = arith.negf %145 : vector<8x128xf32>
    %147 = math.exp %146 : vector<8x128xf32>
    %cst_48 = arith.constant 1.000000e+00 : f32
    %148 = vector.broadcast %cst_48 : f32 to vector<8x128xf32>
    %149 = arith.addf %148, %147 : vector<8x128xf32>
    %150 = arith.divf %148, %149 : vector<8x128xf32>
    %151 = vector.extract_strided_slice %138 {offsets = [0, 256], sizes = [8, 128], strides = [1, 1]} : vector<8x512xf32> to vector<8x128xf32>
    %152 = math.tanh %151 : vector<8x128xf32>
    %153 = vector.extract_strided_slice %138 {offsets = [0, 384], sizes = [8, 128], strides = [1, 1]} : vector<8x512xf32> to vector<8x128xf32>
    %154 = arith.negf %153 : vector<8x128xf32>
    %155 = math.exp %154 : vector<8x128xf32>
    %cst_49 = arith.constant 1.000000e+00 : f32
    %156 = vector.broadcast %cst_49 : f32 to vector<8x128xf32>
    %157 = arith.addf %156, %155 : vector<8x128xf32>
    %158 = arith.divf %156, %157 : vector<8x128xf32>
    %159 = arith.mulf %150, %128 : vector<8x128xf32>
    %160 = arith.mulf %144, %152 : vector<8x128xf32>
    %161 = arith.addf %159, %160 : vector<8x128xf32>
    %162 = math.tanh %161 : vector<8x128xf32>
    %163 = arith.mulf %158, %162 : vector<8x128xf32>
    %164 = arith.truncf %163 : vector<8x128xf32> to vector<8x128xbf16>
    %c4_i32 = arith.constant 4 : i32
    %c8_i32_50 = arith.constant 8 : i32
    %165 = arith.muli %c4_i32, %c8_i32_50 : i32
    %166 = tpu.assume_multiple %165, 8 : i32
    %167 = arith.index_cast %166 : i32 to index
    %c0_51 = arith.constant 0 : index
    %168 = vector.load %arg13[%167, %c0_51] : memref<64x512xf32, #tpu.memory_space<vmem>>, vector<8x512xf32>
    %c0_52 = arith.constant 0 : index
    %c0_53 = arith.constant 0 : index
    %169 = vector.load %arg5[%c0_52, %c0_53] : memref<128x512xbf16, #tpu.memory_space<vmem>>, vector<128x512xbf16>
    %cst_54 = arith.constant dense<0.000000e+00> : vector<8x512xf32>
    %170 = tpu.matmul %164, %169, %cst_54 {dimension_numbers = #tpu.dot_dimension_numbers<[1], [0], [0], [1], [0, 0, 1, 1], [], []>} : vector<8x128xbf16>, vector<128x512xbf16>, vector<8x512xf32> -> vector<8x512xf32>
    %171 = arith.addf %168, %170 : vector<8x512xf32>
    %172 = vector.extract_strided_slice %171 {offsets = [0, 0], sizes = [8, 128], strides = [1, 1]} : vector<8x512xf32> to vector<8x128xf32>
    %173 = arith.negf %172 : vector<8x128xf32>
    %174 = math.exp %173 : vector<8x128xf32>
    %cst_55 = arith.constant 1.000000e+00 : f32
    %175 = vector.broadcast %cst_55 : f32 to vector<8x128xf32>
    %176 = arith.addf %175, %174 : vector<8x128xf32>
    %177 = arith.divf %175, %176 : vector<8x128xf32>
    %178 = vector.extract_strided_slice %171 {offsets = [0, 128], sizes = [8, 128], strides = [1, 1]} : vector<8x512xf32> to vector<8x128xf32>
    %179 = arith.negf %178 : vector<8x128xf32>
    %180 = math.exp %179 : vector<8x128xf32>
    %cst_56 = arith.constant 1.000000e+00 : f32
    %181 = vector.broadcast %cst_56 : f32 to vector<8x128xf32>
    %182 = arith.addf %181, %180 : vector<8x128xf32>
    %183 = arith.divf %181, %182 : vector<8x128xf32>
    %184 = vector.extract_strided_slice %171 {offsets = [0, 256], sizes = [8, 128], strides = [1, 1]} : vector<8x512xf32> to vector<8x128xf32>
    %185 = math.tanh %184 : vector<8x128xf32>
    %186 = vector.extract_strided_slice %171 {offsets = [0, 384], sizes = [8, 128], strides = [1, 1]} : vector<8x512xf32> to vector<8x128xf32>
    %187 = arith.negf %186 : vector<8x128xf32>
    %188 = math.exp %187 : vector<8x128xf32>
    %cst_57 = arith.constant 1.000000e+00 : f32
    %189 = vector.broadcast %cst_57 : f32 to vector<8x128xf32>
    %190 = arith.addf %189, %188 : vector<8x128xf32>
    %191 = arith.divf %189, %190 : vector<8x128xf32>
    %192 = arith.mulf %183, %161 : vector<8x128xf32>
    %193 = arith.mulf %177, %185 : vector<8x128xf32>
    %194 = arith.addf %192, %193 : vector<8x128xf32>
    %195 = math.tanh %194 : vector<8x128xf32>
    %196 = arith.mulf %191, %195 : vector<8x128xf32>
    %197 = arith.truncf %196 : vector<8x128xf32> to vector<8x128xbf16>
    %c5_i32 = arith.constant 5 : i32
    %c8_i32_58 = arith.constant 8 : i32
    %198 = arith.muli %c5_i32, %c8_i32_58 : i32
    %199 = tpu.assume_multiple %198, 8 : i32
    %200 = arith.index_cast %199 : i32 to index
    %c0_59 = arith.constant 0 : index
    %201 = vector.load %arg13[%200, %c0_59] : memref<64x512xf32, #tpu.memory_space<vmem>>, vector<8x512xf32>
    %c0_60 = arith.constant 0 : index
    %c0_61 = arith.constant 0 : index
    %202 = vector.load %arg5[%c0_60, %c0_61] : memref<128x512xbf16, #tpu.memory_space<vmem>>, vector<128x512xbf16>
    %cst_62 = arith.constant dense<0.000000e+00> : vector<8x512xf32>
    %203 = tpu.matmul %197, %202, %cst_62 {dimension_numbers = #tpu.dot_dimension_numbers<[1], [0], [0], [1], [0, 0, 1, 1], [], []>} : vector<8x128xbf16>, vector<128x512xbf16>, vector<8x512xf32> -> vector<8x512xf32>
    %204 = arith.addf %201, %203 : vector<8x512xf32>
    %205 = vector.extract_strided_slice %204 {offsets = [0, 0], sizes = [8, 128], strides = [1, 1]} : vector<8x512xf32> to vector<8x128xf32>
    %206 = arith.negf %205 : vector<8x128xf32>
    %207 = math.exp %206 : vector<8x128xf32>
    %cst_63 = arith.constant 1.000000e+00 : f32
    %208 = vector.broadcast %cst_63 : f32 to vector<8x128xf32>
    %209 = arith.addf %208, %207 : vector<8x128xf32>
    %210 = arith.divf %208, %209 : vector<8x128xf32>
    %211 = vector.extract_strided_slice %204 {offsets = [0, 128], sizes = [8, 128], strides = [1, 1]} : vector<8x512xf32> to vector<8x128xf32>
    %212 = arith.negf %211 : vector<8x128xf32>
    %213 = math.exp %212 : vector<8x128xf32>
    %cst_64 = arith.constant 1.000000e+00 : f32
    %214 = vector.broadcast %cst_64 : f32 to vector<8x128xf32>
    %215 = arith.addf %214, %213 : vector<8x128xf32>
    %216 = arith.divf %214, %215 : vector<8x128xf32>
    %217 = vector.extract_strided_slice %204 {offsets = [0, 256], sizes = [8, 128], strides = [1, 1]} : vector<8x512xf32> to vector<8x128xf32>
    %218 = math.tanh %217 : vector<8x128xf32>
    %219 = vector.extract_strided_slice %204 {offsets = [0, 384], sizes = [8, 128], strides = [1, 1]} : vector<8x512xf32> to vector<8x128xf32>
    %220 = arith.negf %219 : vector<8x128xf32>
    %221 = math.exp %220 : vector<8x128xf32>
    %cst_65 = arith.constant 1.000000e+00 : f32
    %222 = vector.broadcast %cst_65 : f32 to vector<8x128xf32>
    %223 = arith.addf %222, %221 : vector<8x128xf32>
    %224 = arith.divf %222, %223 : vector<8x128xf32>
    %225 = arith.mulf %216, %194 : vector<8x128xf32>
    %226 = arith.mulf %210, %218 : vector<8x128xf32>
    %227 = arith.addf %225, %226 : vector<8x128xf32>
    %228 = math.tanh %227 : vector<8x128xf32>
    %229 = arith.mulf %224, %228 : vector<8x128xf32>
    %230 = arith.truncf %229 : vector<8x128xf32> to vector<8x128xbf16>
    %c6_i32 = arith.constant 6 : i32
    %c8_i32_66 = arith.constant 8 : i32
    %231 = arith.muli %c6_i32, %c8_i32_66 : i32
    %232 = tpu.assume_multiple %231, 8 : i32
    %233 = arith.index_cast %232 : i32 to index
    %c0_67 = arith.constant 0 : index
    %234 = vector.load %arg13[%233, %c0_67] : memref<64x512xf32, #tpu.memory_space<vmem>>, vector<8x512xf32>
    %c0_68 = arith.constant 0 : index
    %c0_69 = arith.constant 0 : index
    %235 = vector.load %arg5[%c0_68, %c0_69] : memref<128x512xbf16, #tpu.memory_space<vmem>>, vector<128x512xbf16>
    %cst_70 = arith.constant dense<0.000000e+00> : vector<8x512xf32>
    %236 = tpu.matmul %230, %235, %cst_70 {dimension_numbers = #tpu.dot_dimension_numbers<[1], [0], [0], [1], [0, 0, 1, 1], [], []>} : vector<8x128xbf16>, vector<128x512xbf16>, vector<8x512xf32> -> vector<8x512xf32>
    %237 = arith.addf %234, %236 : vector<8x512xf32>
    %238 = vector.extract_strided_slice %237 {offsets = [0, 0], sizes = [8, 128], strides = [1, 1]} : vector<8x512xf32> to vector<8x128xf32>
    %239 = arith.negf %238 : vector<8x128xf32>
    %240 = math.exp %239 : vector<8x128xf32>
    %cst_71 = arith.constant 1.000000e+00 : f32
    %241 = vector.broadcast %cst_71 : f32 to vector<8x128xf32>
    %242 = arith.addf %241, %240 : vector<8x128xf32>
    %243 = arith.divf %241, %242 : vector<8x128xf32>
    %244 = vector.extract_strided_slice %237 {offsets = [0, 128], sizes = [8, 128], strides = [1, 1]} : vector<8x512xf32> to vector<8x128xf32>
    %245 = arith.negf %244 : vector<8x128xf32>
    %246 = math.exp %245 : vector<8x128xf32>
    %cst_72 = arith.constant 1.000000e+00 : f32
    %247 = vector.broadcast %cst_72 : f32 to vector<8x128xf32>
    %248 = arith.addf %247, %246 : vector<8x128xf32>
    %249 = arith.divf %247, %248 : vector<8x128xf32>
    %250 = vector.extract_strided_slice %237 {offsets = [0, 256], sizes = [8, 128], strides = [1, 1]} : vector<8x512xf32> to vector<8x128xf32>
    %251 = math.tanh %250 : vector<8x128xf32>
    %252 = vector.extract_strided_slice %237 {offsets = [0, 384], sizes = [8, 128], strides = [1, 1]} : vector<8x512xf32> to vector<8x128xf32>
    %253 = arith.negf %252 : vector<8x128xf32>
    %254 = math.exp %253 : vector<8x128xf32>
    %cst_73 = arith.constant 1.000000e+00 : f32
    %255 = vector.broadcast %cst_73 : f32 to vector<8x128xf32>
    %256 = arith.addf %255, %254 : vector<8x128xf32>
    %257 = arith.divf %255, %256 : vector<8x128xf32>
    %258 = arith.mulf %249, %227 : vector<8x128xf32>
    %259 = arith.mulf %243, %251 : vector<8x128xf32>
    %260 = arith.addf %258, %259 : vector<8x128xf32>
    %261 = math.tanh %260 : vector<8x128xf32>
    %262 = arith.mulf %257, %261 : vector<8x128xf32>
    %263 = arith.truncf %262 : vector<8x128xf32> to vector<8x128xbf16>
    %c7_i32 = arith.constant 7 : i32
    %c8_i32_74 = arith.constant 8 : i32
    %264 = arith.muli %c7_i32, %c8_i32_74 : i32
    %265 = tpu.assume_multiple %264, 8 : i32
    %266 = arith.index_cast %265 : i32 to index
    %c0_75 = arith.constant 0 : index
    %267 = vector.load %arg13[%266, %c0_75] : memref<64x512xf32, #tpu.memory_space<vmem>>, vector<8x512xf32>
    %c0_76 = arith.constant 0 : index
    %c0_77 = arith.constant 0 : index
    %268 = vector.load %arg5[%c0_76, %c0_77] : memref<128x512xbf16, #tpu.memory_space<vmem>>, vector<128x512xbf16>
    %cst_78 = arith.constant dense<0.000000e+00> : vector<8x512xf32>
    %269 = tpu.matmul %263, %268, %cst_78 {dimension_numbers = #tpu.dot_dimension_numbers<[1], [0], [0], [1], [0, 0, 1, 1], [], []>} : vector<8x128xbf16>, vector<128x512xbf16>, vector<8x512xf32> -> vector<8x512xf32>
    %270 = arith.addf %267, %269 : vector<8x512xf32>
    %271 = vector.extract_strided_slice %270 {offsets = [0, 0], sizes = [8, 128], strides = [1, 1]} : vector<8x512xf32> to vector<8x128xf32>
    %272 = arith.negf %271 : vector<8x128xf32>
    %273 = math.exp %272 : vector<8x128xf32>
    %cst_79 = arith.constant 1.000000e+00 : f32
    %274 = vector.broadcast %cst_79 : f32 to vector<8x128xf32>
    %275 = arith.addf %274, %273 : vector<8x128xf32>
    %276 = arith.divf %274, %275 : vector<8x128xf32>
    %277 = vector.extract_strided_slice %270 {offsets = [0, 128], sizes = [8, 128], strides = [1, 1]} : vector<8x512xf32> to vector<8x128xf32>
    %278 = arith.negf %277 : vector<8x128xf32>
    %279 = math.exp %278 : vector<8x128xf32>
    %cst_80 = arith.constant 1.000000e+00 : f32
    %280 = vector.broadcast %cst_80 : f32 to vector<8x128xf32>
    %281 = arith.addf %280, %279 : vector<8x128xf32>
    %282 = arith.divf %280, %281 : vector<8x128xf32>
    %283 = vector.extract_strided_slice %270 {offsets = [0, 256], sizes = [8, 128], strides = [1, 1]} : vector<8x512xf32> to vector<8x128xf32>
    %284 = math.tanh %283 : vector<8x128xf32>
    %285 = vector.extract_strided_slice %270 {offsets = [0, 384], sizes = [8, 128], strides = [1, 1]} : vector<8x512xf32> to vector<8x128xf32>
    %286 = arith.negf %285 : vector<8x128xf32>
    %287 = math.exp %286 : vector<8x128xf32>
    %cst_81 = arith.constant 1.000000e+00 : f32
    %288 = vector.broadcast %cst_81 : f32 to vector<8x128xf32>
    %289 = arith.addf %288, %287 : vector<8x128xf32>
    %290 = arith.divf %288, %289 : vector<8x128xf32>
    %291 = arith.mulf %282, %260 : vector<8x128xf32>
    %292 = arith.mulf %276, %284 : vector<8x128xf32>
    %293 = arith.addf %291, %292 : vector<8x128xf32>
    %294 = math.tanh %293 : vector<8x128xf32>
    %295 = arith.mulf %290, %294 : vector<8x128xf32>
    %296 = arith.truncf %295 : vector<8x128xf32> to vector<8x128xbf16>
    %c8_i32_82 = arith.constant 8 : i32
    %c0_83 = arith.constant 0 : index
    %c0_84 = arith.constant 0 : index
    %297 = vector.load %arg11[%c0_83, %c0_84] : memref<8x128xbf16, #tpu.memory_space<vmem>>, vector<8x128xbf16>
    tpu.vector_store %arg11[%c0_83, %c0_84], %296 {strides = array<i32>} : memref<8x128xbf16, #tpu.memory_space<vmem>>, vector<8x128xbf16>,
    %c0_85 = arith.constant 0 : index
    %c0_86 = arith.constant 0 : index
    %298 = vector.load %arg12[%c0_85, %c0_86] : memref<8x128xf32, #tpu.memory_space<vmem>>, vector<8x128xf32>
    tpu.vector_store %arg12[%c0_85, %c0_86], %293 {strides = array<i32>} : memref<8x128xf32, #tpu.memory_space<vmem>>, vector<8x128xf32>,
    %c0_i32_87 = arith.constant 0 : i32
    %299 = arith.cmpi eq, %arg1, %c0_i32_87 : i32
    %300 = arith.extui %299 : i1 to i32
    %c0_i32_88 = arith.constant 0 : i32
    %301 = arith.cmpi ne, %300, %c0_i32_88 : i32
    scf.if %301 {
      %302 = tpu.iota {dimensions = array<i32: 1>} : vector<8x128xi32>
      %c32_i32 = arith.constant 32 : i32
      %303 = vector.broadcast %c32_i32 : i32 to vector<8x128xi32>
      %304 = arith.cmpi slt, %302, %303 : vector<8x128xi32>
      %cst_89 = arith.constant 0.000000e+00 : f32
      %305 = vector.broadcast %cst_89 : f32 to vector<8x128xf32>
      %306 = arith.select %304, %293, %305 : vector<8x128xi1>, vector<8x128xf32>
      %cst_90 = arith.constant dense<0.000000e+00> : vector<8xf32>
      %307 = vector.multi_reduction <add>, %306, %cst_90 [1] : vector<8x128xf32> to vector<8xf32>
      %308 = vector.shape_cast %307 : vector<8xf32> to vector<8x1xf32>
      %cst_91 = arith.constant 3.125000e-02 : f32
      %309 = vector.broadcast %cst_91 : f32 to vector<8x1xf32>
      %310 = arith.mulf %308, %309 : vector<8x1xf32>
      %311 = vector.broadcast %310 : vector<8x1xf32> to vector<8x128xf32>
      %312 = arith.subf %293, %311 : vector<8x128xf32>
      %313 = arith.mulf %312, %312 : vector<8x128xf32>
      %cst_92 = arith.constant 0.000000e+00 : f32
      %314 = vector.broadcast %cst_92 : f32 to vector<8x128xf32>
      %315 = arith.select %304, %313, %314 : vector<8x128xi1>, vector<8x128xf32>
      %cst_93 = arith.constant dense<0.000000e+00> : vector<8xf32>
      %316 = vector.multi_reduction <add>, %315, %cst_93 [1] : vector<8x128xf32> to vector<8xf32>
      %317 = vector.shape_cast %316 : vector<8xf32> to vector<8x1xf32>
      %cst_94 = arith.constant 3.125000e-02 : f32
      %318 = vector.broadcast %cst_94 : f32 to vector<8x1xf32>
      %319 = arith.mulf %317, %318 : vector<8x1xf32>
      %cst_95 = arith.constant 9.99999974E-6 : f32
      %320 = vector.broadcast %cst_95 : f32 to vector<8x1xf32>
      %321 = arith.addf %319, %320 : vector<8x1xf32>
      %322 = math.rsqrt %321 : vector<8x1xf32>
      %323 = vector.broadcast %322 : vector<8x1xf32> to vector<8x128xf32>
      %324 = arith.mulf %312, %323 : vector<8x128xf32>
      %c0_96 = arith.constant 0 : index
      %c0_97 = arith.constant 0 : index
      %325 = vector.load %arg6[%c0_96, %c0_97] : memref<1x128xf32, #tpu.memory_space<vmem>>, vector<1x128xf32>
      %326 = vector.broadcast %325 : vector<1x128xf32> to vector<8x128xf32>
      %327 = arith.mulf %324, %326 : vector<8x128xf32>
      %c0_98 = arith.constant 0 : index
      %c0_99 = arith.constant 0 : index
      %328 = vector.load %arg7[%c0_98, %c0_99] : memref<1x128xf32, #tpu.memory_space<vmem>>, vector<1x128xf32>
      %329 = vector.broadcast %328 : vector<1x128xf32> to vector<8x128xf32>
      %330 = arith.addf %327, %329 : vector<8x128xf32>
      %c0_100 = arith.constant 0 : index
      %c0_101 = arith.constant 0 : index
      %331 = vector.load %arg8[%c0_100, %c0_101] : memref<128x5xf32, #tpu.memory_space<vmem>>, vector<128x5xf32>
      %cst_102 = arith.constant dense<0.000000e+00> : vector<8x5xf32>
      %332 = tpu.matmul %330, %331, %cst_102 {dimension_numbers = #tpu.dot_dimension_numbers<[1], [0], [0], [1], [0, 0, 1, 1], [], []>} : vector<8x128xf32>, vector<128x5xf32>, vector<8x5xf32> -> vector<8x5xf32>
      %c0_103 = arith.constant 0 : index
      %c0_104 = arith.constant 0 : index
      %333 = vector.load %arg9[%c0_103, %c0_104] : memref<1x5xf32, #tpu.memory_space<vmem>>, vector<1x5xf32>
      %334 = vector.broadcast %333 : vector<1x5xf32> to vector<8x5xf32>
      %335 = arith.addf %332, %334 : vector<8x5xf32>
      %cst_105 = arith.constant dense<0xFF800000> : vector<8xf32>
      %336 = vector.multi_reduction <maximumf>, %335, %cst_105 [1] : vector<8x5xf32> to vector<8xf32>
      %337 = vector.shape_cast %336 : vector<8xf32> to vector<8x1xf32>
      %338 = vector.broadcast %337 : vector<8x1xf32> to vector<8x5xf32>
      %339 = arith.subf %335, %338 : vector<8x5xf32>
      %340 = math.exp %339 : vector<8x5xf32>
      %cst_106 = arith.constant dense<0.000000e+00> : vector<8xf32>
      %341 = vector.multi_reduction <add>, %340, %cst_106 [1] : vector<8x5xf32> to vector<8xf32>
      %342 = vector.shape_cast %341 : vector<8xf32> to vector<8x1xf32>
      %343 = math.log %342 : vector<8x1xf32>
      %344 = vector.broadcast %343 : vector<8x1xf32> to vector<8x5xf32>
      %345 = arith.subf %339, %344 : vector<8x5xf32>
      %c0_107 = arith.constant 0 : index
      %c0_108 = arith.constant 0 : index
      %346 = vector.load %arg10[%c0_107, %c0_108] : memref<8x5xf32, #tpu.memory_space<vmem>>, vector<8x5xf32>
      tpu.vector_store %arg10[%c0_107, %c0_108], %345 {strides = array<i32>} : memref<8x5xf32, #tpu.memory_space<vmem>>, vector<8x5xf32>,
    } else {
    }
    return
  }
  func.func @transform_0(%arg0: i32, %arg1: i32) -> (i32, i32, i32) {
    %c0_i32 = arith.constant 0 : i32
    %c0_i32_0 = arith.constant 0 : i32
    return %arg0, %arg1, %c0_i32 : i32, i32, i32
  }
  func.func @transform_1(%arg0: i32, %arg1: i32) -> (i32, i32) {
    %c0_i32 = arith.constant 0 : i32
    %c0_i32_0 = arith.constant 0 : i32
    %c0_i32_1 = arith.constant 0 : i32
    return %c0_i32, %c0_i32_0 : i32, i32
  }
  func.func @transform_2(%arg0: i32, %arg1: i32) -> (i32, i32) {
    %c0_i32 = arith.constant 0 : i32
    %c0_i32_0 = arith.constant 0 : i32
    %c0_i32_1 = arith.constant 0 : i32
    return %c0_i32, %c0_i32_0 : i32, i32
  }
  func.func @transform_3(%arg0: i32, %arg1: i32) -> (i32, i32) {
    %c0_i32 = arith.constant 0 : i32
    %c0_i32_0 = arith.constant 0 : i32
    %c0_i32_1 = arith.constant 0 : i32
    return %c0_i32, %c0_i32_0 : i32, i32
  }
  func.func @transform_4(%arg0: i32, %arg1: i32) -> (i32, i32) {
    %c0_i32 = arith.constant 0 : i32
    %c0_i32_0 = arith.constant 0 : i32
    %c0_i32_1 = arith.constant 0 : i32
    return %c0_i32, %c0_i32_0 : i32, i32
  }
  func.func @transform_5(%arg0: i32, %arg1: i32) -> (i32, i32) {
    %c0_i32 = arith.constant 0 : i32
    %c0_i32_0 = arith.constant 0 : i32
    %c0_i32_1 = arith.constant 0 : i32
    return %c0_i32, %c0_i32_0 : i32, i32
  }
  func.func @transform_6(%arg0: i32, %arg1: i32) -> (i32, i32) {
    %c0_i32 = arith.constant 0 : i32
    %c0_i32_0 = arith.constant 0 : i32
    %c0_i32_1 = arith.constant 0 : i32
    return %c0_i32, %c0_i32_0 : i32, i32
  }
  func.func @transform_7(%arg0: i32, %arg1: i32) -> (i32, i32) {
    %c0_i32 = arith.constant 0 : i32
    %c0_i32_0 = arith.constant 0 : i32
    %c0_i32_1 = arith.constant 0 : i32
    return %c0_i32, %c0_i32_0 : i32, i32
  }
  func.func @transform_8(%arg0: i32, %arg1: i32) -> (i32, i32) {
    %c0_i32 = arith.constant 0 : i32
    %c0_i32_0 = arith.constant 0 : i32
    return %arg0, %c0_i32 : i32, i32
  }
}

</mosaic_0001>

<llo_original>
// kernel: tpu_custom_call.1
$region0: #{tpu_custom_call.1}
  #allocation0 [shape = 'u32[]', space=smem, size = 0x4, offset = 0x4, fixed_abs, tag = 'smem constant byte address 0x4 - core index']
  #allocation1 [shape = 'u32[72,128]{1,0:T(1,128)}', space=vmem, size = 0x9000, scoped, tag = 'internal scratch']
  #allocation2 [shape = 'bf16[8,128]{1,0:T(8,128)(2,1)}', space=vmem, size = 0x800, scoped, tag = 'scratch operand']
  #allocation3 [shape = 'f32[8,128]{1,0:T(8,128)}', space=vmem, size = 0x1000, scoped, tag = 'scratch operand']
  #allocation4 [shape = 'f32[64,512]{1,0:T(8,128)}', space=vmem, size = 0x20000, scoped, tag = 'scratch operand']
  %s0 = inlined_call_operand.vmem [shape: bf16[1,64,4], index: 0, kind: input, shape index: {}]
  %s1 = inlined_call_operand.vmem [shape: bf16[4,512], index: 1, kind: input, shape index: {}]
  %s2 = inlined_call_operand.vmem [shape: f32[1,512], index: 2, kind: input, shape index: {}]
  %s3 = inlined_call_operand.hbm [shape: bf16[128,512], index: 3, kind: input, shape index: {}]
  %s4 = inlined_call_operand.vmem [shape: f32[1,128], index: 4, kind: input, shape index: {}]
  %s5 = inlined_call_operand.vmem [shape: f32[1,128], index: 5, kind: input, shape index: {}]
  %s6 = inlined_call_operand.vmem [shape: f32[128,5], index: 6, kind: input, shape index: {}]
  %s7 = inlined_call_operand.vmem [shape: f32[1,5], index: 7, kind: input, shape index: {}]
  %s8 = inlined_call_operand.hbm [shape: f32[8,5], index: 8, kind: output, shape index: {}]
  %s9 = sld [smem:[#allocation0]]
  $region54: #{tpu_custom_call.1} parent=0
    _
  %s11 = ssub.s32 1, %s9
  %s12 = scalar_select 0, %s11, %s9
  $region1: #{tpu_custom_call.1} parent=0
    #allocation5 [shape = 'u8[131072]{0}', space=vmem, size = 0x20000, scoped, tag = 'input window, operand 3, single buffered']
    #allocation6 [shape = 's32[1]{0}', space=sflag, size = 0x4, scoped, tag = 'scoped memory for tpu_custom_call.1']
    #allocation7 [shape = 's32[1]{0}', space=sflag, size = 0x4, scoped, tag = 'scoped memory for tpu_custom_call.1']
    #allocation8 [shape = 'u8[4096]{0}', space=vmem, size = 0x1000, scoped, tag = 'output window, operand 0, single buffered']
    %13 = vsyncpa [#allocation6], 0
    %14 = vsyncpa [#allocation7], 0
    // Predicated region
    $region2: #{tpu_custom_call.1} parent=1 // pred_check
      _
    $region3: #{tpu_custom_call.1} parent=1 // pred_check_branch
      %16 = sbr.rel (0) target = $region5
    $region4: #{tpu_custom_call.1} parent=1 // pred_region
      _
    $region5: #{tpu_custom_call.1} parent=1 // pred_fallthru
      _
    // Predicated region
    $region6: #{tpu_custom_call.1} parent=1 // pred_check
      _
    $region7: #{tpu_custom_call.1} parent=1 // pred_check_branch
      %18 = sbr.rel (0) target = $region9
    $region8: #{tpu_custom_call.1} parent=1 // pred_region
      _
    $region9: #{tpu_custom_call.1} parent=1 // pred_fallthru
      _
    // Predicated region
    $region10: #{tpu_custom_call.1} parent=1 // pred_check
      _
    $region11: #{tpu_custom_call.1} parent=1 // pred_check_branch
      %20 = sbr.rel (0) target = $region13
    $region12: #{tpu_custom_call.1} parent=1 // pred_region
      _
    $region13: #{tpu_custom_call.1} parent=1 // pred_fallthru
      _
    // Predicated region
    $region14: #{tpu_custom_call.1} parent=1 // pred_check
      _
    $region15: #{tpu_custom_call.1} parent=1 // pred_check_branch
      %22 = sbr.rel (0) target = $region17
    $region16: #{tpu_custom_call.1} parent=1 // pred_region
      %24 = vsyncadd [#allocation6], 0
      %s25 = sshll.u32 %s3, 4
      %s26 = int_to_ptr.hbm [resolvable:$true] %s25
      %s27 = sshll.u32 [#allocation5], 4
      %s28 = int_to_ptr.vmem [resolvable:$true] %s27
      %33 = dma.hbm_to_vmem [thread:$0]  %s26, 4096, %s28, [#allocation6], 256, 256, 16
    $region17: #{tpu_custom_call.1} parent=1 // pred_fallthru
      _
    // Predicated region
    $region18: #{tpu_custom_call.1} parent=1 // pred_check
      _
    $region19: #{tpu_custom_call.1} parent=1 // pred_check_branch
      %35 = sbr.rel (0) target = $region21
    $region20: #{tpu_custom_call.1} parent=1 // pred_region
      _
    $region21: #{tpu_custom_call.1} parent=1 // pred_fallthru
      _
    // Predicated region
    $region22: #{tpu_custom_call.1} parent=1 // pred_check
      _
    $region23: #{tpu_custom_call.1} parent=1 // pred_check_branch
      %37 = sbr.rel (0) target = $region25
    $region24: #{tpu_custom_call.1} parent=1 // pred_region
      _
    $region25: #{tpu_custom_call.1} parent=1 // pred_fallthru
      _
    // Predicated region
    $region26: #{tpu_custom_call.1} parent=1 // pred_check
      _
    $region27: #{tpu_custom_call.1} parent=1 // pred_check_branch
      %39 = sbr.rel (0) target = $region29
    $region28: #{tpu_custom_call.1} parent=1 // pred_region
      _
    $region29: #{tpu_custom_call.1} parent=1 // pred_fallthru
      _
    // Predicated region
    $region30: #{tpu_custom_call.1} parent=1 // pred_check
      _
    $region31: #{tpu_custom_call.1} parent=1 // pred_check_branch
      %41 = sbr.rel (0) target = $region33
    $region32: #{tpu_custom_call.1} parent=1 // pred_region
      _
    $region33: #{tpu_custom_call.1} parent=1 // pred_fallthru
      _
    // Predicated region
    $region34: #{tpu_custom_call.1} parent=1 // pred_check
      _
    $region35: #{tpu_custom_call.1} parent=1 // pred_check_branch
      %43 = sbr.rel (0) target = $region37
    $region36: #{tpu_custom_call.1} parent=1 // pred_region
      %45 = dma.done [#allocation6], 4096
    $region37: #{tpu_custom_call.1} parent=1 // pred_fallthru
      _
    %p47 = scmp.eq.s32.totalorder 0, 0
    // Predicated region
    $region38: #{tpu_custom_call.1} parent=1 // pred_check
      %p48 = pneg %p47
    $region39: #{tpu_custom_call.1} parent=1 // pred_check_branch
      %50 = sbr.rel (%p48) target = $region41
    $region40: #{tpu_custom_call.1} parent=1 // pred_region
      %51 = vst [vmem:[#allocation2] sm:$0xf] 0
      %52 = vst [vmem:[#allocation3] sm:$0xff] 0.0
    $region41: #{tpu_custom_call.1} parent=1 // pred_fallthru
      _
    %v53 = vld [vmem:[%s0] sm:$0xf]
    %v54 = vld [vmem:[%s0 + $0x4] sm:$0xf]
    %v55 = vld [vmem:[%s0 + $0x8] sm:$0xf]
    %v56 = vld [vmem:[%s0 + $0xc] sm:$0xf]
    %v57 = vld [vmem:[%s0 + $0x10] sm:$0xf]
    %v58 = vld [vmem:[%s0 + $0x14] sm:$0xf]
    %v59 = vld [vmem:[%s0 + $0x18] sm:$0xf]
    %v60 = vld [vmem:[%s0 + $0x1c] sm:$0xf]
    %v61 = vunpack.c.l.bf16 %v53
    %v62 = vunpack.c.l.bf16 %v54
    %v63 = vunpack.c.l.bf16 %v55
    %v64 = vunpack.c.l.bf16 %v56
    %v65 = vunpack.c.l.bf16 %v57
    %v66 = vunpack.c.l.bf16 %v58
    %v67 = vunpack.c.l.bf16 %v59
    %v68 = vunpack.c.l.bf16 %v60
    %vm69 = vcmask 31744
    %v70 = vsel %vm69, %v61, 0.0
    %71 = vadd.xlane.f32.xlu0 %v70
    %v72 = vpop.xlane.xlu0 %71
    %v73 = vsel %vm69, %v62, 0.0
    %74 = vadd.xlane.f32.xlu0 %v73
    %v75 = vpop.xlane.xlu0 %74
    %v76 = vsel %vm69, %v63, 0.0
    %77 = vadd.xlane.f32.xlu0 %v76
    %v78 = vpop.xlane.xlu0 %77
    %v79 = vsel %vm69, %v64, 0.0
    %80 = vadd.xlane.f32.xlu0 %v79
    %v81 = vpop.xlane.xlu0 %80
    %v82 = vsel %vm69, %v65, 0.0
    %83 = vadd.xlane.f32.xlu0 %v82
    %v84 = vpop.xlane.xlu0 %83
    %v85 = vsel %vm69, %v66, 0.0
    %86 = vadd.xlane.f32.xlu0 %v85
    %v87 = vpop.xlane.xlu0 %86
    %v88 = vsel %vm69, %v67, 0.0
    %89 = vadd.xlane.f32.xlu0 %v88
    %v90 = vpop.xlane.xlu0 %89
    %v91 = vsel %vm69, %v68, 0.0
    %92 = vadd.xlane.f32.xlu0 %v91
    %v93 = vpop.xlane.xlu0 %92
    %v94 = vrcp.pop 4.0
    %v95 = vmul.f32 4.0, %v94
    %v96 = vsub.f32 1.0, %v95
    %v97 = vmul.f32 %v94, %v96
    %v98 = vadd.f32 %v94, %v97
    %vm99 = vweird.f32 %v94
    %v100 = vsel %vm99, %v94, %v98
    %v101 = vmul.f32 %v72, %v100
    %v102 = vmul.f32 %v75, %v100
    %v103 = vmul.f32 %v78, %v100
    %v104 = vmul.f32 %v81, %v100
    %v105 = vmul.f32 %v84, %v100
    %v106 = vmul.f32 %v87, %v100
    %v107 = vmul.f32 %v90, %v100
    %v108 = vmul.f32 %v93, %v100
    %v109 = vsub.f32 %v61, %v101
    %v110 = vsub.f32 %v62, %v102
    %v111 = vsub.f32 %v63, %v103
    %v112 = vsub.f32 %v64, %v104
    %v113 = vsub.f32 %v65, %v105
    %v114 = vsub.f32 %v66, %v106
    %v115 = vsub.f32 %v67, %v107
    %v116 = vsub.f32 %v68, %v108
    %v117 = vmul.f32 %v109, %v109
    %v118 = vmul.f32 %v110, %v110
    %v119 = vmul.f32 %v111, %v111
    %v120 = vmul.f32 %v112, %v112
    %v121 = vmul.f32 %v113, %v113
    %v122 = vmul.f32 %v114, %v114
    %v123 = vmul.f32 %v115, %v115
    %v124 = vmul.f32 %v116, %v116
    %v125 = vsel %vm69, %v117, 0.0
    %126 = vadd.xlane.f32.xlu0 %v125
    %v127 = vpop.xlane.xlu0 %126
    %v128 = vsel %vm69, %v118, 0.0
    %129 = vadd.xlane.f32.xlu0 %v128
    %v130 = vpop.xlane.xlu0 %129
    %v131 = vsel %vm69, %v119, 0.0
    %132 = vadd.xlane.f32.xlu0 %v131
    %v133 = vpop.xlane.xlu0 %132
    %v134 = vsel %vm69, %v120, 0.0
    %135 = vadd.xlane.f32.xlu0 %v134
    %v136 = vpop.xlane.xlu0 %135
    %v137 = vsel %vm69, %v121, 0.0
    %138 = vadd.xlane.f32.xlu0 %v137
    %v139 = vpop.xlane.xlu0 %138
    %v140 = vsel %vm69, %v122, 0.0
    %141 = vadd.xlane.f32.xlu0 %v140
    %v142 = vpop.xlane.xlu0 %141
    %v143 = vsel %vm69, %v123, 0.0
    %144 = vadd.xlane.f32.xlu0 %v143
    %v145 = vpop.xlane.xlu0 %144
    %v146 = vsel %vm69, %v124, 0.0
    %147 = vadd.xlane.f32.xlu0 %v146
    %v148 = vpop.xlane.xlu0 %147
    %v149 = vmul.f32 %v127, %v100
    %v150 = vmul.f32 %v130, %v100
    %v151 = vmul.f32 %v133, %v100
    %v152 = vmul.f32 %v136, %v100
    %v153 = vmul.f32 %v139, %v100
    %v154 = vmul.f32 %v142, %v100
    %v155 = vmul.f32 %v145, %v100
    %v156 = vmul.f32 %v148, %v100
    %v157 = vadd.f32 %v149, 1e-05
    %v158 = vadd.f32 %v150, 1e-05
    %v159 = vadd.f32 %v151, 1e-05
    %v160 = vadd.f32 %v152, 1e-05
    %v161 = vadd.f32 %v153, 1e-05
    %v162 = vadd.f32 %v154, 1e-05
    %v163 = vadd.f32 %v155, 1e-05
    %v164 = vadd.f32 %v156, 1e-05
    %v165 = vrsqrt.pop %v157
    %v166 = vmul.f32 %v165, %v157
    %v167 = vmul.f32 %v166, %v165
    %v168 = vmul.f32 0.5, %v167
    %v169 = vsub.f32 1.5, %v168
    %v170 = vmul.f32 %v165, %v169
    %vm171 = vweird.f32 %v157
    %vm172 = vweird.f32 %v165
    %vm173 = vmor %vm171, %vm172
    %v174 = vsel %vm173, %v165, %v170
    %v175 = vrsqrt.pop %v158
    %v176 = vmul.f32 %v175, %v158
    %v177 = vmul.f32 %v176, %v175
    %v178 = vmul.f32 0.5, %v177
    %v179 = vsub.f32 1.5, %v178
    %v180 = vmul.f32 %v175, %v179
    %vm181 = vweird.f32 %v158
    %vm182 = vweird.f32 %v175
    %vm183 = vmor %vm181, %vm182
    %v184 = vsel %vm183, %v175, %v180
    %v185 = vrsqrt.pop %v159
    %v186 = vmul.f32 %v185, %v159
    %v187 = vmul.f32 %v186, %v185
    %v188 = vmul.f32 0.5, %v187
    %v189 = vsub.f32 1.5, %v188
    %v190 = vmul.f32 %v185, %v189
    %vm191 = vweird.f32 %v159
    %vm192 = vweird.f32 %v185
    %vm193 = vmor %vm191, %vm192
    %v194 = vsel %vm193, %v185, %v190
    %v195 = vrsqrt.pop %v160
    %v196 = vmul.f32 %v195, %v160
    %v197 = vmul.f32 %v196, %v195
    %v198 = vmul.f32 0.5, %v197
    %v199 = vsub.f32 1.5, %v198
    %v200 = vmul.f32 %v195, %v199
    %vm201 = vweird.f32 %v160
    %vm202 = vweird.f32 %v195
    %vm203 = vmor %vm201, %vm202
    %v204 = vsel %vm203, %v195, %v200
    %v205 = vrsqrt.pop %v161
    %v206 = vmul.f32 %v205, %v161
    %v207 = vmul.f32 %v206, %v205
    %v208 = vmul.f32 0.5, %v207
    %v209 = vsub.f32 1.5, %v208
    %v210 = vmul.f32 %v205, %v209
    %vm211 = vweird.f32 %v161
    %vm212 = vweird.f32 %v205
    %vm213 = vmor %vm211, %vm212
    %v214 = vsel %vm213, %v205, %v210
    %v215 = vrsqrt.pop %v162
    %v216 = vmul.f32 %v215, %v162
    %v217 = vmul.f32 %v216, %v215
    %v218 = vmul.f32 0.5, %v217
    %v219 = vsub.f32 1.5, %v218
    %v220 = vmul.f32 %v215, %v219
    %vm221 = vweird.f32 %v162
    %vm222 = vweird.f32 %v215
    %vm223 = vmor %vm221, %vm222
    %v224 = vsel %vm223, %v215, %v220
    %v225 = vrsqrt.pop %v163
    %v226 = vmul.f32 %v225, %v163
    %v227 = vmul.f32 %v226, %v225
    %v228 = vmul.f32 0.5, %v227
    %v229 = vsub.f32 1.5, %v228
    %v230 = vmul.f32 %v225, %v229
    %vm231 = vweird.f32 %v163
    %vm232 = vweird.f32 %v225
    %vm233 = vmor %vm231, %vm232
    %v234 = vsel %vm233, %v225, %v230
    %v235 = vrsqrt.pop %v164
    %v236 = vmul.f32 %v235, %v164
    %v237 = vmul.f32 %v236, %v235
    %v238 = vmul.f32 0.5, %v237
    %v239 = vsub.f32 1.5, %v238
    %v240 = vmul.f32 %v235, %v239
    %vm241 = vweird.f32 %v164
    %vm242 = vweird.f32 %v235
    %vm243 = vmor %vm241, %vm242
    %v244 = vsel %vm243, %v235, %v240
    %v245 = vmul.f32 %v109, %v174
    %v246 = vmul.f32 %v110, %v184
    %v247 = vmul.f32 %v111, %v194
    %v248 = vmul.f32 %v112, %v204
    %v249 = vmul.f32 %v113, %v214
    %v250 = vmul.f32 %v114, %v224
    %v251 = vmul.f32 %v115, %v234
    %v252 = vmul.f32 %v116, %v244
    %v253 = vld [vmem:[%s1] sm:$0xff]
    %v254 = vpack.c.bf16 %v246, %v245
    %v255 = vpack.c.bf16 %v248, %v247
    %v256 = vpack.c.bf16 %v250, %v249
    %v257 = vpack.c.bf16 %v252, %v251
    %v258 = vld [vmem:[%s2] sm:$0xf]
    %v260 = vperm.slane %v258, 0
    %v261 = vperm.slane %v258, 1
    %v262 = vperm.slane %v258, 2
    %v263 = vperm.slane %v258, 3
    %269 = vst [vmem:[#allocation1] ss:$4 sm:$0xff] %v253
    %v270 = vld.sshfl [vmem:[#allocation1] sm:$0xff pattern:$0x73625140]
    %v271 = vld.sshfl [vmem:[#allocation1 + $0x8] sm:$0xff pattern:$0x73625140]
    %v272 = vld.sshfl [vmem:[#allocation1 + $0x10] sm:$0xff pattern:$0x73625140]
    %v273 = vld.sshfl [vmem:[#allocation1 + $0x18] sm:$0xff pattern:$0x73625140]
    %v275 = vsel %vm69, %v254, 0
    %v278 = vsel %vm69, %v255, 0
    %v281 = vsel %vm69, %v256, 0
    %v284 = vsel %vm69, %v257, 0
    %vm286 = vcmask 1041408
    %v287 = vsel %vm286, %v270, 0
    %v289 = vsel %vm286, %v271, 0
    %v291 = vsel %vm286, %v272, 0
    %v293 = vsel %vm286, %v273, 0
    %295 = vmatpush.bf16.msra.mxu0 0
    %296 = vmatpush.bf16.msra.mxu0 0
    %297 = vmatpush.bf16.msra.mxu0 0
    %298 = vmatpush.bf16.msra.mxu0 0
    %299 = vmatpush.bf16.msra.mxu0 0
    %300 = vmatpush.bf16.msra.mxu0 0
    %301 = vmatpush.bf16.msra.mxu0 0
    %302 = vmatpush.bf16.msra.mxu0 %v287
    %303 = vmatmul.bf16.gmra.mxu0 %v275
    %v304 = vpop.f32.mrf.mxu0
    %v305 = vadd.f32 %v260, %v304
    %v306 = vpop.f32.mrf.mxu0
    %v307 = vadd.f32 %v260, %v306
    %308 = vmatmul.bf16.gmra.mxu0 %v278
    %v309 = vpop.f32.mrf.mxu0
    %v310 = vadd.f32 %v260, %v309
    %v311 = vpop.f32.mrf.mxu0
    %v312 = vadd.f32 %v260, %v311
    %313 = vmatmul.bf16.gmra.mxu0 %v281
    %v314 = vpop.f32.mrf.mxu0
    %v315 = vadd.f32 %v260, %v314
    %v316 = vpop.f32.mrf.mxu0
    %v317 = vadd.f32 %v260, %v316
    %318 = vmatmul.bf16.gmra.mxu0 %v284
    %v319 = vpop.f32.mrf.mxu0
    %v320 = vadd.f32 %v260, %v319
    %v321 = vpop.f32.mrf.mxu0
    %v322 = vadd.f32 %v260, %v321
    %323 = vdwg.mxu0
    %324 = vmatpush.bf16.msra.mxu0 0
    %325 = vmatpush.bf16.msra.mxu0 0
    %326 = vmatpush.bf16.msra.mxu0 0
    %327 = vmatpush.bf16.msra.mxu0 0
    %328 = vmatpush.bf16.msra.mxu0 0
    %329 = vmatpush.bf16.msra.mxu0 0
    %330 = vmatpush.bf16.msra.mxu0 0
    %331 = vmatpush.bf16.msra.mxu0 %v289
    %332 = vmatmul.bf16.gmra.mxu0 %v275
    %v333 = vpop.f32.mrf.mxu0
    %v334 = vadd.f32 %v261, %v333
    %v335 = vpop.f32.mrf.mxu0
    %v336 = vadd.f32 %v261, %v335
    %337 = vmatmul.bf16.gmra.mxu0 %v278
    %v338 = vpop.f32.mrf.mxu0
    %v339 = vadd.f32 %v261, %v338
    %v340 = vpop.f32.mrf.mxu0
    %v341 = vadd.f32 %v261, %v340
    %342 = vmatmul.bf16.gmra.mxu0 %v281
    %v343 = vpop.f32.mrf.mxu0
    %v344 = vadd.f32 %v261, %v343
    %v345 = vpop.f32.mrf.mxu0
    %v346 = vadd.f32 %v261, %v345
    %347 = vmatmul.bf16.gmra.mxu0 %v284
    %v348 = vpop.f32.mrf.mxu0
    %v349 = vadd.f32 %v261, %v348
    %v350 = vpop.f32.mrf.mxu0
    %v351 = vadd.f32 %v261, %v350
    %352 = vdwg.mxu0
    %353 = vmatpush.bf16.msra.mxu0 0
    %354 = vmatpush.bf16.msra.mxu0 0
    %355 = vmatpush.bf16.msra.mxu0 0
    %356 = vmatpush.bf16.msra.mxu0 0
    %357 = vmatpush.bf16.msra.mxu0 0
    %358 = vmatpush.bf16.msra.mxu0 0
    %359 = vmatpush.bf16.msra.mxu0 0
    %360 = vmatpush.bf16.msra.mxu0 %v291
    %361 = vmatmul.bf16.gmra.mxu0 %v275
    %v362 = vpop.f32.mrf.mxu0
    %v363 = vadd.f32 %v262, %v362
    %v364 = vpop.f32.mrf.mxu0
    %v365 = vadd.f32 %v262, %v364
    %366 = vmatmul.bf16.gmra.mxu0 %v278
    %v367 = vpop.f32.mrf.mxu0
    %v368 = vadd.f32 %v262, %v367
    %v369 = vpop.f32.mrf.mxu0
    %v370 = vadd.f32 %v262, %v369
    %371 = vmatmul.bf16.gmra.mxu0 %v281
    %v372 = vpop.f32.mrf.mxu0
    %v373 = vadd.f32 %v262, %v372
    %v374 = vpop.f32.mrf.mxu0
    %v375 = vadd.f32 %v262, %v374
    %376 = vmatmul.bf16.gmra.mxu0 %v284
    %v377 = vpop.f32.mrf.mxu0
    %v378 = vadd.f32 %v262, %v377
    %v379 = vpop.f32.mrf.mxu0
    %v380 = vadd.f32 %v262, %v379
    %381 = vdwg.mxu0
    %382 = vmatpush.bf16.msra.mxu0 0
    %383 = vmatpush.bf16.msra.mxu0 0
    %384 = vmatpush.bf16.msra.mxu0 0
    %385 = vmatpush.bf16.msra.mxu0 0
    %386 = vmatpush.bf16.msra.mxu0 0
    %387 = vmatpush.bf16.msra.mxu0 0
    %388 = vmatpush.bf16.msra.mxu0 0
    %389 = vmatpush.bf16.msra.mxu0 %v293
    %390 = vmatmul.bf16.gmra.mxu0 %v275
    %v391 = vpop.f32.mrf.mxu0
    %v392 = vadd.f32 %v263, %v391
    %v393 = vpop.f32.mrf.mxu0
    %v394 = vadd.f32 %v263, %v393
    %395 = vmatmul.bf16.gmra.mxu0 %v278
    %v396 = vpop.f32.mrf.mxu0
    %v397 = vadd.f32 %v263, %v396
    %v398 = vpop.f32.mrf.mxu0
    %v399 = vadd.f32 %v263, %v398
    %400 = vmatmul.bf16.gmra.mxu0 %v281
    %v401 = vpop.f32.mrf.mxu0
    %v402 = vadd.f32 %v263, %v401
    %v403 = vpop.f32.mrf.mxu0
    %v404 = vadd.f32 %v263, %v403
    %405 = vmatmul.bf16.gmra.mxu0 %v284
    %v406 = vpop.f32.mrf.mxu0
    %v407 = vadd.f32 %v263, %v406
    %v408 = vpop.f32.mrf.mxu0
    %v409 = vadd.f32 %v263, %v408
    %410 = vdwg.mxu0
    %411 = vst [vmem:[#allocation4] sm:$0xff] %v305
    %412 = vst [vmem:[#allocation4 + $0x8] sm:$0xff] %v334
    %413 = vst [vmem:[#allocation4 + $0x10] sm:$0xff] %v363
    %414 = vst [vmem:[#allocation4 + $0x18] sm:$0xff] %v392
    %415 = vst [vmem:[#allocation4 + $0x20] sm:$0xff] %v307
    %416 = vst [vmem:[#allocation4 + $0x28] sm:$0xff] %v336
    %417 = vst [vmem:[#allocation4 + $0x30] sm:$0xff] %v365
    %418 = vst [vmem:[#allocation4 + $0x38] sm:$0xff] %v394
    %419 = vst [vmem:[#allocation4 + $0x40] sm:$0xff] %v310
    %420 = vst [vmem:[#allocation4 + $0x48] sm:$0xff] %v339
    %421 = vst [vmem:[#allocation4 + $0x50] sm:$0xff] %v368
    %422 = vst [vmem:[#allocation4 + $0x58] sm:$0xff] %v397
    %423 = vst [vmem:[#allocation4 + $0x60] sm:$0xff] %v312
    %424 = vst [vmem:[#allocation4 + $0x68] sm:$0xff] %v341
    %425 = vst [vmem:[#allocation4 + $0x70] sm:$0xff] %v370
    %426 = vst [vmem:[#allocation4 + $0x78] sm:$0xff] %v399
    %427 = vst [vmem:[#allocation4 + $0x80] sm:$0xff] %v315
    %428 = vst [vmem:[#allocation4 + $0x88] sm:$0xff] %v344
    %429 = vst [vmem:[#allocation4 + $0x90] sm:$0xff] %v373
    %430 = vst [vmem:[#allocation4 + $0x98] sm:$0xff] %v402
    %431 = vst [vmem:[#allocation4 + $0xa0] sm:$0xff] %v317
    %432 = vst [vmem:[#allocation4 + $0xa8] sm:$0xff] %v346
    %433 = vst [vmem:[#allocation4 + $0xb0] sm:$0xff] %v375
    %434 = vst [vmem:[#allocation4 + $0xb8] sm:$0xff] %v404
    %435 = vst [vmem:[#allocation4 + $0xc0] sm:$0xff] %v320
    %436 = vst [vmem:[#allocation4 + $0xc8] sm:$0xff] %v349
    %437 = vst [vmem:[#allocation4 + $0xd0] sm:$0xff] %v378
    %438 = vst [vmem:[#allocation4 + $0xd8] sm:$0xff] %v407
    %439 = vst [vmem:[#allocation4 + $0xe0] sm:$0xff] %v322
    %440 = vst [vmem:[#allocation4 + $0xe8] sm:$0xff] %v351
    %441 = vst [vmem:[#allocation4 + $0xf0] sm:$0xff] %v380
    %442 = vst [vmem:[#allocation4 + $0xf8] sm:$0xff] %v409
    %v443 = vld [vmem:[#allocation2] sm:$0xf]
    %v444 = vld [vmem:[#allocation3] sm:$0xff]
    %s445 = smul.u32 0, 4
    %s446 = smul.addr %s445, 8
    %s447 = scalar_lea.vmem [#allocation4], %s446
    %v448 = vld [vmem:[%s447] sm:$0xff]
    %v449 = vld [vmem:[%s447 + $0x8] sm:$0xff]
    %v450 = vld [vmem:[%s447 + $0x10] sm:$0xff]
    %v451 = vld [vmem:[%s447 + $0x18] sm:$0xff]
    %v452 = vld [vmem:[#allocation5] sm:$0xff]
    %v453 = vld [vmem:[#allocation5 + $0x8] sm:$0xff]
    %v454 = vld [vmem:[#allocation5 + $0x10] sm:$0xff]
    %v455 = vld [vmem:[#allocation5 + $0x18] sm:$0xff]
    %v456 = vld [vmem:[#allocation5 + $0x20] sm:$0xff]
    %v457 = vld [vmem:[#allocation5 + $0x28] sm:$0xff]
    %v458 = vld [vmem:[#allocation5 + $0x30] sm:$0xff]
    %v459 = vld [vmem:[#allocation5 + $0x38] sm:$0xff]
    %v460 = vld [vmem:[#allocation5 + $0x40] sm:$0xff]
    %v461 = vld [vmem:[#allocation5 + $0x48] sm:$0xff]
    %v462 = vld [vmem:[#allocation5 + $0x50] sm:$0xff]
    %v463 = vld [vmem:[#allocation5 + $0x58] sm:$0xff]
    %v464 = vld [vmem:[#allocation5 + $0x60] sm:$0xff]
    %v465 = vld [vmem:[#allocation5 + $0x68] sm:$0xff]
    %v466 = vld [vmem:[#allocation5 + $0x70] sm:$0xff]
    %v467 = vld [vmem:[#allocation5 + $0x78] sm:$0xff]
    %v468 = vld [vmem:[#allocation5 + $0x80] sm:$0xff]
    %v469 = vld [vmem:[#allocation5 + $0x88] sm:$0xff]
    %v470 = vld [vmem:[#allocation5 + $0x90] sm:$0xff]
    %v471 = vld [vmem:[#allocation5 + $0x98] sm:$0xff]
    %v472 = vld [vmem:[#allocation5 + $0xa0] sm:$0xff]
    %v473 = vld [vmem:[#allocation5 + $0xa8] sm:$0xff]
    %v474 = vld [vmem:[#allocation5 + $0xb0] sm:$0xff]
    %v475 = vld [vmem:[#allocation5 + $0xb8] sm:$0xff]
    %v476 = vld [vmem:[#allocation5 + $0xc0] sm:$0xff]
    %v477 = vld [vmem:[#allocation5 + $0xc8] sm:$0xff]
    %v478 = vld [vmem:[#allocation5 + $0xd0] sm:$0xff]
    %v479 = vld [vmem:[#allocation5 + $0xd8] sm:$0xff]
    %v480 = vld [vmem:[#allocation5 + $0xe0] sm:$0xff]
    %v481 = vld [vmem:[#allocation5 + $0xe8] sm:$0xff]
    %v482 = vld [vmem:[#allocation5 + $0xf0] sm:$0xff]
    %v483 = vld [vmem:[#allocation5 + $0xf8] sm:$0xff]
    %v516 = vunpack.c.l.b16 %v452
    %v517 = vunpack.c.h.b16 %v452
    %v518 = vunpack.c.l.b16 %v453
    %v519 = vunpack.c.h.b16 %v453
    %v520 = vunpack.c.l.b16 %v454
    %v521 = vunpack.c.h.b16 %v454
    %v522 = vunpack.c.l.b16 %v455
    %v523 = vunpack.c.h.b16 %v455
    %v524 = vunpack.c.l.b16 %v456
    %v525 = vunpack.c.h.b16 %v456
    %v526 = vunpack.c.l.b16 %v457
    %v527 = vunpack.c.h.b16 %v457
    %v528 = vunpack.c.l.b16 %v458
    %v529 = vunpack.c.h.b16 %v458
    %v530 = vunpack.c.l.b16 %v459
    %v531 = vunpack.c.h.b16 %v459
    %v532 = vunpack.c.l.b16 %v460
    %v533 = vunpack.c.h.b16 %v460
    %v534 = vunpack.c.l.b16 %v461
    %v535 = vunpack.c.h.b16 %v461
    %v536 = vunpack.c.l.b16 %v462
    %v537 = vunpack.c.h.b16 %v462
    %v538 = vunpack.c.l.b16 %v463
    %v539 = vunpack.c.h.b16 %v463
    %v540 = vunpack.c.l.b16 %v464
    %v541 = vunpack.c.h.b16 %v464
    %v542 = vunpack.c.l.b16 %v465
    %v543 = vunpack.c.h.b16 %v465
    %v544 = vunpack.c.l.b16 %v466
    %v545 = vunpack.c.h.b16 %v466
    %v546 = vunpack.c.l.b16 %v467
    %v547 = vunpack.c.h.b16 %v467
    %v548 = vunpack.c.l.b16 %v468
    %v549 = vunpack.c.h.b16 %v468
    %v550 = vunpack.c.l.b16 %v469
    %v551 = vunpack.c.h.b16 %v469
    %v552 = vunpack.c.l.b16 %v470
    %v553 = vunpack.c.h.b16 %v470
    %v554 = vunpack.c.l.b16 %v471
    %v555 = vunpack.c.h.b16 %v471
    %v556 = vunpack.c.l.b16 %v472
    %v557 = vunpack.c.h.b16 %v472
    %v558 = vunpack.c.l.b16 %v473
    %v559 = vunpack.c.h.b16 %v473
    %v560 = vunpack.c.l.b16 %v474
    %v561 = vunpack.c.h.b16 %v474
    %v562 = vunpack.c.l.b16 %v475
    %v563 = vunpack.c.h.b16 %v475
    %v564 = vunpack.c.l.b16 %v476
    %v565 = vunpack.c.h.b16 %v476
    %v566 = vunpack.c.l.b16 %v477
    %v567 = vunpack.c.h.b16 %v477
    %v568 = vunpack.c.l.b16 %v478
    %v569 = vunpack.c.h.b16 %v478
    %v570 = vunpack.c.l.b16 %v479
    %v571 = vunpack.c.h.b16 %v479
    %v572 = vunpack.c.l.b16 %v480
    %v573 = vunpack.c.h.b16 %v480
    %v574 = vunpack.c.l.b16 %v481
    %v575 = vunpack.c.h.b16 %v481
    %v576 = vunpack.c.l.b16 %v482
    %v577 = vunpack.c.h.b16 %v482
    %v578 = vunpack.c.l.b16 %v483
    %v579 = vunpack.c.h.b16 %v483
    %v580 = vpack.c.b16 %v520, %v516
    %v581 = vpack.c.b16 %v521, %v517
    %v582 = vpack.c.b16 %v522, %v518
    %v583 = vpack.c.b16 %v523, %v519
    %v584 = vpack.c.b16 %v528, %v524
    %v585 = vpack.c.b16 %v529, %v525
    %v586 = vpack.c.b16 %v530, %v526
    %v587 = vpack.c.b16 %v531, %v527
    %v588 = vpack.c.b16 %v536, %v532
    %v589 = vpack.c.b16 %v537, %v533
    %v590 = vpack.c.b16 %v538, %v534
    %v591 = vpack.c.b16 %v539, %v535
    %v592 = vpack.c.b16 %v544, %v540
    %v593 = vpack.c.b16 %v545, %v541
    %v594 = vpack.c.b16 %v546, %v542
    %v595 = vpack.c.b16 %v547, %v543
    %v596 = vpack.c.b16 %v552, %v548
    %v597 = vpack.c.b16 %v553, %v549
    %v598 = vpack.c.b16 %v554, %v550
    %v599 = vpack.c.b16 %v555, %v551
    %v600 = vpack.c.b16 %v560, %v556
    %v601 = vpack.c.b16 %v561, %v557
    %v602 = vpack.c.b16 %v562, %v558
    %v603 = vpack.c.b16 %v563, %v559
    %v604 = vpack.c.b16 %v568, %v564
    %v605 = vpack.c.b16 %v569, %v565
    %v606 = vpack.c.b16 %v570, %v566
    %v607 = vpack.c.b16 %v571, %v567
    %v608 = vpack.c.b16 %v576, %v572
    %v609 = vpack.c.b16 %v577, %v573
    %v610 = vpack.c.b16 %v578, %v574
    %v611 = vpack.c.b16 %v579, %v575
    %644 = vmatpush.bf16.msra.mxu0 %v608
    %645 = vmatpush.bf16.msra.mxu0 %v604
    %646 = vmatpush.bf16.msra.mxu0 %v600
    %647 = vmatpush.bf16.msra.mxu0 %v596
    %648 = vmatpush.bf16.msra.mxu0 %v592
    %649 = vmatpush.bf16.msra.mxu0 %v588
    %650 = vmatpush.bf16.msra.mxu0 %v584
    %651 = vmatpush.bf16.msra.mxu0 %v580
    %652 = vmatmul.bf16.gmra.mxu0 %v443
    %v653 = vpop.f32.mrf.mxu0
    %v654 = vadd.f32 0.0, %v653
    %v655 = vpop.f32.mrf.mxu0
    %656 = vdwg.mxu0
    %657 = vmatpush.bf16.msra.mxu0 %v609
    %658 = vmatpush.bf16.msra.mxu0 %v605
    %659 = vmatpush.bf16.msra.mxu0 %v601
    %660 = vmatpush.bf16.msra.mxu0 %v597
    %661 = vmatpush.bf16.msra.mxu0 %v593
    %662 = vmatpush.bf16.msra.mxu0 %v589
    %663 = vmatpush.bf16.msra.mxu0 %v585
    %664 = vmatpush.bf16.msra.mxu0 %v581
    %665 = vmatmul.bf16.gmra.mxu0 %v443
    %v666 = vpop.f32.mrf.mxu0
    %v667 = vadd.f32 0.0, %v666
    %v668 = vpop.f32.mrf.mxu0
    %669 = vdwg.mxu0
    %670 = vmatpush.bf16.msra.mxu0 %v610
    %671 = vmatpush.bf16.msra.mxu0 %v606
    %672 = vmatpush.bf16.msra.mxu0 %v602
    %673 = vmatpush.bf16.msra.mxu0 %v598
    %674 = vmatpush.bf16.msra.mxu0 %v594
    %675 = vmatpush.bf16.msra.mxu0 %v590
    %676 = vmatpush.bf16.msra.mxu0 %v586
    %677 = vmatpush.bf16.msra.mxu0 %v582
    %678 = vmatmul.bf16.gmra.mxu0 %v443
    %v679 = vpop.f32.mrf.mxu0
    %v680 = vadd.f32 0.0, %v679
    %v681 = vpop.f32.mrf.mxu0
    %682 = vdwg.mxu0
    %683 = vmatpush.bf16.msra.mxu0 %v611
    %684 = vmatpush.bf16.msra.mxu0 %v607
    %685 = vmatpush.bf16.msra.mxu0 %v603
    %686 = vmatpush.bf16.msra.mxu0 %v599
    %687 = vmatpush.bf16.msra.mxu0 %v595
    %688 = vmatpush.bf16.msra.mxu0 %v591
    %689 = vmatpush.bf16.msra.mxu0 %v587
    %690 = vmatpush.bf16.msra.mxu0 %v583
    %691 = vmatmul.bf16.gmra.mxu0 %v443
    %v692 = vpop.f32.mrf.mxu0
    %v693 = vadd.f32 0.0, %v692
    %v694 = vpop.f32.mrf.mxu0
    %695 = vdwg.mxu0
    %v696 = vadd.f32 %v448, %v654
    %v697 = vadd.f32 %v449, %v667
    %v698 = vadd.f32 %v450, %v680
    %v699 = vadd.f32 %v451, %v693
    %v700 = vxor.u32 %v696, 2147483648
    %v701 = vmul.f32 %v700, 1.442695
    %v702 = vpow.pop %v701
    %v703 = vadd.f32 %v702, 1.0
    %v704 = vrcp.pop %v703
    %v705 = vmul.f32 %v703, %v704
    %v706 = vsub.f32 1.0, %v705
    %v707 = vmul.f32 %v704, %v706
    %v708 = vadd.f32 %v704, %v707
    %vm709 = vweird.f32 %v703
    %vm710 = vweird.f32 %v704
    %vm711 = vmor %vm709, %vm710
    %v712 = vsel %vm711, %v704, %v708
    %v713 = vand.u32 2147483647, %v703
    %vm714 = vcmp.eq.f32.partialorder %v713, 8.507059e+37
    %v715 = vand.u32 %v703, 2147483648
    %v716 = vor.u32 1.1754944e-38, %v715
    %v717 = vsel %vm714, %v716, %v712
    %v718 = vmul.f32 1.0, %v717
    %v719 = vxor.u32 %v697, 2147483648
    %v720 = vmul.f32 %v719, 1.442695
    %v721 = vpow.pop %v720
    %v722 = vadd.f32 %v721, 1.0
    %v723 = vrcp.pop %v722
    %v724 = vmul.f32 %v722, %v723
    %v725 = vsub.f32 1.0, %v724
    %v726 = vmul.f32 %v723, %v725
    %v727 = vadd.f32 %v723, %v726
    %vm728 = vweird.f32 %v722
    %vm729 = vweird.f32 %v723
    %vm730 = vmor %vm728, %vm729
    %v731 = vsel %vm730, %v723, %v727
    %v732 = vand.u32 2147483647, %v722
    %vm733 = vcmp.eq.f32.partialorder %v732, 8.507059e+37
    %v734 = vand.u32 %v722, 2147483648
    %v735 = vor.u32 1.1754944e-38, %v734
    %v736 = vsel %vm733, %v735, %v731
    %v737 = vmul.f32 1.0, %v736
    %v738 = vtanh.pop %v698
    %v739 = vxor.u32 %v699, 2147483648
    %v740 = vmul.f32 %v739, 1.442695
    %v741 = vpow.pop %v740
    %v742 = vadd.f32 %v741, 1.0
    %v743 = vrcp.pop %v742
    %v744 = vmul.f32 %v742, %v743
    %v745 = vsub.f32 1.0, %v744
    %v746 = vmul.f32 %v743, %v745
    %v747 = vadd.f32 %v743, %v746
    %vm748 = vweird.f32 %v742
    %vm749 = vweird.f32 %v743
    %vm750 = vmor %vm748, %vm749
    %v751 = vsel %vm750, %v743, %v747
    %v752 = vand.u32 2147483647, %v742
    %vm753 = vcmp.eq.f32.partialorder %v752, 8.507059e+37
    %v754 = vand.u32 %v742, 2147483648
    %v755 = vor.u32 1.1754944e-38, %v754
    %v756 = vsel %vm753, %v755, %v751
    %v757 = vmul.f32 1.0, %v756
    %v758 = vmul.f32 %v737, %v444
    %v759 = vmul.f32 %v718, %v738
    %v760 = vadd.f32 %v758, %v759
    %v761 = vtanh.pop %v760
    %v762 = vmul.f32 %v757, %v761
    %v763 = vpack.c.bf16 %v762, %v762
    %s764 = smul.u32 1, 4
    %s765 = smul.addr %s764, 8
    %s766 = scalar_lea.vmem [#allocation4], %s765
    %v767 = vld [vmem:[%s766] sm:$0xff]
    %v768 = vld [vmem:[%s766 + $0x8] sm:$0xff]
    %v769 = vld [vmem:[%s766 + $0x10] sm:$0xff]
    %v770 = vld [vmem:[%s766 + $0x18] sm:$0xff]
    %771 = vmatpush.bf16.msra.mxu0 %v608
    %772 = vmatpush.bf16.msra.mxu0 %v604
    %773 = vmatpush.bf16.msra.mxu0 %v600
    %774 = vmatpush.bf16.msra.mxu0 %v596
    %775 = vmatpush.bf16.msra.mxu0 %v592
    %776 = vmatpush.bf16.msra.mxu0 %v588
    %777 = vmatpush.bf16.msra.mxu0 %v584
    %778 = vmatpush.bf16.msra.mxu0 %v580
    %779 = vmatmul.bf16.gmra.mxu0 %v763
    %v780 = vpop.f32.mrf.mxu0
    %v781 = vadd.f32 0.0, %v780
    %v782 = vpop.f32.mrf.mxu0
    %783 = vdwg.mxu0
    %784 = vmatpush.bf16.msra.mxu0 %v609
    %785 = vmatpush.bf16.msra.mxu0 %v605
    %786 = vmatpush.bf16.msra.mxu0 %v601
    %787 = vmatpush.bf16.msra.mxu0 %v597
    %788 = vmatpush.bf16.msra.mxu0 %v593
    %789 = vmatpush.bf16.msra.mxu0 %v589
    %790 = vmatpush.bf16.msra.mxu0 %v585
    %791 = vmatpush.bf16.msra.mxu0 %v581
    %792 = vmatmul.bf16.gmra.mxu0 %v763
    %v793 = vpop.f32.mrf.mxu0
    %v794 = vadd.f32 0.0, %v793
    %v795 = vpop.f32.mrf.mxu0
    %796 = vdwg.mxu0
    %797 = vmatpush.bf16.msra.mxu0 %v610
    %798 = vmatpush.bf16.msra.mxu0 %v606
    %799 = vmatpush.bf16.msra.mxu0 %v602
    %800 = vmatpush.bf16.msra.mxu0 %v598
    %801 = vmatpush.bf16.msra.mxu0 %v594
    %802 = vmatpush.bf16.msra.mxu0 %v590
    %803 = vmatpush.bf16.msra.mxu0 %v586
    %804 = vmatpush.bf16.msra.mxu0 %v582
    %805 = vmatmul.bf16.gmra.mxu0 %v763
    %v806 = vpop.f32.mrf.mxu0
    %v807 = vadd.f32 0.0, %v806
    %v808 = vpop.f32.mrf.mxu0
    %809 = vdwg.mxu0
    %810 = vmatpush.bf16.msra.mxu0 %v611
    %811 = vmatpush.bf16.msra.mxu0 %v607
    %812 = vmatpush.bf16.msra.mxu0 %v603
    %813 = vmatpush.bf16.msra.mxu0 %v599
    %814 = vmatpush.bf16.msra.mxu0 %v595
    %815 = vmatpush.bf16.msra.mxu0 %v591
    %816 = vmatpush.bf16.msra.mxu0 %v587
    %817 = vmatpush.bf16.msra.mxu0 %v583
    %818 = vmatmul.bf16.gmra.mxu0 %v763
    %v819 = vpop.f32.mrf.mxu0
    %v820 = vadd.f32 0.0, %v819
    %v821 = vpop.f32.mrf.mxu0
    %822 = vdwg.mxu0
    %v823 = vadd.f32 %v767, %v781
    %v824 = vadd.f32 %v768, %v794
    %v825 = vadd.f32 %v769, %v807
    %v826 = vadd.f32 %v770, %v820
    %v827 = vxor.u32 %v823, 2147483648
    %v828 = vmul.f32 %v827, 1.442695
    %v829 = vpow.pop %v828
    %v830 = vadd.f32 %v829, 1.0
    %v831 = vrcp.pop %v830
    %v832 = vmul.f32 %v830, %v831
    %v833 = vsub.f32 1.0, %v832
    %v834 = vmul.f32 %v831, %v833
    %v835 = vadd.f32 %v831, %v834
    %vm836 = vweird.f32 %v830
    %vm837 = vweird.f32 %v831
    %vm838 = vmor %vm836, %vm837
    %v839 = vsel %vm838, %v831, %v835
    %v840 = vand.u32 2147483647, %v830
    %vm841 = vcmp.eq.f32.partialorder %v840, 8.507059e+37
    %v842 = vand.u32 %v830, 2147483648
    %v843 = vor.u32 1.1754944e-38, %v842
    %v844 = vsel %vm841, %v843, %v839
    %v845 = vmul.f32 1.0, %v844
    %v846 = vxor.u32 %v824, 2147483648
    %v847 = vmul.f32 %v846, 1.442695
    %v848 = vpow.pop %v847
    %v849 = vadd.f32 %v848, 1.0
    %v850 = vrcp.pop %v849
    %v851 = vmul.f32 %v849, %v850
    %v852 = vsub.f32 1.0, %v851
    %v853 = vmul.f32 %v850, %v852
    %v854 = vadd.f32 %v850, %v853
    %vm855 = vweird.f32 %v849
    %vm856 = vweird.f32 %v850
    %vm857 = vmor %vm855, %vm856
    %v858 = vsel %vm857, %v850, %v854
    %v859 = vand.u32 2147483647, %v849
    %vm860 = vcmp.eq.f32.partialorder %v859, 8.507059e+37
    %v861 = vand.u32 %v849, 2147483648
    %v862 = vor.u32 1.1754944e-38, %v861
    %v863 = vsel %vm860, %v862, %v858
    %v864 = vmul.f32 1.0, %v863
    %v865 = vtanh.pop %v825
    %v866 = vxor.u32 %v826, 2147483648
    %v867 = vmul.f32 %v866, 1.442695
    %v868 = vpow.pop %v867
    %v869 = vadd.f32 %v868, 1.0
    %v870 = vrcp.pop %v869
    %v871 = vmul.f32 %v869, %v870
    %v872 = vsub.f32 1.0, %v871
    %v873 = vmul.f32 %v870, %v872
    %v874 = vadd.f32 %v870, %v873
    %vm875 = vweird.f32 %v869
    %vm876 = vweird.f32 %v870
    %vm877 = vmor %vm875, %vm876
    %v878 = vsel %vm877, %v870, %v874
    %v879 = vand.u32 2147483647, %v869
    %vm880 = vcmp.eq.f32.partialorder %v879, 8.507059e+37
    %v881 = vand.u32 %v869, 2147483648
    %v882 = vor.u32 1.1754944e-38, %v881
    %v883 = vsel %vm880, %v882, %v878
    %v884 = vmul.f32 1.0, %v883
    %v885 = vmul.f32 %v864, %v760
    %v886 = vmul.f32 %v845, %v865
    %v887 = vadd.f32 %v885, %v886
    %v888 = vtanh.pop %v887
    %v889 = vmul.f32 %v884, %v888
    %v890 = vpack.c.bf16 %v889, %v889
    %s891 = smul.u32 2, 4
    %s892 = smul.addr %s891, 8
    %s893 = scalar_lea.vmem [#allocation4], %s892
    %v894 = vld [vmem:[%s893] sm:$0xff]
    %v895 = vld [vmem:[%s893 + $0x8] sm:$0xff]
    %v896 = vld [vmem:[%s893 + $0x10] sm:$0xff]
    %v897 = vld [vmem:[%s893 + $0x18] sm:$0xff]
    %898 = vmatpush.bf16.msra.mxu0 %v608
    %899 = vmatpush.bf16.msra.mxu0 %v604
    %900 = vmatpush.bf16.msra.mxu0 %v600
    %901 = vmatpush.bf16.msra.mxu0 %v596
    %902 = vmatpush.bf16.msra.mxu0 %v592
    %903 = vmatpush.bf16.msra.mxu0 %v588
    %904 = vmatpush.bf16.msra.mxu0 %v584
    %905 = vmatpush.bf16.msra.mxu0 %v580
    %906 = vmatmul.bf16.gmra.mxu0 %v890
    %v907 = vpop.f32.mrf.mxu0
    %v908 = vadd.f32 0.0, %v907
    %v909 = vpop.f32.mrf.mxu0
    %910 = vdwg.mxu0
    %911 = vmatpush.bf16.msra.mxu0 %v609
    %912 = vmatpush.bf16.msra.mxu0 %v605
    %913 = vmatpush.bf16.msra.mxu0 %v601
    %914 = vmatpush.bf16.msra.mxu0 %v597
    %915 = vmatpush.bf16.msra.mxu0 %v593
    %916 = vmatpush.bf16.msra.mxu0 %v589
    %917 = vmatpush.bf16.msra.mxu0 %v585
    %918 = vmatpush.bf16.msra.mxu0 %v581
    %919 = vmatmul.bf16.gmra.mxu0 %v890
    %v920 = vpop.f32.mrf.mxu0
    %v921 = vadd.f32 0.0, %v920
    %v922 = vpop.f32.mrf.mxu0
    %923 = vdwg.mxu0
    %924 = vmatpush.bf16.msra.mxu0 %v610
    %925 = vmatpush.bf16.msra.mxu0 %v606
    %926 = vmatpush.bf16.msra.mxu0 %v602
    %927 = vmatpush.bf16.msra.mxu0 %v598
    %928 = vmatpush.bf16.msra.mxu0 %v594
    %929 = vmatpush.bf16.msra.mxu0 %v590
    %930 = vmatpush.bf16.msra.mxu0 %v586
    %931 = vmatpush.bf16.msra.mxu0 %v582
    %932 = vmatmul.bf16.gmra.mxu0 %v890
    %v933 = vpop.f32.mrf.mxu0
    %v934 = vadd.f32 0.0, %v933
    %v935 = vpop.f32.mrf.mxu0
    %936 = vdwg.mxu0
    %937 = vmatpush.bf16.msra.mxu0 %v611
    %938 = vmatpush.bf16.msra.mxu0 %v607
    %939 = vmatpush.bf16.msra.mxu0 %v603
    %940 = vmatpush.bf16.msra.mxu0 %v599
    %941 = vmatpush.bf16.msra.mxu0 %v595
    %942 = vmatpush.bf16.msra.mxu0 %v591
    %943 = vmatpush.bf16.msra.mxu0 %v587
    %944 = vmatpush.bf16.msra.mxu0 %v583
    %945 = vmatmul.bf16.gmra.mxu0 %v890
    %v946 = vpop.f32.mrf.mxu0
    %v947 = vadd.f32 0.0, %v946
    %v948 = vpop.f32.mrf.mxu0
    %949 = vdwg.mxu0
    %v950 = vadd.f32 %v894, %v908
    %v951 = vadd.f32 %v895, %v921
    %v952 = vadd.f32 %v896, %v934
    %v953 = vadd.f32 %v897, %v947
    %v954 = vxor.u32 %v950, 2147483648
    %v955 = vmul.f32 %v954, 1.442695
    %v956 = vpow.pop %v955
    %v957 = vadd.f32 %v956, 1.0
    %v958 = vrcp.pop %v957
    %v959 = vmul.f32 %v957, %v958
    %v960 = vsub.f32 1.0, %v959
    %v961 = vmul.f32 %v958, %v960
    %v962 = vadd.f32 %v958, %v961
    %vm963 = vweird.f32 %v957
    %vm964 = vweird.f32 %v958
    %vm965 = vmor %vm963, %vm964
    %v966 = vsel %vm965, %v958, %v962
    %v967 = vand.u32 2147483647, %v957
    %vm968 = vcmp.eq.f32.partialorder %v967, 8.507059e+37
    %v969 = vand.u32 %v957, 2147483648
    %v970 = vor.u32 1.1754944e-38, %v969
    %v971 = vsel %vm968, %v970, %v966
    %v972 = vmul.f32 1.0, %v971
    %v973 = vxor.u32 %v951, 2147483648
    %v974 = vmul.f32 %v973, 1.442695
    %v975 = vpow.pop %v974
    %v976 = vadd.f32 %v975, 1.0
    %v977 = vrcp.pop %v976
    %v978 = vmul.f32 %v976, %v977
    %v979 = vsub.f32 1.0, %v978
    %v980 = vmul.f32 %v977, %v979
    %v981 = vadd.f32 %v977, %v980
    %vm982 = vweird.f32 %v976
    %vm983 = vweird.f32 %v977
    %vm984 = vmor %vm982, %vm983
    %v985 = vsel %vm984, %v977, %v981
    %v986 = vand.u32 2147483647, %v976
    %vm987 = vcmp.eq.f32.partialorder %v986, 8.507059e+37
    %v988 = vand.u32 %v976, 2147483648
    %v989 = vor.u32 1.1754944e-38, %v988
    %v990 = vsel %vm987, %v989, %v985
    %v991 = vmul.f32 1.0, %v990
    %v992 = vtanh.pop %v952
    %v993 = vxor.u32 %v953, 2147483648
    %v994 = vmul.f32 %v993, 1.442695
    %v995 = vpow.pop %v994
    %v996 = vadd.f32 %v995, 1.0
    %v997 = vrcp.pop %v996
    %v998 = vmul.f32 %v996, %v997
    %v999 = vsub.f32 1.0, %v998
    %v1000 = vmul.f32 %v997, %v999
    %v1001 = vadd.f32 %v997, %v1000
    %vm1002 = vweird.f32 %v996
    %vm1003 = vweird.f32 %v997
    %vm1004 = vmor %vm1002, %vm1003
    %v1005 = vsel %vm1004, %v997, %v1001
    %v1006 = vand.u32 2147483647, %v996
    %vm1007 = vcmp.eq.f32.partialorder %v1006, 8.507059e+37
    %v1008 = vand.u32 %v996, 2147483648
    %v1009 = vor.u32 1.1754944e-38, %v1008
    %v1010 = vsel %vm1007, %v1009, %v1005
    %v1011 = vmul.f32 1.0, %v1010
    %v1012 = vmul.f32 %v991, %v887
    %v1013 = vmul.f32 %v972, %v992
    %v1014 = vadd.f32 %v1012, %v1013
    %v1015 = vtanh.pop %v1014
    %v1016 = vmul.f32 %v1011, %v1015
    %v1017 = vpack.c.bf16 %v1016, %v1016
    %s1018 = smul.u32 3, 4
    %s1019 = smul.addr %s1018, 8
    %s1020 = scalar_lea.vmem [#allocation4], %s1019
    %v1021 = vld [vmem:[%s1020] sm:$0xff]
    %v1022 = vld [vmem:[%s1020 + $0x8] sm:$0xff]
    %v1023 = vld [vmem:[%s1020 + $0x10] sm:$0xff]
    %v1024 = vld [vmem:[%s1020 + $0x18] sm:$0xff]
    %1025 = vmatpush.bf16.msra.mxu0 %v608
    %1026 = vmatpush.bf16.msra.mxu0 %v604
    %1027 = vmatpush.bf16.msra.mxu0 %v600
    %1028 = vmatpush.bf16.msra.mxu0 %v596
    %1029 = vmatpush.bf16.msra.mxu0 %v592
    %1030 = vmatpush.bf16.msra.mxu0 %v588
    %1031 = vmatpush.bf16.msra.mxu0 %v584
    %1032 = vmatpush.bf16.msra.mxu0 %v580
    %1033 = vmatmul.bf16.gmra.mxu0 %v1017
    %v1034 = vpop.f32.mrf.mxu0
    %v1035 = vadd.f32 0.0, %v1034
    %v1036 = vpop.f32.mrf.mxu0
    %1037 = vdwg.mxu0
    %1038 = vmatpush.bf16.msra.mxu0 %v609
    %1039 = vmatpush.bf16.msra.mxu0 %v605
    %1040 = vmatpush.bf16.msra.mxu0 %v601
    %1041 = vmatpush.bf16.msra.mxu0 %v597
    %1042 = vmatpush.bf16.msra.mxu0 %v593
    %1043 = vmatpush.bf16.msra.mxu0 %v589
    %1044 = vmatpush.bf16.msra.mxu0 %v585
    %1045 = vmatpush.bf16.msra.mxu0 %v581
    %1046 = vmatmul.bf16.gmra.mxu0 %v1017
    %v1047 = vpop.f32.mrf.mxu0
    %v1048 = vadd.f32 0.0, %v1047
    %v1049 = vpop.f32.mrf.mxu0
    %1050 = vdwg.mxu0
    %1051 = vmatpush.bf16.msra.mxu0 %v610
    %1052 = vmatpush.bf16.msra.mxu0 %v606
    %1053 = vmatpush.bf16.msra.mxu0 %v602
    %1054 = vmatpush.bf16.msra.mxu0 %v598
    %1055 = vmatpush.bf16.msra.mxu0 %v594
    %1056 = vmatpush.bf16.msra.mxu0 %v590
    %1057 = vmatpush.bf16.msra.mxu0 %v586
    %1058 = vmatpush.bf16.msra.mxu0 %v582
    %1059 = vmatmul.bf16.gmra.mxu0 %v1017
    %v1060 = vpop.f32.mrf.mxu0
    %v1061 = vadd.f32 0.0, %v1060
    %v1062 = vpop.f32.mrf.mxu0
    %1063 = vdwg.mxu0
    %1064 = vmatpush.bf16.msra.mxu0 %v611
    %1065 = vmatpush.bf16.msra.mxu0 %v607
    %1066 = vmatpush.bf16.msra.mxu0 %v603
    %1067 = vmatpush.bf16.msra.mxu0 %v599
    %1068 = vmatpush.bf16.msra.mxu0 %v595
    %1069 = vmatpush.bf16.msra.mxu0 %v591
    %1070 = vmatpush.bf16.msra.mxu0 %v587
    %1071 = vmatpush.bf16.msra.mxu0 %v583
    %1072 = vmatmul.bf16.gmra.mxu0 %v1017
    %v1073 = vpop.f32.mrf.mxu0
    %v1074 = vadd.f32 0.0, %v1073
    %v1075 = vpop.f32.mrf.mxu0
    %1076 = vdwg.mxu0
    %v1077 = vadd.f32 %v1021, %v1035
    %v1078 = vadd.f32 %v1022, %v1048
    %v1079 = vadd.f32 %v1023, %v1061
    %v1080 = vadd.f32 %v1024, %v1074
    %v1081 = vxor.u32 %v1077, 2147483648
    %v1082 = vmul.f32 %v1081, 1.442695
    %v1083 = vpow.pop %v1082
    %v1084 = vadd.f32 %v1083, 1.0
    %v1085 = vrcp.pop %v1084
    %v1086 = vmul.f32 %v1084, %v1085
    %v1087 = vsub.f32 1.0, %v1086
    %v1088 = vmul.f32 %v1085, %v1087
    %v1089 = vadd.f32 %v1085, %v1088
    %vm1090 = vweird.f32 %v1084
    %vm1091 = vweird.f32 %v1085
    %vm1092 = vmor %vm1090, %vm1091
    %v1093 = vsel %vm1092, %v1085, %v1089
    %v1094 = vand.u32 2147483647, %v1084
    %vm1095 = vcmp.eq.f32.partialorder %v1094, 8.507059e+37
    %v1096 = vand.u32 %v1084, 2147483648
    %v1097 = vor.u32 1.1754944e-38, %v1096
    %v1098 = vsel %vm1095, %v1097, %v1093
    %v1099 = vmul.f32 1.0, %v1098
    %v1100 = vxor.u32 %v1078, 2147483648
    %v1101 = vmul.f32 %v1100, 1.442695
    %v1102 = vpow.pop %v1101
    %v1103 = vadd.f32 %v1102, 1.0
    %v1104 = vrcp.pop %v1103
    %v1105 = vmul.f32 %v1103, %v1104
    %v1106 = vsub.f32 1.0, %v1105
    %v1107 = vmul.f32 %v1104, %v1106
    %v1108 = vadd.f32 %v1104, %v1107
    %vm1109 = vweird.f32 %v1103
    %vm1110 = vweird.f32 %v1104
    %vm1111 = vmor %vm1109, %vm1110
    %v1112 = vsel %vm1111, %v1104, %v1108
    %v1113 = vand.u32 2147483647, %v1103
    %vm1114 = vcmp.eq.f32.partialorder %v1113, 8.507059e+37
    %v1115 = vand.u32 %v1103, 2147483648
    %v1116 = vor.u32 1.1754944e-38, %v1115
    %v1117 = vsel %vm1114, %v1116, %v1112
    %v1118 = vmul.f32 1.0, %v1117
    %v1119 = vtanh.pop %v1079
    %v1120 = vxor.u32 %v1080, 2147483648
    %v1121 = vmul.f32 %v1120, 1.442695
    %v1122 = vpow.pop %v1121
    %v1123 = vadd.f32 %v1122, 1.0
    %v1124 = vrcp.pop %v1123
    %v1125 = vmul.f32 %v1123, %v1124
    %v1126 = vsub.f32 1.0, %v1125
    %v1127 = vmul.f32 %v1124, %v1126
    %v1128 = vadd.f32 %v1124, %v1127
    %vm1129 = vweird.f32 %v1123
    %vm1130 = vweird.f32 %v1124
    %vm1131 = vmor %vm1129, %vm1130
    %v1132 = vsel %vm1131, %v1124, %v1128
    %v1133 = vand.u32 2147483647, %v1123
    %vm1134 = vcmp.eq.f32.partialorder %v1133, 8.507059e+37
    %v1135 = vand.u32 %v1123, 2147483648
    %v1136 = vor.u32 1.1754944e-38, %v1135
    %v1137 = vsel %vm1134, %v1136, %v1132
    %v1138 = vmul.f32 1.0, %v1137
    %v1139 = vmul.f32 %v1118, %v1014
    %v1140 = vmul.f32 %v1099, %v1119
    %v1141 = vadd.f32 %v1139, %v1140
    %v1142 = vtanh.pop %v1141
    %v1143 = vmul.f32 %v1138, %v1142
    %v1144 = vpack.c.bf16 %v1143, %v1143
    %s1145 = smul.u32 4, 4
    %s1146 = smul.addr %s1145, 8
    %s1147 = scalar_lea.vmem [#allocation4], %s1146
    %v1148 = vld [vmem:[%s1147] sm:$0xff]
    %v1149 = vld [vmem:[%s1147 + $0x8] sm:$0xff]
    %v1150 = vld [vmem:[%s1147 + $0x10] sm:$0xff]
    %v1151 = vld [vmem:[%s1147 + $0x18] sm:$0xff]
    %1152 = vmatpush.bf16.msra.mxu0 %v608
    %1153 = vmatpush.bf16.msra.mxu0 %v604
    %1154 = vmatpush.bf16.msra.mxu0 %v600
    %1155 = vmatpush.bf16.msra.mxu0 %v596
    %1156 = vmatpush.bf16.msra.mxu0 %v592
    %1157 = vmatpush.bf16.msra.mxu0 %v588
    %1158 = vmatpush.bf16.msra.mxu0 %v584
    %1159 = vmatpush.bf16.msra.mxu0 %v580
    %1160 = vmatmul.bf16.gmra.mxu0 %v1144
    %v1161 = vpop.f32.mrf.mxu0
    %v1162 = vadd.f32 0.0, %v1161
    %v1163 = vpop.f32.mrf.mxu0
    %1164 = vdwg.mxu0
    %1165 = vmatpush.bf16.msra.mxu0 %v609
    %1166 = vmatpush.bf16.msra.mxu0 %v605
    %1167 = vmatpush.bf16.msra.mxu0 %v601
    %1168 = vmatpush.bf16.msra.mxu0 %v597
    %1169 = vmatpush.bf16.msra.mxu0 %v593
    %1170 = vmatpush.bf16.msra.mxu0 %v589
    %1171 = vmatpush.bf16.msra.mxu0 %v585
    %1172 = vmatpush.bf16.msra.mxu0 %v581
    %1173 = vmatmul.bf16.gmra.mxu0 %v1144
    %v1174 = vpop.f32.mrf.mxu0
    %v1175 = vadd.f32 0.0, %v1174
    %v1176 = vpop.f32.mrf.mxu0
    %1177 = vdwg.mxu0
    %1178 = vmatpush.bf16.msra.mxu0 %v610
    %1179 = vmatpush.bf16.msra.mxu0 %v606
    %1180 = vmatpush.bf16.msra.mxu0 %v602
    %1181 = vmatpush.bf16.msra.mxu0 %v598
    %1182 = vmatpush.bf16.msra.mxu0 %v594
    %1183 = vmatpush.bf16.msra.mxu0 %v590
    %1184 = vmatpush.bf16.msra.mxu0 %v586
    %1185 = vmatpush.bf16.msra.mxu0 %v582
    %1186 = vmatmul.bf16.gmra.mxu0 %v1144
    %v1187 = vpop.f32.mrf.mxu0
    %v1188 = vadd.f32 0.0, %v1187
    %v1189 = vpop.f32.mrf.mxu0
    %1190 = vdwg.mxu0
    %1191 = vmatpush.bf16.msra.mxu0 %v611
    %1192 = vmatpush.bf16.msra.mxu0 %v607
    %1193 = vmatpush.bf16.msra.mxu0 %v603
    %1194 = vmatpush.bf16.msra.mxu0 %v599
    %1195 = vmatpush.bf16.msra.mxu0 %v595
    %1196 = vmatpush.bf16.msra.mxu0 %v591
    %1197 = vmatpush.bf16.msra.mxu0 %v587
    %1198 = vmatpush.bf16.msra.mxu0 %v583
    %1199 = vmatmul.bf16.gmra.mxu0 %v1144
    %v1200 = vpop.f32.mrf.mxu0
    %v1201 = vadd.f32 0.0, %v1200
    %v1202 = vpop.f32.mrf.mxu0
    %1203 = vdwg.mxu0
    %v1204 = vadd.f32 %v1148, %v1162
    %v1205 = vadd.f32 %v1149, %v1175
    %v1206 = vadd.f32 %v1150, %v1188
    %v1207 = vadd.f32 %v1151, %v1201
    %v1208 = vxor.u32 %v1204, 2147483648
    %v1209 = vmul.f32 %v1208, 1.442695
    %v1210 = vpow.pop %v1209
    %v1211 = vadd.f32 %v1210, 1.0
    %v1212 = vrcp.pop %v1211
    %v1213 = vmul.f32 %v1211, %v1212
    %v1214 = vsub.f32 1.0, %v1213
    %v1215 = vmul.f32 %v1212, %v1214
    %v1216 = vadd.f32 %v1212, %v1215
    %vm1217 = vweird.f32 %v1211
    %vm1218 = vweird.f32 %v1212
    %vm1219 = vmor %vm1217, %vm1218
    %v1220 = vsel %vm1219, %v1212, %v1216
    %v1221 = vand.u32 2147483647, %v1211
    %vm1222 = vcmp.eq.f32.partialorder %v1221, 8.507059e+37
    %v1223 = vand.u32 %v1211, 2147483648
    %v1224 = vor.u32 1.1754944e-38, %v1223
    %v1225 = vsel %vm1222, %v1224, %v1220
    %v1226 = vmul.f32 1.0, %v1225
    %v1227 = vxor.u32 %v1205, 2147483648
    %v1228 = vmul.f32 %v1227, 1.442695
    %v1229 = vpow.pop %v1228
    %v1230 = vadd.f32 %v1229, 1.0
    %v1231 = vrcp.pop %v1230
    %v1232 = vmul.f32 %v1230, %v1231
    %v1233 = vsub.f32 1.0, %v1232
    %v1234 = vmul.f32 %v1231, %v1233
    %v1235 = vadd.f32 %v1231, %v1234
    %vm1236 = vweird.f32 %v1230
    %vm1237 = vweird.f32 %v1231
    %vm1238 = vmor %vm1236, %vm1237
    %v1239 = vsel %vm1238, %v1231, %v1235
    %v1240 = vand.u32 2147483647, %v1230
    %vm1241 = vcmp.eq.f32.partialorder %v1240, 8.507059e+37
    %v1242 = vand.u32 %v1230, 2147483648
    %v1243 = vor.u32 1.1754944e-38, %v1242
    %v1244 = vsel %vm1241, %v1243, %v1239
    %v1245 = vmul.f32 1.0, %v1244
    %v1246 = vtanh.pop %v1206
    %v1247 = vxor.u32 %v1207, 2147483648
    %v1248 = vmul.f32 %v1247, 1.442695
    %v1249 = vpow.pop %v1248
    %v1250 = vadd.f32 %v1249, 1.0
    %v1251 = vrcp.pop %v1250
    %v1252 = vmul.f32 %v1250, %v1251
    %v1253 = vsub.f32 1.0, %v1252
    %v1254 = vmul.f32 %v1251, %v1253
    %v1255 = vadd.f32 %v1251, %v1254
    %vm1256 = vweird.f32 %v1250
    %vm1257 = vweird.f32 %v1251
    %vm1258 = vmor %vm1256, %vm1257
    %v1259 = vsel %vm1258, %v1251, %v1255
    %v1260 = vand.u32 2147483647, %v1250
    %vm1261 = vcmp.eq.f32.partialorder %v1260, 8.507059e+37
    %v1262 = vand.u32 %v1250, 2147483648
    %v1263 = vor.u32 1.1754944e-38, %v1262
    %v1264 = vsel %vm1261, %v1263, %v1259
    %v1265 = vmul.f32 1.0, %v1264
    %v1266 = vmul.f32 %v1245, %v1141
    %v1267 = vmul.f32 %v1226, %v1246
    %v1268 = vadd.f32 %v1266, %v1267
    %v1269 = vtanh.pop %v1268
    %v1270 = vmul.f32 %v1265, %v1269
    %v1271 = vpack.c.bf16 %v1270, %v1270
    %s1272 = smul.u32 5, 4
    %s1273 = smul.addr %s1272, 8
    %s1274 = scalar_lea.vmem [#allocation4], %s1273
    %v1275 = vld [vmem:[%s1274] sm:$0xff]
    %v1276 = vld [vmem:[%s1274 + $0x8] sm:$0xff]
    %v1277 = vld [vmem:[%s1274 + $0x10] sm:$0xff]
    %v1278 = vld [vmem:[%s1274 + $0x18] sm:$0xff]
    %1279 = vmatpush.bf16.msra.mxu0 %v608
    %1280 = vmatpush.bf16.msra.mxu0 %v604
    %1281 = vmatpush.bf16.msra.mxu0 %v600
    %1282 = vmatpush.bf16.msra.mxu0 %v596
    %1283 = vmatpush.bf16.msra.mxu0 %v592
    %1284 = vmatpush.bf16.msra.mxu0 %v588
    %1285 = vmatpush.bf16.msra.mxu0 %v584
    %1286 = vmatpush.bf16.msra.mxu0 %v580
    %1287 = vmatmul.bf16.gmra.mxu0 %v1271
    %v1288 = vpop.f32.mrf.mxu0
    %v1289 = vadd.f32 0.0, %v1288
    %v1290 = vpop.f32.mrf.mxu0
    %1291 = vdwg.mxu0
    %1292 = vmatpush.bf16.msra.mxu0 %v609
    %1293 = vmatpush.bf16.msra.mxu0 %v605
    %1294 = vmatpush.bf16.msra.mxu0 %v601
    %1295 = vmatpush.bf16.msra.mxu0 %v597
    %1296 = vmatpush.bf16.msra.mxu0 %v593
    %1297 = vmatpush.bf16.msra.mxu0 %v589
    %1298 = vmatpush.bf16.msra.mxu0 %v585
    %1299 = vmatpush.bf16.msra.mxu0 %v581
    %1300 = vmatmul.bf16.gmra.mxu0 %v1271
    %v1301 = vpop.f32.mrf.mxu0
    %v1302 = vadd.f32 0.0, %v1301
    %v1303 = vpop.f32.mrf.mxu0
    %1304 = vdwg.mxu0
    %1305 = vmatpush.bf16.msra.mxu0 %v610
    %1306 = vmatpush.bf16.msra.mxu0 %v606
    %1307 = vmatpush.bf16.msra.mxu0 %v602
    %1308 = vmatpush.bf16.msra.mxu0 %v598
    %1309 = vmatpush.bf16.msra.mxu0 %v594
    %1310 = vmatpush.bf16.msra.mxu0 %v590
    %1311 = vmatpush.bf16.msra.mxu0 %v586
    %1312 = vmatpush.bf16.msra.mxu0 %v582
    %1313 = vmatmul.bf16.gmra.mxu0 %v1271
    %v1314 = vpop.f32.mrf.mxu0
    %v1315 = vadd.f32 0.0, %v1314
    %v1316 = vpop.f32.mrf.mxu0
    %1317 = vdwg.mxu0
    %1318 = vmatpush.bf16.msra.mxu0 %v611
    %1319 = vmatpush.bf16.msra.mxu0 %v607
    %1320 = vmatpush.bf16.msra.mxu0 %v603
    %1321 = vmatpush.bf16.msra.mxu0 %v599
    %1322 = vmatpush.bf16.msra.mxu0 %v595
    %1323 = vmatpush.bf16.msra.mxu0 %v591
    %1324 = vmatpush.bf16.msra.mxu0 %v587
    %1325 = vmatpush.bf16.msra.mxu0 %v583
    %1326 = vmatmul.bf16.gmra.mxu0 %v1271
    %v1327 = vpop.f32.mrf.mxu0
    %v1328 = vadd.f32 0.0, %v1327
    %v1329 = vpop.f32.mrf.mxu0
    %1330 = vdwg.mxu0
    %v1331 = vadd.f32 %v1275, %v1289
    %v1332 = vadd.f32 %v1276, %v1302
    %v1333 = vadd.f32 %v1277, %v1315
    %v1334 = vadd.f32 %v1278, %v1328
    %v1335 = vxor.u32 %v1331, 2147483648
    %v1336 = vmul.f32 %v1335, 1.442695
    %v1337 = vpow.pop %v1336
    %v1338 = vadd.f32 %v1337, 1.0
    %v1339 = vrcp.pop %v1338
    %v1340 = vmul.f32 %v1338, %v1339
    %v1341 = vsub.f32 1.0, %v1340
    %v1342 = vmul.f32 %v1339, %v1341
    %v1343 = vadd.f32 %v1339, %v1342
    %vm1344 = vweird.f32 %v1338
    %vm1345 = vweird.f32 %v1339
    %vm1346 = vmor %vm1344, %vm1345
    %v1347 = vsel %vm1346, %v1339, %v1343
    %v1348 = vand.u32 2147483647, %v1338
    %vm1349 = vcmp.eq.f32.partialorder %v1348, 8.507059e+37
    %v1350 = vand.u32 %v1338, 2147483648
    %v1351 = vor.u32 1.1754944e-38, %v1350
    %v1352 = vsel %vm1349, %v1351, %v1347
    %v1353 = vmul.f32 1.0, %v1352
    %v1354 = vxor.u32 %v1332, 2147483648
    %v1355 = vmul.f32 %v1354, 1.442695
    %v1356 = vpow.pop %v1355
    %v1357 = vadd.f32 %v1356, 1.0
    %v1358 = vrcp.pop %v1357
    %v1359 = vmul.f32 %v1357, %v1358
    %v1360 = vsub.f32 1.0, %v1359
    %v1361 = vmul.f32 %v1358, %v1360
    %v1362 = vadd.f32 %v1358, %v1361
    %vm1363 = vweird.f32 %v1357
    %vm1364 = vweird.f32 %v1358
    %vm1365 = vmor %vm1363, %vm1364
    %v1366 = vsel %vm1365, %v1358, %v1362
    %v1367 = vand.u32 2147483647, %v1357
    %vm1368 = vcmp.eq.f32.partialorder %v1367, 8.507059e+37
    %v1369 = vand.u32 %v1357, 2147483648
    %v1370 = vor.u32 1.1754944e-38, %v1369
    %v1371 = vsel %vm1368, %v1370, %v1366
    %v1372 = vmul.f32 1.0, %v1371
    %v1373 = vtanh.pop %v1333
    %v1374 = vxor.u32 %v1334, 2147483648
    %v1375 = vmul.f32 %v1374, 1.442695
    %v1376 = vpow.pop %v1375
    %v1377 = vadd.f32 %v1376, 1.0
    %v1378 = vrcp.pop %v1377
    %v1379 = vmul.f32 %v1377, %v1378
    %v1380 = vsub.f32 1.0, %v1379
    %v1381 = vmul.f32 %v1378, %v1380
    %v1382 = vadd.f32 %v1378, %v1381
    %vm1383 = vweird.f32 %v1377
    %vm1384 = vweird.f32 %v1378
    %vm1385 = vmor %vm1383, %vm1384
    %v1386 = vsel %vm1385, %v1378, %v1382
    %v1387 = vand.u32 2147483647, %v1377
    %vm1388 = vcmp.eq.f32.partialorder %v1387, 8.507059e+37
    %v1389 = vand.u32 %v1377, 2147483648
    %v1390 = vor.u32 1.1754944e-38, %v1389
    %v1391 = vsel %vm1388, %v1390, %v1386
    %v1392 = vmul.f32 1.0, %v1391
    %v1393 = vmul.f32 %v1372, %v1268
    %v1394 = vmul.f32 %v1353, %v1373
    %v1395 = vadd.f32 %v1393, %v1394
    %v1396 = vtanh.pop %v1395
    %v1397 = vmul.f32 %v1392, %v1396
    %v1398 = vpack.c.bf16 %v1397, %v1397
    %s1399 = smul.u32 6, 4
    %s1400 = smul.addr %s1399, 8
    %s1401 = scalar_lea.vmem [#allocation4], %s1400
    %v1402 = vld [vmem:[%s1401] sm:$0xff]
    %v1403 = vld [vmem:[%s1401 + $0x8] sm:$0xff]
    %v1404 = vld [vmem:[%s1401 + $0x10] sm:$0xff]
    %v1405 = vld [vmem:[%s1401 + $0x18] sm:$0xff]
    %1406 = vmatpush.bf16.msra.mxu0 %v608
    %1407 = vmatpush.bf16.msra.mxu0 %v604
    %1408 = vmatpush.bf16.msra.mxu0 %v600
    %1409 = vmatpush.bf16.msra.mxu0 %v596
    %1410 = vmatpush.bf16.msra.mxu0 %v592
    %1411 = vmatpush.bf16.msra.mxu0 %v588
    %1412 = vmatpush.bf16.msra.mxu0 %v584
    %1413 = vmatpush.bf16.msra.mxu0 %v580
    %1414 = vmatmul.bf16.gmra.mxu0 %v1398
    %v1415 = vpop.f32.mrf.mxu0
    %v1416 = vadd.f32 0.0, %v1415
    %v1417 = vpop.f32.mrf.mxu0
    %1418 = vdwg.mxu0
    %1419 = vmatpush.bf16.msra.mxu0 %v609
    %1420 = vmatpush.bf16.msra.mxu0 %v605
    %1421 = vmatpush.bf16.msra.mxu0 %v601
    %1422 = vmatpush.bf16.msra.mxu0 %v597
    %1423 = vmatpush.bf16.msra.mxu0 %v593
    %1424 = vmatpush.bf16.msra.mxu0 %v589
    %1425 = vmatpush.bf16.msra.mxu0 %v585
    %1426 = vmatpush.bf16.msra.mxu0 %v581
    %1427 = vmatmul.bf16.gmra.mxu0 %v1398
    %v1428 = vpop.f32.mrf.mxu0
    %v1429 = vadd.f32 0.0, %v1428
    %v1430 = vpop.f32.mrf.mxu0
    %1431 = vdwg.mxu0
    %1432 = vmatpush.bf16.msra.mxu0 %v610
    %1433 = vmatpush.bf16.msra.mxu0 %v606
    %1434 = vmatpush.bf16.msra.mxu0 %v602
    %1435 = vmatpush.bf16.msra.mxu0 %v598
    %1436 = vmatpush.bf16.msra.mxu0 %v594
    %1437 = vmatpush.bf16.msra.mxu0 %v590
    %1438 = vmatpush.bf16.msra.mxu0 %v586
    %1439 = vmatpush.bf16.msra.mxu0 %v582
    %1440 = vmatmul.bf16.gmra.mxu0 %v1398
    %v1441 = vpop.f32.mrf.mxu0
    %v1442 = vadd.f32 0.0, %v1441
    %v1443 = vpop.f32.mrf.mxu0
    %1444 = vdwg.mxu0
    %1445 = vmatpush.bf16.msra.mxu0 %v611
    %1446 = vmatpush.bf16.msra.mxu0 %v607
    %1447 = vmatpush.bf16.msra.mxu0 %v603
    %1448 = vmatpush.bf16.msra.mxu0 %v599
    %1449 = vmatpush.bf16.msra.mxu0 %v595
    %1450 = vmatpush.bf16.msra.mxu0 %v591
    %1451 = vmatpush.bf16.msra.mxu0 %v587
    %1452 = vmatpush.bf16.msra.mxu0 %v583
    %1453 = vmatmul.bf16.gmra.mxu0 %v1398
    %v1454 = vpop.f32.mrf.mxu0
    %v1455 = vadd.f32 0.0, %v1454
    %v1456 = vpop.f32.mrf.mxu0
    %1457 = vdwg.mxu0
    %v1458 = vadd.f32 %v1402, %v1416
    %v1459 = vadd.f32 %v1403, %v1429
    %v1460 = vadd.f32 %v1404, %v1442
    %v1461 = vadd.f32 %v1405, %v1455
    %v1462 = vxor.u32 %v1458, 2147483648
    %v1463 = vmul.f32 %v1462, 1.442695
    %v1464 = vpow.pop %v1463
    %v1465 = vadd.f32 %v1464, 1.0
    %v1466 = vrcp.pop %v1465
    %v1467 = vmul.f32 %v1465, %v1466
    %v1468 = vsub.f32 1.0, %v1467
    %v1469 = vmul.f32 %v1466, %v1468
    %v1470 = vadd.f32 %v1466, %v1469
    %vm1471 = vweird.f32 %v1465
    %vm1472 = vweird.f32 %v1466
    %vm1473 = vmor %vm1471, %vm1472
    %v1474 = vsel %vm1473, %v1466, %v1470
    %v1475 = vand.u32 2147483647, %v1465
    %vm1476 = vcmp.eq.f32.partialorder %v1475, 8.507059e+37
    %v1477 = vand.u32 %v1465, 2147483648
    %v1478 = vor.u32 1.1754944e-38, %v1477
    %v1479 = vsel %vm1476, %v1478, %v1474
    %v1480 = vmul.f32 1.0, %v1479
    %v1481 = vxor.u32 %v1459, 2147483648
    %v1482 = vmul.f32 %v1481, 1.442695
    %v1483 = vpow.pop %v1482
    %v1484 = vadd.f32 %v1483, 1.0
    %v1485 = vrcp.pop %v1484
    %v1486 = vmul.f32 %v1484, %v1485
    %v1487 = vsub.f32 1.0, %v1486
    %v1488 = vmul.f32 %v1485, %v1487
    %v1489 = vadd.f32 %v1485, %v1488
    %vm1490 = vweird.f32 %v1484
    %vm1491 = vweird.f32 %v1485
    %vm1492 = vmor %vm1490, %vm1491
    %v1493 = vsel %vm1492, %v1485, %v1489
    %v1494 = vand.u32 2147483647, %v1484
    %vm1495 = vcmp.eq.f32.partialorder %v1494, 8.507059e+37
    %v1496 = vand.u32 %v1484, 2147483648
    %v1497 = vor.u32 1.1754944e-38, %v1496
    %v1498 = vsel %vm1495, %v1497, %v1493
    %v1499 = vmul.f32 1.0, %v1498
    %v1500 = vtanh.pop %v1460
    %v1501 = vxor.u32 %v1461, 2147483648
    %v1502 = vmul.f32 %v1501, 1.442695
    %v1503 = vpow.pop %v1502
    %v1504 = vadd.f32 %v1503, 1.0
    %v1505 = vrcp.pop %v1504
    %v1506 = vmul.f32 %v1504, %v1505
    %v1507 = vsub.f32 1.0, %v1506
    %v1508 = vmul.f32 %v1505, %v1507
    %v1509 = vadd.f32 %v1505, %v1508
    %vm1510 = vweird.f32 %v1504
    %vm1511 = vweird.f32 %v1505
    %vm1512 = vmor %vm1510, %vm1511
    %v1513 = vsel %vm1512, %v1505, %v1509
    %v1514 = vand.u32 2147483647, %v1504
    %vm1515 = vcmp.eq.f32.partialorder %v1514, 8.507059e+37
    %v1516 = vand.u32 %v1504, 2147483648
    %v1517 = vor.u32 1.1754944e-38, %v1516
    %v1518 = vsel %vm1515, %v1517, %v1513
    %v1519 = vmul.f32 1.0, %v1518
    %v1520 = vmul.f32 %v1499, %v1395
    %v1521 = vmul.f32 %v1480, %v1500
    %v1522 = vadd.f32 %v1520, %v1521
    %v1523 = vtanh.pop %v1522
    %v1524 = vmul.f32 %v1519, %v1523
    %v1525 = vpack.c.bf16 %v1524, %v1524
    %s1526 = smul.u32 7, 4
    %s1527 = smul.addr %s1526, 8
    %s1528 = scalar_lea.vmem [#allocation4], %s1527
    %v1529 = vld [vmem:[%s1528] sm:$0xff]
    %v1530 = vld [vmem:[%s1528 + $0x8] sm:$0xff]
    %v1531 = vld [vmem:[%s1528 + $0x10] sm:$0xff]
    %v1532 = vld [vmem:[%s1528 + $0x18] sm:$0xff]
    %1533 = vmatpush.bf16.msra.mxu0 %v608
    %1534 = vmatpush.bf16.msra.mxu0 %v604
    %1535 = vmatpush.bf16.msra.mxu0 %v600
    %1536 = vmatpush.bf16.msra.mxu0 %v596
    %1537 = vmatpush.bf16.msra.mxu0 %v592
    %1538 = vmatpush.bf16.msra.mxu0 %v588
    %1539 = vmatpush.bf16.msra.mxu0 %v584
    %1540 = vmatpush.bf16.msra.mxu0 %v580
    %1541 = vmatmul.bf16.gmra.mxu0 %v1525
    %v1542 = vpop.f32.mrf.mxu0
    %v1543 = vadd.f32 0.0, %v1542
    %v1544 = vpop.f32.mrf.mxu0
    %1545 = vdwg.mxu0
    %1546 = vmatpush.bf16.msra.mxu0 %v609
    %1547 = vmatpush.bf16.msra.mxu0 %v605
    %1548 = vmatpush.bf16.msra.mxu0 %v601
    %1549 = vmatpush.bf16.msra.mxu0 %v597
    %1550 = vmatpush.bf16.msra.mxu0 %v593
    %1551 = vmatpush.bf16.msra.mxu0 %v589
    %1552 = vmatpush.bf16.msra.mxu0 %v585
    %1553 = vmatpush.bf16.msra.mxu0 %v581
    %1554 = vmatmul.bf16.gmra.mxu0 %v1525
    %v1555 = vpop.f32.mrf.mxu0
    %v1556 = vadd.f32 0.0, %v1555
    %v1557 = vpop.f32.mrf.mxu0
    %1558 = vdwg.mxu0
    %1559 = vmatpush.bf16.msra.mxu0 %v610
    %1560 = vmatpush.bf16.msra.mxu0 %v606
    %1561 = vmatpush.bf16.msra.mxu0 %v602
    %1562 = vmatpush.bf16.msra.mxu0 %v598
    %1563 = vmatpush.bf16.msra.mxu0 %v594
    %1564 = vmatpush.bf16.msra.mxu0 %v590
    %1565 = vmatpush.bf16.msra.mxu0 %v586
    %1566 = vmatpush.bf16.msra.mxu0 %v582
    %1567 = vmatmul.bf16.gmra.mxu0 %v1525
    %v1568 = vpop.f32.mrf.mxu0
    %v1569 = vadd.f32 0.0, %v1568
    %v1570 = vpop.f32.mrf.mxu0
    %1571 = vdwg.mxu0
    %1572 = vmatpush.bf16.msra.mxu0 %v611
    %1573 = vmatpush.bf16.msra.mxu0 %v607
    %1574 = vmatpush.bf16.msra.mxu0 %v603
    %1575 = vmatpush.bf16.msra.mxu0 %v599
    %1576 = vmatpush.bf16.msra.mxu0 %v595
    %1577 = vmatpush.bf16.msra.mxu0 %v591
    %1578 = vmatpush.bf16.msra.mxu0 %v587
    %1579 = vmatpush.bf16.msra.mxu0 %v583
    %1580 = vmatmul.bf16.gmra.mxu0 %v1525
    %v1581 = vpop.f32.mrf.mxu0
    %v1582 = vadd.f32 0.0, %v1581
    %v1583 = vpop.f32.mrf.mxu0
    %1584 = vdwg.mxu0
    %v1585 = vadd.f32 %v1529, %v1543
    %v1586 = vadd.f32 %v1530, %v1556
    %v1587 = vadd.f32 %v1531, %v1569
    %v1588 = vadd.f32 %v1532, %v1582
    %v1589 = vxor.u32 %v1585, 2147483648
    %v1590 = vmul.f32 %v1589, 1.442695
    %v1591 = vpow.pop %v1590
    %v1592 = vadd.f32 %v1591, 1.0
    %v1593 = vrcp.pop %v1592
    %v1594 = vmul.f32 %v1592, %v1593
    %v1595 = vsub.f32 1.0, %v1594
    %v1596 = vmul.f32 %v1593, %v1595
    %v1597 = vadd.f32 %v1593, %v1596
    %vm1598 = vweird.f32 %v1592
    %vm1599 = vweird.f32 %v1593
    %vm1600 = vmor %vm1598, %vm1599
    %v1601 = vsel %vm1600, %v1593, %v1597
    %v1602 = vand.u32 2147483647, %v1592
    %vm1603 = vcmp.eq.f32.partialorder %v1602, 8.507059e+37
    %v1604 = vand.u32 %v1592, 2147483648
    %v1605 = vor.u32 1.1754944e-38, %v1604
    %v1606 = vsel %vm1603, %v1605, %v1601
    %v1607 = vmul.f32 1.0, %v1606
    %v1608 = vxor.u32 %v1586, 2147483648
    %v1609 = vmul.f32 %v1608, 1.442695
    %v1610 = vpow.pop %v1609
    %v1611 = vadd.f32 %v1610, 1.0
    %v1612 = vrcp.pop %v1611
    %v1613 = vmul.f32 %v1611, %v1612
    %v1614 = vsub.f32 1.0, %v1613
    %v1615 = vmul.f32 %v1612, %v1614
    %v1616 = vadd.f32 %v1612, %v1615
    %vm1617 = vweird.f32 %v1611
    %vm1618 = vweird.f32 %v1612
    %vm1619 = vmor %vm1617, %vm1618
    %v1620 = vsel %vm1619, %v1612, %v1616
    %v1621 = vand.u32 2147483647, %v1611
    %vm1622 = vcmp.eq.f32.partialorder %v1621, 8.507059e+37
    %v1623 = vand.u32 %v1611, 2147483648
    %v1624 = vor.u32 1.1754944e-38, %v1623
    %v1625 = vsel %vm1622, %v1624, %v1620
    %v1626 = vmul.f32 1.0, %v1625
    %v1627 = vtanh.pop %v1587
    %v1628 = vxor.u32 %v1588, 2147483648
    %v1629 = vmul.f32 %v1628, 1.442695
    %v1630 = vpow.pop %v1629
    %v1631 = vadd.f32 %v1630, 1.0
    %v1632 = vrcp.pop %v1631
    %v1633 = vmul.f32 %v1631, %v1632
    %v1634 = vsub.f32 1.0, %v1633
    %v1635 = vmul.f32 %v1632, %v1634
    %v1636 = vadd.f32 %v1632, %v1635
    %vm1637 = vweird.f32 %v1631
    %vm1638 = vweird.f32 %v1632
    %vm1639 = vmor %vm1637, %vm1638
    %v1640 = vsel %vm1639, %v1632, %v1636
    %v1641 = vand.u32 2147483647, %v1631
    %vm1642 = vcmp.eq.f32.partialorder %v1641, 8.507059e+37
    %v1643 = vand.u32 %v1631, 2147483648
    %v1644 = vor.u32 1.1754944e-38, %v1643
    %v1645 = vsel %vm1642, %v1644, %v1640
    %v1646 = vmul.f32 1.0, %v1645
    %v1647 = vmul.f32 %v1626, %v1522
    %v1648 = vmul.f32 %v1607, %v1627
    %v1649 = vadd.f32 %v1647, %v1648
    %v1650 = vtanh.pop %v1649
    %v1651 = vmul.f32 %v1646, %v1650
    %v1652 = vpack.c.bf16 %v1651, %v1651
    %1653 = vst [vmem:[#allocation2] sm:$0xf] %v1652
    %1654 = vst [vmem:[#allocation3] sm:$0xff] %v1649
    // Predicated region
    $region42: #{tpu_custom_call.1} parent=1 // pred_check
      %p1655 = pneg %p47
    $region43: #{tpu_custom_call.1} parent=1 // pred_check_branch
      %1657 = sbr.rel (%p1655) target = $region45
    $region44: #{tpu_custom_call.1} parent=1 // pred_region
      %v1658 = vlaneseq
      %v1659 = vand.u32 %v1658, 127
      %vm1660 = vcmp.lt.s32.totalorder %v1659, 32
      %v1661 = vsel %vm1660, %v1649, 0.0
      %1662 = vadd.xlane.f32.xlu0 %v1661
      %v1663 = vpop.xlane.xlu0 %1662
      %v1664 = vmul.f32 %v1663, 0.03125
      %v1665 = vsub.f32 %v1649, %v1664
      %v1666 = vmul.f32 %v1665, %v1665
      %v1667 = vsel %vm1660, %v1666, 0.0
      %1668 = vadd.xlane.f32.xlu0 %v1667
      %v1669 = vpop.xlane.xlu0 %1668
      %v1670 = vmul.f32 %v1669, 0.03125
      %v1671 = vadd.f32 %v1670, 1e-05
      %v1672 = vrsqrt.pop %v1671
      %v1673 = vmul.f32 %v1672, %v1671
      %v1674 = vmul.f32 %v1673, %v1672
      %v1675 = vmul.f32 0.5, %v1674
      %v1676 = vsub.f32 1.5, %v1675
      %v1677 = vmul.f32 %v1672, %v1676
      %vm1678 = vweird.f32 %v1671
      %vm1679 = vweird.f32 %v1672
      %vm1680 = vmor %vm1678, %vm1679
      %v1681 = vsel %vm1680, %v1672, %v1677
      %v1682 = vmul.f32 %v1665, %v1681
      %v1683 = vld [vmem:[%s4] sm:$0x1]
      %v1685 = vperm.slane %v1683, 0
      %v1687 = vmul.f32 %v1682, %v1685
      %v1688 = vld [vmem:[%s5] sm:$0x1]
      %v1690 = vperm.slane %v1688, 0
      %v1692 = vadd.f32 %v1687, %v1690
      %v1693 = vld [vmem:[%s6] sm:$0xff]
      %v1694 = vld [vmem:[%s6 + $0x8] sm:$0xff]
      %v1695 = vld [vmem:[%s6 + $0x10] sm:$0xff]
      %v1696 = vld [vmem:[%s6 + $0x18] sm:$0xff]
      %v1697 = vld [vmem:[%s6 + $0x20] sm:$0xff]
      %v1698 = vld [vmem:[%s6 + $0x28] sm:$0xff]
      %v1699 = vld [vmem:[%s6 + $0x30] sm:$0xff]
      %v1700 = vld [vmem:[%s6 + $0x38] sm:$0xff]
      %v1701 = vld [vmem:[%s6 + $0x40] sm:$0xff]
      %v1702 = vld [vmem:[%s6 + $0x48] sm:$0xff]
      %v1703 = vld [vmem:[%s6 + $0x50] sm:$0xff]
      %v1704 = vld [vmem:[%s6 + $0x58] sm:$0xff]
      %v1705 = vld [vmem:[%s6 + $0x60] sm:$0xff]
      %v1706 = vld [vmem:[%s6 + $0x68] sm:$0xff]
      %v1707 = vld [vmem:[%s6 + $0x70] sm:$0xff]
      %v1708 = vld [vmem:[%s6 + $0x78] sm:$0xff]
      %v1709 = vld [vmem:[%s7] sm:$0x1]
      %v1711 = vperm.slane %v1709, 0
      %1713 = vmatpush.msra.mxu0 %v1708
      %1714 = vmatpush.msra.mxu0 %v1707
      %1715 = vmatpush.msra.mxu0 %v1706
      %1716 = vmatpush.msra.mxu0 %v1705
      %1717 = vmatpush.msra.mxu0 %v1704
      %1718 = vmatpush.msra.mxu0 %v1703
      %1719 = vmatpush.msra.mxu0 %v1702
      %1720 = vmatpush.msra.mxu0 %v1701
      %1721 = vmatpush.msra.mxu0 %v1700
      %1722 = vmatpush.msra.mxu0 %v1699
      %1723 = vmatpush.msra.mxu0 %v1698
      %1724 = vmatpush.msra.mxu0 %v1697
      %1725 = vmatpush.msra.mxu0 %v1696
      %1726 = vmatpush.msra.mxu0 %v1695
      %1727 = vmatpush.msra.mxu0 %v1694
      %1728 = vmatpush.msra.mxu0 %v1693
      %1729 = vmatmul.f32.gmra.mxu0 %v1692
      %v1730 = vpop.f32.mrf.mxu0
      %v1731 = vadd.f32 %v1711, %v1730
      %1732 = vdwg.mxu0
      %vm1733 = vcmask 39936
      %v1734 = vsel %vm1733, %v1731, -inf
      %1735 = vmax.xlane.f32.xlu0 %v1734
      %v1736 = vpop.xlane.xlu0 %1735
      %v1737 = vsub.f32 %v1731, %v1736
      %v1738 = vmul.f32 %v1737, 1.442695
      %v1739 = vpow.pop %v1738
      %v1740 = vsel %vm1733, %v1739, 0.0
      %1741 = vadd.xlane.f32.xlu0 %v1740
      %v1742 = vpop.xlane.xlu0 %1741
      %v1743 = vlog2.pop %v1742
      %v1744 = vmul.f32 %v1743, 0.6931472
      %v1745 = vsub.f32 %v1737, %v1744
      %1746 = vst.msk [vmem:[#allocation8] sm:$0xff] %vm1733, %v1745
    $region45: #{tpu_custom_call.1} parent=1 // pred_fallthru
      _
    // Predicated region
    $region46: #{tpu_custom_call.1} parent=1 // pred_check
      _
    $region47: #{tpu_custom_call.1} parent=1 // pred_check_branch
      %1748 = sbr.rel (0) target = $region49
    $region48: #{tpu_custom_call.1} parent=1 // pred_region
      %1750 = vsyncadd [#allocation7], 0
      %s1752 = sshll.u32 [#allocation8], 4
      %s1753 = int_to_ptr.vmem [resolvable:$true] %s1752
      %s1754 = sshll.u32 %s8, 4
      %s1755 = int_to_ptr.hbm [resolvable:$true] %s1754
      %1757 = dma.vmem_to_hbm [thread:$0]  %s1753, 128, %s1755, [#allocation7]
    $region49: #{tpu_custom_call.1} parent=1 // pred_fallthru
      _
    // Predicated region
    $region50: #{tpu_custom_call.1} parent=1 // pred_check
      _
    $region51: #{tpu_custom_call.1} parent=1 // pred_check_branch
      %1759 = sbr.rel (0) target = $region53
    $region52: #{tpu_custom_call.1} parent=1 // pred_region
      %1761 = dma.done [#allocation7], 128
    $region53: #{tpu_custom_call.1} parent=1 // pred_fallthru
      _
    %1762 = vsyncpa [#allocation6], 1
    %1763 = vsyncpa [#allocation7], 1

// kernel: tpu_custom_call.1
$region0: #{tpu_custom_call.1}
  #allocation0 [shape = 'u32[]', space=smem, size = 0x4, offset = 0x4, fixed_abs, tag = 'smem constant byte address 0x4 - core index']
  #allocation1 [shape = 'u32[72,128]{1,0:T(1,128)}', space=vmem, size = 0x9000, scoped, tag = 'internal scratch']
  #allocation2 [shape = 'bf16[8,128]{1,0:T(8,128)(2,1)}', space=vmem, size = 0x800, scoped, tag = 'scratch operand']
  #allocation3 [shape = 'f32[8,128]{1,0:T(8,128)}', space=vmem, size = 0x1000, scoped, tag = 'scratch operand']
  #allocation4 [shape = 'f32[64,512]{1,0:T(8,128)}', space=vmem, size = 0x20000, scoped, tag = 'scratch operand']
  %s0 = inlined_call_operand.vmem [shape: bf16[1,64,4], index: 0, kind: input, shape index: {}]
  %s1 = inlined_call_operand.vmem [shape: bf16[4,512], index: 1, kind: input, shape index: {}]
  %s2 = inlined_call_operand.vmem [shape: f32[1,512], index: 2, kind: input, shape index: {}]
  %s3 = inlined_call_operand.hbm [shape: bf16[128,512], index: 3, kind: input, shape index: {}]
  %s4 = inlined_call_operand.vmem [shape: f32[1,128], index: 4, kind: input, shape index: {}]
  %s5 = inlined_call_operand.vmem [shape: f32[1,128], index: 5, kind: input, shape index: {}]
  %s6 = inlined_call_operand.vmem [shape: f32[128,5], index: 6, kind: input, shape index: {}]
  %s7 = inlined_call_operand.vmem [shape: f32[1,5], index: 7, kind: input, shape index: {}]
  %s8 = inlined_call_operand.hbm [shape: f32[8,5], index: 8, kind: output, shape index: {}]
  %s9 = sld [smem:[#allocation0]]
  $region54: #{tpu_custom_call.1} parent=0
    _
  %s11 = ssub.s32 1, %s9
  %s12 = scalar_select 0, %s11, %s9
  $region1: #{tpu_custom_call.1} parent=0
    #allocation5 [shape = 'u8[131072]{0}', space=vmem, size = 0x20000, scoped, tag = 'input window, operand 3, single buffered']
    #allocation6 [shape = 's32[1]{0}', space=sflag, size = 0x4, scoped, tag = 'scoped memory for tpu_custom_call.1']
    #allocation7 [shape = 's32[1]{0}', space=sflag, size = 0x4, scoped, tag = 'scoped memory for tpu_custom_call.1']
    #allocation8 [shape = 'u8[4096]{0}', space=vmem, size = 0x1000, scoped, tag = 'output window, operand 0, single buffered']
    %13 = vsyncpa [#allocation6], 0
    %14 = vsyncpa [#allocation7], 0
    // Predicated region
    $region2: #{tpu_custom_call.1} parent=1 // pred_check
      _
    $region3: #{tpu_custom_call.1} parent=1 // pred_check_branch
      %16 = sbr.rel (0) target = $region5
    $region4: #{tpu_custom_call.1} parent=1 // pred_region
      _
    $region5: #{tpu_custom_call.1} parent=1 // pred_fallthru
      _
    // Predicated region
    $region6: #{tpu_custom_call.1} parent=1 // pred_check
      _
    $region7: #{tpu_custom_call.1} parent=1 // pred_check_branch
      %18 = sbr.rel (0) target = $region9
    $region8: #{tpu_custom_call.1} parent=1 // pred_region
      _
    $region9: #{tpu_custom_call.1} parent=1 // pred_fallthru
      _
    // Predicated region
    $region10: #{tpu_custom_call.1} parent=1 // pred_check
      _
    $region11: #{tpu_custom_call.1} parent=1 // pred_check_branch
      %20 = sbr.rel (0) target = $region13
    $region12: #{tpu_custom_call.1} parent=1 // pred_region
      _
    $region13: #{tpu_custom_call.1} parent=1 // pred_fallthru
      _
    // Predicated region
    $region14: #{tpu_custom_call.1} parent=1 // pred_check
      _
    $region15: #{tpu_custom_call.1} parent=1 // pred_check_branch
      %22 = sbr.rel (0) target = $region17
    $region16: #{tpu_custom_call.1} parent=1 // pred_region
      %24 = vsyncadd [#allocation6], 0
      %s25 = sshll.u32 %s3, 4
      %s26 = int_to_ptr.hbm [resolvable:$true] %s25
      %s27 = sshll.u32 [#allocation5], 4
      %s28 = int_to_ptr.vmem [resolvable:$true] %s27
      %33 = dma.hbm_to_vmem [thread:$0]  %s26, 4096, %s28, [#allocation6], 256, 256, 16
    $region17: #{tpu_custom_call.1} parent=1 // pred_fallthru
      _
    // Predicated region
    $region18: #{tpu_custom_call.1} parent=1 // pred_check
      _
    $region19: #{tpu_custom_call.1} parent=1 // pred_check_branch
      %35 = sbr.rel (0) target = $region21
    $region20: #{tpu_custom_call.1} parent=1 // pred_region
      _
    $region21: #{tpu_custom_call.1} parent=1 // pred_fallthru
      _
    // Predicated region
    $region22: #{tpu_custom_call.1} parent=1 // pred_check
      _
    $region23: #{tpu_custom_call.1} parent=1 // pred_check_branch
      %37 = sbr.rel (0) target = $region25
    $region24: #{tpu_custom_call.1} parent=1 // pred_region
      _
    $region25: #{tpu_custom_call.1} parent=1 // pred_fallthru
      _
    // Predicated region
    $region26: #{tpu_custom_call.1} parent=1 // pred_check
      _
    $region27: #{tpu_custom_call.1} parent=1 // pred_check_branch
      %39 = sbr.rel (0) target = $region29
    $region28: #{tpu_custom_call.1} parent=1 // pred_region
      _
    $region29: #{tpu_custom_call.1} parent=1 // pred_fallthru
      _
    // Predicated region
    $region30: #{tpu_custom_call.1} parent=1 // pred_check
      _
    $region31: #{tpu_custom_call.1} parent=1 // pred_check_branch
      %41 = sbr.rel (0) target = $region33
    $region32: #{tpu_custom_call.1} parent=1 // pred_region
      _
    $region33: #{tpu_custom_call.1} parent=1 // pred_fallthru
      _
    // Predicated region
    $region34: #{tpu_custom_call.1} parent=1 // pred_check
      _
    $region35: #{tpu_custom_call.1} parent=1 // pred_check_branch
      %43 = sbr.rel (0) target = $region37
    $region36: #{tpu_custom_call.1} parent=1 // pred_region
      %45 = dma.done [#allocation6], 4096
    $region37: #{tpu_custom_call.1} parent=1 // pred_fallthru
      _
    %p47 = scmp.eq.s32.totalorder 0, 0
    // Predicated region
    $region38: #{tpu_custom_call.1} parent=1 // pred_check
      %p48 = pneg %p47
    $region39: #{tpu_custom_call.1} parent=1 // pred_check_branch
      %50 = sbr.rel (%p48) target = $region41
    $region40: #{tpu_custom_call.1} parent=1 // pred_region
      %51 = vst [vmem:[#allocation2] sm:$0xf] 0
      %52 = vst [vmem:[#allocation3] sm:$0xff] 0.0
    $region41: #{tpu_custom_call.1} parent=1 // pred_fallthru
      _
    %v53 = vld [vmem:[%s0] sm:$0xf]
    %v54 = vld [vmem:[%s0 + $0x4] sm:$0xf]
    %v55 = vld [vmem:[%s0 + $0x8] sm:$0xf]
    %v56 = vld [vmem:[%s0 + $0xc] sm:$0xf]
    %v57 = vld [vmem:[%s0 + $0x10] sm:$0xf]
    %v58 = vld [vmem:[%s0 + $0x14] sm:$0xf]
    %v59 = vld [vmem:[%s0 + $0x18] sm:$0xf]
    %v60 = vld [vmem:[%s0 + $0x1c] sm:$0xf]
    %v61 = vunpack.c.l.bf16 %v53
    %v62 = vunpack.c.l.bf16 %v54
    %v63 = vunpack.c.l.bf16 %v55
    %v64 = vunpack.c.l.bf16 %v56
    %v65 = vunpack.c.l.bf16 %v57
    %v66 = vunpack.c.l.bf16 %v58
    %v67 = vunpack.c.l.bf16 %v59
    %v68 = vunpack.c.l.bf16 %v60
    %vm69 = vcmask 31744
    %v70 = vsel %vm69, %v61, 0.0
    %71 = vadd.xlane.f32.xlu0 %v70
    %v72 = vpop.xlane.xlu0 %71
    %v73 = vsel %vm69, %v62, 0.0
    %74 = vadd.xlane.f32.xlu0 %v73
    %v75 = vpop.xlane.xlu0 %74
    %v76 = vsel %vm69, %v63, 0.0
    %77 = vadd.xlane.f32.xlu0 %v76
    %v78 = vpop.xlane.xlu0 %77
    %v79 = vsel %vm69, %v64, 0.0
    %80 = vadd.xlane.f32.xlu0 %v79
    %v81 = vpop.xlane.xlu0 %80
    %v82 = vsel %vm69, %v65, 0.0
    %83 = vadd.xlane.f32.xlu0 %v82
    %v84 = vpop.xlane.xlu0 %83
    %v85 = vsel %vm69, %v66, 0.0
    %86 = vadd.xlane.f32.xlu0 %v85
    %v87 = vpop.xlane.xlu0 %86
    %v88 = vsel %vm69, %v67, 0.0
    %89 = vadd.xlane.f32.xlu0 %v88
    %v90 = vpop.xlane.xlu0 %89
    %v91 = vsel %vm69, %v68, 0.0
    %92 = vadd.xlane.f32.xlu0 %v91
    %v93 = vpop.xlane.xlu0 %92
    %v94 = vrcp.pop 4.0
    %v95 = vmul.f32 4.0, %v94
    %v96 = vsub.f32 1.0, %v95
    %v97 = vmul.f32 %v94, %v96
    %v98 = vadd.f32 %v94, %v97
    %vm99 = vweird.f32 %v94
    %v100 = vsel %vm99, %v94, %v98
    %v101 = vmul.f32 %v72, %v100
    %v102 = vmul.f32 %v75, %v100
    %v103 = vmul.f32 %v78, %v100
    %v104 = vmul.f32 %v81, %v100
    %v105 = vmul.f32 %v84, %v100
    %v106 = vmul.f32 %v87, %v100
    %v107 = vmul.f32 %v90, %v100
    %v108 = vmul.f32 %v93, %v100
    %v109 = vsub.f32 %v61, %v101
    %v110 = vsub.f32 %v62, %v102
    %v111 = vsub.f32 %v63, %v103
    %v112 = vsub.f32 %v64, %v104
    %v113 = vsub.f32 %v65, %v105
    %v114 = vsub.f32 %v66, %v106
    %v115 = vsub.f32 %v67, %v107
    %v116 = vsub.f32 %v68, %v108
    %v117 = vmul.f32 %v109, %v109
    %v118 = vmul.f32 %v110, %v110
    %v119 = vmul.f32 %v111, %v111
    %v120 = vmul.f32 %v112, %v112
    %v121 = vmul.f32 %v113, %v113
    %v122 = vmul.f32 %v114, %v114
    %v123 = vmul.f32 %v115, %v115
    %v124 = vmul.f32 %v116, %v116
    %v125 = vsel %vm69, %v117, 0.0
    %126 = vadd.xlane.f32.xlu0 %v125
    %v127 = vpop.xlane.xlu0 %126
    %v128 = vsel %vm69, %v118, 0.0
    %129 = vadd.xlane.f32.xlu0 %v128
    %v130 = vpop.xlane.xlu0 %129
    %v131 = vsel %vm69, %v119, 0.0
    %132 = vadd.xlane.f32.xlu0 %v131
    %v133 = vpop.xlane.xlu0 %132
    %v134 = vsel %vm69, %v120, 0.0
    %135 = vadd.xlane.f32.xlu0 %v134
    %v136 = vpop.xlane.xlu0 %135
    %v137 = vsel %vm69, %v121, 0.0
    %138 = vadd.xlane.f32.xlu0 %v137
    %v139 = vpop.xlane.xlu0 %138
    %v140 = vsel %vm69, %v122, 0.0
    %141 = vadd.xlane.f32.xlu0 %v140
    %v142 = vpop.xlane.xlu0 %141
    %v143 = vsel %vm69, %v123, 0.0
    %144 = vadd.xlane.f32.xlu0 %v143
    %v145 = vpop.xlane.xlu0 %144
    %v146 = vsel %vm69, %v124, 0.0
    %147 = vadd.xlane.f32.xlu0 %v146
    %v148 = vpop.xlane.xlu0 %147
    %v149 = vmul.f32 %v127, %v100
    %v150 = vmul.f32 %v130, %v100
    %v151 = vmul.f32 %v133, %v100
    %v152 = vmul.f32 %v136, %v100
    %v153 = vmul.f32 %v139, %v100
    %v154 = vmul.f32 %v142, %v100
    %v155 = vmul.f32 %v145, %v100
    %v156 = vmul.f32 %v148, %v100
    %v157 = vadd.f32 %v149, 1e-05
    %v158 = vadd.f32 %v150, 1e-05
    %v159 = vadd.f32 %v151, 1e-05
    %v160 = vadd.f32 %v152, 1e-05
    %v161 = vadd.f32 %v153, 1e-05
    %v162 = vadd.f32 %v154, 1e-05
    %v163 = vadd.f32 %v155, 1e-05
    %v164 = vadd.f32 %v156, 1e-05
    %v165 = vrsqrt.pop %v157
    %v166 = vmul.f32 %v165, %v157
    %v167 = vmul.f32 %v166, %v165
    %v168 = vmul.f32 0.5, %v167
    %v169 = vsub.f32 1.5, %v168
    %v170 = vmul.f32 %v165, %v169
    %vm171 = vweird.f32 %v157
    %vm172 = vweird.f32 %v165
    %vm173 = vmor %vm171, %vm172
    %v174 = vsel %vm173, %v165, %v170
    %v175 = vrsqrt.pop %v158
    %v176 = vmul.f32 %v175, %v158
    %v177 = vmul.f32 %v176, %v175
    %v178 = vmul.f32 0.5, %v177
    %v179 = vsub.f32 1.5, %v178
    %v180 = vmul.f32 %v175, %v179
    %vm181 = vweird.f32 %v158
    %vm182 = vweird.f32 %v175
    %vm183 = vmor %vm181, %vm182
    %v184 = vsel %vm183, %v175, %v180
    %v185 = vrsqrt.pop %v159
    %v186 = vmul.f32 %v185, %v159
    %v187 = vmul.f32 %v186, %v185
    %v188 = vmul.f32 0.5, %v187
    %v189 = vsub.f32 1.5, %v188
    %v190 = vmul.f32 %v185, %v189
    %vm191 = vweird.f32 %v159
    %vm192 = vweird.f32 %v185
    %vm193 = vmor %vm191, %vm192
    %v194 = vsel %vm193, %v185, %v190
    %v195 = vrsqrt.pop %v160
    %v196 = vmul.f32 %v195, %v160
    %v197 = vmul.f32 %v196, %v195
    %v198 = vmul.f32 0.5, %v197
    %v199 = vsub.f32 1.5, %v198
    %v200 = vmul.f32 %v195, %v199
    %vm201 = vweird.f32 %v160
    %vm202 = vweird.f32 %v195
    %vm203 = vmor %vm201, %vm202
    %v204 = vsel %vm203, %v195, %v200
    %v205 = vrsqrt.pop %v161
    %v206 = vmul.f32 %v205, %v161
    %v207 = vmul.f32 %v206, %v205
    %v208 = vmul.f32 0.5, %v207
    %v209 = vsub.f32 1.5, %v208
    %v210 = vmul.f32 %v205, %v209
    %vm211 = vweird.f32 %v161
    %vm212 = vweird.f32 %v205
    %vm213 = vmor %vm211, %vm212
    %v214 = vsel %vm213, %v205, %v210
    %v215 = vrsqrt.pop %v162
    %v216 = vmul.f32 %v215, %v162
    %v217 = vmul.f32 %v216, %v215
    %v218 = vmul.f32 0.5, %v217
    %v219 = vsub.f32 1.5, %v218
    %v220 = vmul.f32 %v215, %v219
    %vm221 = vweird.f32 %v162
    %vm222 = vweird.f32 %v215
    %vm223 = vmor %vm221, %vm222
    %v224 = vsel %vm223, %v215, %v220
    %v225 = vrsqrt.pop %v163
    %v226 = vmul.f32 %v225, %v163
    %v227 = vmul.f32 %v226, %v225
    %v228 = vmul.f32 0.5, %v227
    %v229 = vsub.f32 1.5, %v228
    %v230 = vmul.f32 %v225, %v229
    %vm231 = vweird.f32 %v163
    %vm232 = vweird.f32 %v225
    %vm233 = vmor %vm231, %vm232
    %v234 = vsel %vm233, %v225, %v230
    %v235 = vrsqrt.pop %v164
    %v236 = vmul.f32 %v235, %v164
    %v237 = vmul.f32 %v236, %v235
    %v238 = vmul.f32 0.5, %v237
    %v239 = vsub.f32 1.5, %v238
    %v240 = vmul.f32 %v235, %v239
    %vm241 = vweird.f32 %v164
    %vm242 = vweird.f32 %v235
    %vm243 = vmor %vm241, %vm242
    %v244 = vsel %vm243, %v235, %v240
    %v245 = vmul.f32 %v109, %v174
    %v246 = vmul.f32 %v110, %v184
    %v247 = vmul.f32 %v111, %v194
    %v248 = vmul.f32 %v112, %v204
    %v249 = vmul.f32 %v113, %v214
    %v250 = vmul.f32 %v114, %v224
    %v251 = vmul.f32 %v115, %v234
    %v252 = vmul.f32 %v116, %v244
    %v253 = vld [vmem:[%s1] sm:$0xff]
    %v254 = vpack.c.bf16 %v246, %v245
    %v255 = vpack.c.bf16 %v248, %v247
    %v256 = vpack.c.bf16 %v250, %v249
    %v257 = vpack.c.bf16 %v252, %v251
    %v258 = vld [vmem:[%s2] sm:$0xf]
    %v260 = vperm.slane %v258, 0
    %v261 = vperm.slane %v258, 1
    %v262 = vperm.slane %v258, 2
    %v263 = vperm.slane %v258, 3
    %269 = vst [vmem:[#allocation1] ss:$4 sm:$0xff] %v253
    %v270 = vld.sshfl [vmem:[#allocation1] sm:$0xff pattern:$0x73625140]
    %v271 = vld.sshfl [vmem:[#allocation1 + $0x8] sm:$0xff pattern:$0x73625140]
    %v272 = vld.sshfl [vmem:[#allocation1 + $0x10] sm:$0xff pattern:$0x73625140]
    %v273 = vld.sshfl [vmem:[#allocation1 + $0x18] sm:$0xff pattern:$0x73625140]
    %v275 = vsel %vm69, %v254, 0
    %v278 = vsel %vm69, %v255, 0
    %v281 = vsel %vm69, %v256, 0
    %v284 = vsel %vm69, %v257, 0
    %vm286 = vcmask 1041408
    %v287 = vsel %vm286, %v270, 0
    %v289 = vsel %vm286, %v271, 0
    %v291 = vsel %vm286, %v272, 0
    %v293 = vsel %vm286, %v273, 0
    %295 = vmatpush.bf16.msra.mxu0 0
    %296 = vmatpush.bf16.msra.mxu0 0
    %297 = vmatpush.bf16.msra.mxu0 0
    %298 = vmatpush.bf16.msra.mxu0 0
    %299 = vmatpush.bf16.msra.mxu0 0
    %300 = vmatpush.bf16.msra.mxu0 0
    %301 = vmatpush.bf16.msra.mxu0 0
    %302 = vmatpush.bf16.msra.mxu0 %v287
    %303 = vmatmul.bf16.gmra.mxu0 %v275
    %v304 = vpop.f32.mrf.mxu0
    %v305 = vadd.f32 %v260, %v304
    %v306 = vpop.f32.mrf.mxu0
    %v307 = vadd.f32 %v260, %v306
    %308 = vmatmul.bf16.gmra.mxu0 %v278
    %v309 = vpop.f32.mrf.mxu0
    %v310 = vadd.f32 %v260, %v309
    %v311 = vpop.f32.mrf.mxu0
    %v312 = vadd.f32 %v260, %v311
    %313 = vmatmul.bf16.gmra.mxu0 %v281
    %v314 = vpop.f32.mrf.mxu0
    %v315 = vadd.f32 %v260, %v314
    %v316 = vpop.f32.mrf.mxu0
    %v317 = vadd.f32 %v260, %v316
    %318 = vmatmul.bf16.gmra.mxu0 %v284
    %v319 = vpop.f32.mrf.mxu0
    %v320 = vadd.f32 %v260, %v319
    %v321 = vpop.f32.mrf.mxu0
    %v322 = vadd.f32 %v260, %v321
    %323 = vdwg.mxu0
    %324 = vmatpush.bf16.msra.mxu0 0
    %325 = vmatpush.bf16.msra.mxu0 0
    %326 = vmatpush.bf16.msra.mxu0 0
    %327 = vmatpush.bf16.msra.mxu0 0
    %328 = vmatpush.bf16.msra.mxu0 0
    %329 = vmatpush.bf16.msra.mxu0 0
    %330 = vmatpush.bf16.msra.mxu0 0
    %331 = vmatpush.bf16.msra.mxu0 %v289
    %332 = vmatmul.bf16.gmra.mxu0 %v275
    %v333 = vpop.f32.mrf.mxu0
    %v334 = vadd.f32 %v261, %v333
    %v335 = vpop.f32.mrf.mxu0
    %v336 = vadd.f32 %v261, %v335
    %337 = vmatmul.bf16.gmra.mxu0 %v278
    %v338 = vpop.f32.mrf.mxu0
    %v339 = vadd.f32 %v261, %v338
    %v340 = vpop.f32.mrf.mxu0
    %v341 = vadd.f32 %v261, %v340
    %342 = vmatmul.bf16.gmra.mxu0 %v281
    %v343 = vpop.f32.mrf.mxu0
    %v344 = vadd.f32 %v261, %v343
    %v345 = vpop.f32.mrf.mxu0
    %v346 = vadd.f32 %v261, %v345
    %347 = vmatmul.bf16.gmra.mxu0 %v284
    %v348 = vpop.f32.mrf.mxu0
    %v349 = vadd.f32 %v261, %v348
    %v350 = vpop.f32.mrf.mxu0
    %v351 = vadd.f32 %v261, %v350
    %352 = vdwg.mxu0
    %353 = vmatpush.bf16.msra.mxu0 0
    %354 = vmatpush.bf16.msra.mxu0 0
    %355 = vmatpush.bf16.msra.mxu0 0
    %356 = vmatpush.bf16.msra.mxu0 0
    %357 = vmatpush.bf16.msra.mxu0 0
    %358 = vmatpush.bf16.msra.mxu0 0
    %359 = vmatpush.bf16.msra.mxu0 0
    %360 = vmatpush.bf16.msra.mxu0 %v291
    %361 = vmatmul.bf16.gmra.mxu0 %v275
    %v362 = vpop.f32.mrf.mxu0
    %v363 = vadd.f32 %v262, %v362
    %v364 = vpop.f32.mrf.mxu0
    %v365 = vadd.f32 %v262, %v364
    %366 = vmatmul.bf16.gmra.mxu0 %v278
    %v367 = vpop.f32.mrf.mxu0
    %v368 = vadd.f32 %v262, %v367
    %v369 = vpop.f32.mrf.mxu0
    %v370 = vadd.f32 %v262, %v369
    %371 = vmatmul.bf16.gmra.mxu0 %v281
    %v372 = vpop.f32.mrf.mxu0
    %v373 = vadd.f32 %v262, %v372
    %v374 = vpop.f32.mrf.mxu0
    %v375 = vadd.f32 %v262, %v374
    %376 = vmatmul.bf16.gmra.mxu0 %v284
    %v377 = vpop.f32.mrf.mxu0
    %v378 = vadd.f32 %v262, %v377
    %v379 = vpop.f32.mrf.mxu0
    %v380 = vadd.f32 %v262, %v379
    %381 = vdwg.mxu0
    %382 = vmatpush.bf16.msra.mxu0 0
    %383 = vmatpush.bf16.msra.mxu0 0
    %384 = vmatpush.bf16.msra.mxu0 0
    %385 = vmatpush.bf16.msra.mxu0 0
    %386 = vmatpush.bf16.msra.mxu0 0
    %387 = vmatpush.bf16.msra.mxu0 0
    %388 = vmatpush.bf16.msra.mxu0 0
    %389 = vmatpush.bf16.msra.mxu0 %v293
    %390 = vmatmul.bf16.gmra.mxu0 %v275
    %v391 = vpop.f32.mrf.mxu0
    %v392 = vadd.f32 %v263, %v391
    %v393 = vpop.f32.mrf.mxu0
    %v394 = vadd.f32 %v263, %v393
    %395 = vmatmul.bf16.gmra.mxu0 %v278
    %v396 = vpop.f32.mrf.mxu0
    %v397 = vadd.f32 %v263, %v396
    %v398 = vpop.f32.mrf.mxu0
    %v399 = vadd.f32 %v263, %v398
    %400 = vmatmul.bf16.gmra.mxu0 %v281
    %v401 = vpop.f32.mrf.mxu0
    %v402 = vadd.f32 %v263, %v401
    %v403 = vpop.f32.mrf.mxu0
    %v404 = vadd.f32 %v263, %v403
    %405 = vmatmul.bf16.gmra.mxu0 %v284
    %v406 = vpop.f32.mrf.mxu0
    %v407 = vadd.f32 %v263, %v406
    %v408 = vpop.f32.mrf.mxu0
    %v409 = vadd.f32 %v263, %v408
    %410 = vdwg.mxu0
    %411 = vst [vmem:[#allocation4] sm:$0xff] %v305
    %412 = vst [vmem:[#allocation4 + $0x8] sm:$0xff] %v334
    %413 = vst [vmem:[#allocation4 + $0x10] sm:$0xff] %v363
    %414 = vst [vmem:[#allocation4 + $0x18] sm:$0xff] %v392
    %415 = vst [vmem:[#allocation4 + $0x20] sm:$0xff] %v307
    %416 = vst [vmem:[#allocation4 + $0x28] sm:$0xff] %v336
    %417 = vst [vmem:[#allocation4 + $0x30] sm:$0xff] %v365
    %418 = vst [vmem:[#allocation4 + $0x38] sm:$0xff] %v394
    %419 = vst [vmem:[#allocation4 + $0x40] sm:$0xff] %v310
    %420 = vst [vmem:[#allocation4 + $0x48] sm:$0xff] %v339
    %421 = vst [vmem:[#allocation4 + $0x50] sm:$0xff] %v368
    %422 = vst [vmem:[#allocation4 + $0x58] sm:$0xff] %v397
    %423 = vst [vmem:[#allocation4 + $0x60] sm:$0xff] %v312
    %424 = vst [vmem:[#allocation4 + $0x68] sm:$0xff] %v341
    %425 = vst [vmem:[#allocation4 + $0x70] sm:$0xff] %v370
    %426 = vst [vmem:[#allocation4 + $0x78] sm:$0xff] %v399
    %427 = vst [vmem:[#allocation4 + $0x80] sm:$0xff] %v315
    %428 = vst [vmem:[#allocation4 + $0x88] sm:$0xff] %v344
    %429 = vst [vmem:[#allocation4 + $0x90] sm:$0xff] %v373
    %430 = vst [vmem:[#allocation4 + $0x98] sm:$0xff] %v402
    %431 = vst [vmem:[#allocation4 + $0xa0] sm:$0xff] %v317
    %432 = vst [vmem:[#allocation4 + $0xa8] sm:$0xff] %v346
    %433 = vst [vmem:[#allocation4 + $0xb0] sm:$0xff] %v375
    %434 = vst [vmem:[#allocation4 + $0xb8] sm:$0xff] %v404
    %435 = vst [vmem:[#allocation4 + $0xc0] sm:$0xff] %v320
    %436 = vst [vmem:[#allocation4 + $0xc8] sm:$0xff] %v349
    %437 = vst [vmem:[#allocation4 + $0xd0] sm:$0xff] %v378
    %438 = vst [vmem:[#allocation4 + $0xd8] sm:$0xff] %v407
    %439 = vst [vmem:[#allocation4 + $0xe0] sm:$0xff] %v322
    %440 = vst [vmem:[#allocation4 + $0xe8] sm:$0xff] %v351
    %441 = vst [vmem:[#allocation4 + $0xf0] sm:$0xff] %v380
    %442 = vst [vmem:[#allocation4 + $0xf8] sm:$0xff] %v409
    %v443 = vld [vmem:[#allocation2] sm:$0xf]
    %v444 = vld [vmem:[#allocation3] sm:$0xff]
    %s445 = smul.u32 0, 4
    %s446 = smul.addr %s445, 8
    %s447 = scalar_lea.vmem [#allocation4], %s446
    %v448 = vld [vmem:[%s447] sm:$0xff]
    %v449 = vld [vmem:[%s447 + $0x8] sm:$0xff]
    %v450 = vld [vmem:[%s447 + $0x10] sm:$0xff]
    %v451 = vld [vmem:[%s447 + $0x18] sm:$0xff]
    %v452 = vld [vmem:[#allocation5] sm:$0xff]
    %v453 = vld [vmem:[#allocation5 + $0x8] sm:$0xff]
    %v454 = vld [vmem:[#allocation5 + $0x10] sm:$0xff]
    %v455 = vld [vmem:[#allocation5 + $0x18] sm:$0xff]
    %v456 = vld [vmem:[#allocation5 + $0x20] sm:$0xff]
    %v457 = vld [vmem:[#allocation5 + $0x28] sm:$0xff]
    %v458 = vld [vmem:[#allocation5 + $0x30] sm:$0xff]
    %v459 = vld [vmem:[#allocation5 + $0x38] sm:$0xff]
    %v460 = vld [vmem:[#allocation5 + $0x40] sm:$0xff]
    %v461 = vld [vmem:[#allocation5 + $0x48] sm:$0xff]
    %v462 = vld [vmem:[#allocation5 + $0x50] sm:$0xff]
    %v463 = vld [vmem:[#allocation5 + $0x58] sm:$0xff]
    %v464 = vld [vmem:[#allocation5 + $0x60] sm:$0xff]
    %v465 = vld [vmem:[#allocation5 + $0x68] sm:$0xff]
    %v466 = vld [vmem:[#allocation5 + $0x70] sm:$0xff]
    %v467 = vld [vmem:[#allocation5 + $0x78] sm:$0xff]
    %v468 = vld [vmem:[#allocation5 + $0x80] sm:$0xff]
    %v469 = vld [vmem:[#allocation5 + $0x88] sm:$0xff]
    %v470 = vld [vmem:[#allocation5 + $0x90] sm:$0xff]
    %v471 = vld [vmem:[#allocation5 + $0x98] sm:$0xff]
    %v472 = vld [vmem:[#allocation5 + $0xa0] sm:$0xff]
    %v473 = vld [vmem:[#allocation5 + $0xa8] sm:$0xff]
    %v474 = vld [vmem:[#allocation5 + $0xb0] sm:$0xff]
    %v475 = vld [vmem:[#allocation5 + $0xb8] sm:$0xff]
    %v476 = vld [vmem:[#allocation5 + $0xc0] sm:$0xff]
    %v477 = vld [vmem:[#allocation5 + $0xc8] sm:$0xff]
    %v478 = vld [vmem:[#allocation5 + $0xd0] sm:$0xff]
    %v479 = vld [vmem:[#allocation5 + $0xd8] sm:$0xff]
    %v480 = vld [vmem:[#allocation5 + $0xe0] sm:$0xff]
    %v481 = vld [vmem:[#allocation5 + $0xe8] sm:$0xff]
    %v482 = vld [vmem:[#allocation5 + $0xf0] sm:$0xff]
    %v483 = vld [vmem:[#allocation5 + $0xf8] sm:$0xff]
    %v516 = vunpack.c.l.b16 %v452
    %v517 = vunpack.c.h.b16 %v452
    %v518 = vunpack.c.l.b16 %v453
    %v519 = vunpack.c.h.b16 %v453
    %v520 = vunpack.c.l.b16 %v454
    %v521 = vunpack.c.h.b16 %v454
    %v522 = vunpack.c.l.b16 %v455
    %v523 = vunpack.c.h.b16 %v455
    %v524 = vunpack.c.l.b16 %v456
    %v525 = vunpack.c.h.b16 %v456
    %v526 = vunpack.c.l.b16 %v457
    %v527 = vunpack.c.h.b16 %v457
    %v528 = vunpack.c.l.b16 %v458
    %v529 = vunpack.c.h.b16 %v458
    %v530 = vunpack.c.l.b16 %v459
    %v531 = vunpack.c.h.b16 %v459
    %v532 = vunpack.c.l.b16 %v460
    %v533 = vunpack.c.h.b16 %v460
    %v534 = vunpack.c.l.b16 %v461
    %v535 = vunpack.c.h.b16 %v461
    %v536 = vunpack.c.l.b16 %v462
    %v537 = vunpack.c.h.b16 %v462
    %v538 = vunpack.c.l.b16 %v463
    %v539 = vunpack.c.h.b16 %v463
    %v540 = vunpack.c.l.b16 %v464
    %v541 = vunpack.c.h.b16 %v464
    %v542 = vunpack.c.l.b16 %v465
    %v543 = vunpack.c.h.b16 %v465
    %v544 = vunpack.c.l.b16 %v466
    %v545 = vunpack.c.h.b16 %v466
    %v546 = vunpack.c.l.b16 %v467
    %v547 = vunpack.c.h.b16 %v467
    %v548 = vunpack.c.l.b16 %v468
    %v549 = vunpack.c.h.b16 %v468
    %v550 = vunpack.c.l.b16 %v469
    %v551 = vunpack.c.h.b16 %v469
    %v552 = vunpack.c.l.b16 %v470
    %v553 = vunpack.c.h.b16 %v470
    %v554 = vunpack.c.l.b16 %v471
    %v555 = vunpack.c.h.b16 %v471
    %v556 = vunpack.c.l.b16 %v472
    %v557 = vunpack.c.h.b16 %v472
    %v558 = vunpack.c.l.b16 %v473
    %v559 = vunpack.c.h.b16 %v473
    %v560 = vunpack.c.l.b16 %v474
    %v561 = vunpack.c.h.b16 %v474
    %v562 = vunpack.c.l.b16 %v475
    %v563 = vunpack.c.h.b16 %v475
    %v564 = vunpack.c.l.b16 %v476
    %v565 = vunpack.c.h.b16 %v476
    %v566 = vunpack.c.l.b16 %v477
    %v567 = vunpack.c.h.b16 %v477
    %v568 = vunpack.c.l.b16 %v478
    %v569 = vunpack.c.h.b16 %v478
    %v570 = vunpack.c.l.b16 %v479
    %v571 = vunpack.c.h.b16 %v479
    %v572 = vunpack.c.l.b16 %v480
    %v573 = vunpack.c.h.b16 %v480
    %v574 = vunpack.c.l.b16 %v481
    %v575 = vunpack.c.h.b16 %v481
    %v576 = vunpack.c.l.b16 %v482
    %v577 = vunpack.c.h.b16 %v482
    %v578 = vunpack.c.l.b16 %v483
    %v579 = vunpack.c.h.b16 %v483
    %v580 = vpack.c.b16 %v520, %v516
    %v581 = vpack.c.b16 %v521, %v517
    %v582 = vpack.c.b16 %v522, %v518
    %v583 = vpack.c.b16 %v523, %v519
    %v584 = vpack.c.b16 %v528, %v524
    %v585 = vpack.c.b16 %v529, %v525
    %v586 = vpack.c.b16 %v530, %v526
    %v587 = vpack.c.b16 %v531, %v527
    %v588 = vpack.c.b16 %v536, %v532
    %v589 = vpack.c.b16 %v537, %v533
    %v590 = vpack.c.b16 %v538, %v534
    %v591 = vpack.c.b16 %v539, %v535
    %v592 = vpack.c.b16 %v544, %v540
    %v593 = vpack.c.b16 %v545, %v541
    %v594 = vpack.c.b16 %v546, %v542
    %v595 = vpack.c.b16 %v547, %v543
    %v596 = vpack.c.b16 %v552, %v548
    %v597 = vpack.c.b16 %v553, %v549
    %v598 = vpack.c.b16 %v554, %v550
    %v599 = vpack.c.b16 %v555, %v551
    %v600 = vpack.c.b16 %v560, %v556
    %v601 = vpack.c.b16 %v561, %v557
    %v602 = vpack.c.b16 %v562, %v558
    %v603 = vpack.c.b16 %v563, %v559
    %v604 = vpack.c.b16 %v568, %v564
    %v605 = vpack.c.b16 %v569, %v565
    %v606 = vpack.c.b16 %v570, %v566
    %v607 = vpack.c.b16 %v571, %v567
    %v608 = vpack.c.b16 %v576, %v572
    %v609 = vpack.c.b16 %v577, %v573
    %v610 = vpack.c.b16 %v578, %v574
    %v611 = vpack.c.b16 %v579, %v575
    %644 = vmatpush.bf16.msra.mxu0 %v608
    %645 = vmatpush.bf16.msra.mxu0 %v604
    %646 = vmatpush.bf16.msra.mxu0 %v600
    %647 = vmatpush.bf16.msra.mxu0 %v596
    %648 = vmatpush.bf16.msra.mxu0 %v592
    %649 = vmatpush.bf16.msra.mxu0 %v588
    %650 = vmatpush.bf16.msra.mxu0 %v584
    %651 = vmatpush.bf16.msra.mxu0 %v580
    %652 = vmatmul.bf16.gmra.mxu0 %v443
    %v653 = vpop.f32.mrf.mxu0
    %v654 = vadd.f32 0.0, %v653
    %v655 = vpop.f32.mrf.mxu0
    %656 = vdwg.mxu0
    %657 = vmatpush.bf16.msra.mxu0 %v609
    %658 = vmatpush.bf16.msra.mxu0 %v605
    %659 = vmatpush.bf16.msra.mxu0 %v601
    %660 = vmatpush.bf16.msra.mxu0 %v597
    %661 = vmatpush.bf16.msra.mxu0 %v593
    %662 = vmatpush.bf16.msra.mxu0 %v589
    %663 = vmatpush.bf16.msra.mxu0 %v585
    %664 = vmatpush.bf16.msra.mxu0 %v581
    %665 = vmatmul.bf16.gmra.mxu0 %v443
    %v666 = vpop.f32.mrf.mxu0
    %v667 = vadd.f32 0.0, %v666
    %v668 = vpop.f32.mrf.mxu0
    %669 = vdwg.mxu0
    %670 = vmatpush.bf16.msra.mxu0 %v610
    %671 = vmatpush.bf16.msra.mxu0 %v606
    %672 = vmatpush.bf16.msra.mxu0 %v602
    %673 = vmatpush.bf16.msra.mxu0 %v598
    %674 = vmatpush.bf16.msra.mxu0 %v594
    %675 = vmatpush.bf16.msra.mxu0 %v590
    %676 = vmatpush.bf16.msra.mxu0 %v586
    %677 = vmatpush.bf16.msra.mxu0 %v582
    %678 = vmatmul.bf16.gmra.mxu0 %v443
    %v679 = vpop.f32.mrf.mxu0
    %v680 = vadd.f32 0.0, %v679
    %v681 = vpop.f32.mrf.mxu0
    %682 = vdwg.mxu0
    %683 = vmatpush.bf16.msra.mxu0 %v611
    %684 = vmatpush.bf16.msra.mxu0 %v607
    %685 = vmatpush.bf16.msra.mxu0 %v603
    %686 = vmatpush.bf16.msra.mxu0 %v599
    %687 = vmatpush.bf16.msra.mxu0 %v595
    %688 = vmatpush.bf16.msra.mxu0 %v591
    %689 = vmatpush.bf16.msra.mxu0 %v587
    %690 = vmatpush.bf16.msra.mxu0 %v583
    %691 = vmatmul.bf16.gmra.mxu0 %v443
    %v692 = vpop.f32.mrf.mxu0
    %v693 = vadd.f32 0.0, %v692
    %v694 = vpop.f32.mrf.mxu0
    %695 = vdwg.mxu0
    %v696 = vadd.f32 %v448, %v654
    %v697 = vadd.f32 %v449, %v667
    %v698 = vadd.f32 %v450, %v680
    %v699 = vadd.f32 %v451, %v693
    %v700 = vxor.u32 %v696, 2147483648
    %v701 = vmul.f32 %v700, 1.442695
    %v702 = vpow.pop %v701
    %v703 = vadd.f32 %v702, 1.0
    %v704 = vrcp.pop %v703
    %v705 = vmul.f32 %v703, %v704
    %v706 = vsub.f32 1.0, %v705
    %v707 = vmul.f32 %v704, %v706
    %v708 = vadd.f32 %v704, %v707
    %vm709 = vweird.f32 %v703
    %vm710 = vweird.f32 %v704
    %vm711 = vmor %vm709, %vm710
    %v712 = vsel %vm711, %v704, %v708
    %v713 = vand.u32 2147483647, %v703
    %vm714 = vcmp.eq.f32.partialorder %v713, 8.507059e+37
    %v715 = vand.u32 %v703, 2147483648
    %v716 = vor.u32 1.1754944e-38, %v715
    %v717 = vsel %vm714, %v716, %v712
    %v718 = vmul.f32 1.0, %v717
    %v719 = vxor.u32 %v697, 2147483648
    %v720 = vmul.f32 %v719, 1.442695
    %v721 = vpow.pop %v720
    %v722 = vadd.f32 %v721, 1.0
    %v723 = vrcp.pop %v722
    %v724 = vmul.f32 %v722, %v723
    %v725 = vsub.f32 1.0, %v724
    %v726 = vmul.f32 %v723, %v725
    %v727 = vadd.f32 %v723, %v726
    %vm728 = vweird.f32 %v722
    %vm729 = vweird.f32 %v723
    %vm730 = vmor %vm728, %vm729
    %v731 = vsel %vm730, %v723, %v727
    %v732 = vand.u32 2147483647, %v722
    %vm733 = vcmp.eq.f32.partialorder %v732, 8.507059e+37
    %v734 = vand.u32 %v722, 2147483648
    %v735 = vor.u32 1.1754944e-38, %v734
    %v736 = vsel %vm733, %v735, %v731
    %v737 = vmul.f32 1.0, %v736
    %v738 = vtanh.pop %v698
    %v739 = vxor.u32 %v699, 2147483648
    %v740 = vmul.f32 %v739, 1.442695
    %v741 = vpow.pop %v740
    %v742 = vadd.f32 %v741, 1.0
    %v743 = vrcp.pop %v742
    %v744 = vmul.f32 %v742, %v743
    %v745 = vsub.f32 1.0, %v744
    %v746 = vmul.f32 %v743, %v745
    %v747 = vadd.f32 %v743, %v746
    %vm748 = vweird.f32 %v742
    %vm749 = vweird.f32 %v743
    %vm750 = vmor %vm748, %vm749
    %v751 = vsel %vm750, %v743, %v747
    %v752 = vand.u32 2147483647, %v742
    %vm753 = vcmp.eq.f32.partialorder %v752, 8.507059e+37
    %v754 = vand.u32 %v742, 2147483648
    %v755 = vor.u32 1.1754944e-38, %v754
    %v756 = vsel %vm753, %v755, %v751
    %v757 = vmul.f32 1.0, %v756
    %v758 = vmul.f32 %v737, %v444
    %v759 = vmul.f32 %v718, %v738
    %v760 = vadd.f32 %v758, %v759
    %v761 = vtanh.pop %v760
    %v762 = vmul.f32 %v757, %v761
    %v763 = vpack.c.bf16 %v762, %v762
    %s764 = smul.u32 1, 4
    %s765 = smul.addr %s764, 8
    %s766 = scalar_lea.vmem [#allocation4], %s765
    %v767 = vld [vmem:[%s766] sm:$0xff]
    %v768 = vld [vmem:[%s766 + $0x8] sm:$0xff]
    %v769 = vld [vmem:[%s766 + $0x10] sm:$0xff]
    %v770 = vld [vmem:[%s766 + $0x18] sm:$0xff]
    %771 = vmatpush.bf16.msra.mxu0 %v608
    %772 = vmatpush.bf16.msra.mxu0 %v604
    %773 = vmatpush.bf16.msra.mxu0 %v600
    %774 = vmatpush.bf16.msra.mxu0 %v596
    %775 = vmatpush.bf16.msra.mxu0 %v592
    %776 = vmatpush.bf16.msra.mxu0 %v588
    %777 = vmatpush.bf16.msra.mxu0 %v584
    %778 = vmatpush.bf16.msra.mxu0 %v580
    %779 = vmatmul.bf16.gmra.mxu0 %v763
    %v780 = vpop.f32.mrf.mxu0
    %v781 = vadd.f32 0.0, %v780
    %v782 = vpop.f32.mrf.mxu0
    %783 = vdwg.mxu0
    %784 = vmatpush.bf16.msra.mxu0 %v609
    %785 = vmatpush.bf16.msra.mxu0 %v605
    %786 = vmatpush.bf16.msra.mxu0 %v601
    %787 = vmatpush.bf16.msra.mxu0 %v597
    %788 = vmatpush.bf16.msra.mxu0 %v593
    %789 = vmatpush.bf16.msra.mxu0 %v589
    %790 = vmatpush.bf16.msra.mxu0 %v585
    %791 = vmatpush.bf16.msra.mxu0 %v581
    %792 = vmatmul.bf16.gmra.mxu0 %v763
    %v793 = vpop.f32.mrf.mxu0
    %v794 = vadd.f32 0.0, %v793
    %v795 = vpop.f32.mrf.mxu0
    %796 = vdwg.mxu0
    %797 = vmatpush.bf16.msra.mxu0 %v610
    %798 = vmatpush.bf16.msra.mxu0 %v606
    %799 = vmatpush.bf16.msra.mxu0 %v602
    %800 = vmatpush.bf16.msra.mxu0 %v598
    %801 = vmatpush.bf16.msra.mxu0 %v594
    %802 = vmatpush.bf16.msra.mxu0 %v590
    %803 = vmatpush.bf16.msra.mxu0 %v586
    %804 = vmatpush.bf16.msra.mxu0 %v582
    %805 = vmatmul.bf16.gmra.mxu0 %v763
    %v806 = vpop.f32.mrf.mxu0
    %v807 = vadd.f32 0.0, %v806
    %v808 = vpop.f32.mrf.mxu0
    %809 = vdwg.mxu0
    %810 = vmatpush.bf16.msra.mxu0 %v611
    %811 = vmatpush.bf16.msra.mxu0 %v607
    %812 = vmatpush.bf16.msra.mxu0 %v603
    %813 = vmatpush.bf16.msra.mxu0 %v599
    %814 = vmatpush.bf16.msra.mxu0 %v595
    %815 = vmatpush.bf16.msra.mxu0 %v591
    %816 = vmatpush.bf16.msra.mxu0 %v587
    %817 = vmatpush.bf16.msra.mxu0 %v583
    %818 = vmatmul.bf16.gmra.mxu0 %v763
    %v819 = vpop.f32.mrf.mxu0
    %v820 = vadd.f32 0.0, %v819
    %v821 = vpop.f32.mrf.mxu0
    %822 = vdwg.mxu0
    %v823 = vadd.f32 %v767, %v781
    %v824 = vadd.f32 %v768, %v794
    %v825 = vadd.f32 %v769, %v807
    %v826 = vadd.f32 %v770, %v820
    %v827 = vxor.u32 %v823, 2147483648
    %v828 = vmul.f32 %v827, 1.442695
    %v829 = vpow.pop %v828
    %v830 = vadd.f32 %v829, 1.0
    %v831 = vrcp.pop %v830
    %v832 = vmul.f32 %v830, %v831
    %v833 = vsub.f32 1.0, %v832
    %v834 = vmul.f32 %v831, %v833
    %v835 = vadd.f32 %v831, %v834
    %vm836 = vweird.f32 %v830
    %vm837 = vweird.f32 %v831
    %vm838 = vmor %vm836, %vm837
    %v839 = vsel %vm838, %v831, %v835
    %v840 = vand.u32 2147483647, %v830
    %vm841 = vcmp.eq.f32.partialorder %v840, 8.507059e+37
    %v842 = vand.u32 %v830, 2147483648
    %v843 = vor.u32 1.1754944e-38, %v842
    %v844 = vsel %vm841, %v843, %v839
    %v845 = vmul.f32 1.0, %v844
    %v846 = vxor.u32 %v824, 2147483648
    %v847 = vmul.f32 %v846, 1.442695
    %v848 = vpow.pop %v847
    %v849 = vadd.f32 %v848, 1.0
    %v850 = vrcp.pop %v849
    %v851 = vmul.f32 %v849, %v850
    %v852 = vsub.f32 1.0, %v851
    %v853 = vmul.f32 %v850, %v852
    %v854 = vadd.f32 %v850, %v853
    %vm855 = vweird.f32 %v849
    %vm856 = vweird.f32 %v850
    %vm857 = vmor %vm855, %vm856
    %v858 = vsel %vm857, %v850, %v854
    %v859 = vand.u32 2147483647, %v849
    %vm860 = vcmp.eq.f32.partialorder %v859, 8.507059e+37
    %v861 = vand.u32 %v849, 2147483648
    %v862 = vor.u32 1.1754944e-38, %v861
    %v863 = vsel %vm860, %v862, %v858
    %v864 = vmul.f32 1.0, %v863
    %v865 = vtanh.pop %v825
    %v866 = vxor.u32 %v826, 2147483648
    %v867 = vmul.f32 %v866, 1.442695
    %v868 = vpow.pop %v867
    %v869 = vadd.f32 %v868, 1.0
    %v870 = vrcp.pop %v869
    %v871 = vmul.f32 %v869, %v870
    %v872 = vsub.f32 1.0, %v871
    %v873 = vmul.f32 %v870, %v872
    %v874 = vadd.f32 %v870, %v873
    %vm875 = vweird.f32 %v869
    %vm876 = vweird.f32 %v870
    %vm877 = vmor %vm875, %vm876
    %v878 = vsel %vm877, %v870, %v874
    %v879 = vand.u32 2147483647, %v869
    %vm880 = vcmp.eq.f32.partialorder %v879, 8.507059e+37
    %v881 = vand.u32 %v869, 2147483648
    %v882 = vor.u32 1.1754944e-38, %v881
    %v883 = vsel %vm880, %v882, %v878
    %v884 = vmul.f32 1.0, %v883
    %v885 = vmul.f32 %v864, %v760
    %v886 = vmul.f32 %v845, %v865
    %v887 = vadd.f32 %v885, %v886
    %v888 = vtanh.pop %v887
    %v889 = vmul.f32 %v884, %v888
    %v890 = vpack.c.bf16 %v889, %v889
    %s891 = smul.u32 2, 4
    %s892 = smul.addr %s891, 8
    %s893 = scalar_lea.vmem [#allocation4], %s892
    %v894 = vld [vmem:[%s893] sm:$0xff]
    %v895 = vld [vmem:[%s893 + $0x8] sm:$0xff]
    %v896 = vld [vmem:[%s893 + $0x10] sm:$0xff]
    %v897 = vld [vmem:[%s893 + $0x18] sm:$0xff]
    %898 = vmatpush.bf16.msra.mxu0 %v608
    %899 = vmatpush.bf16.msra.mxu0 %v604
    %900 = vmatpush.bf16.msra.mxu0 %v600
    %901 = vmatpush.bf16.msra.mxu0 %v596
    %902 = vmatpush.bf16.msra.mxu0 %v592
    %903 = vmatpush.bf16.msra.mxu0 %v588
    %904 = vmatpush.bf16.msra.mxu0 %v584
    %905 = vmatpush.bf16.msra.mxu0 %v580
    %906 = vmatmul.bf16.gmra.mxu0 %v890
    %v907 = vpop.f32.mrf.mxu0
    %v908 = vadd.f32 0.0, %v907
    %v909 = vpop.f32.mrf.mxu0
    %910 = vdwg.mxu0
    %911 = vmatpush.bf16.msra.mxu0 %v609
    %912 = vmatpush.bf16.msra.mxu0 %v605
    %913 = vmatpush.bf16.msra.mxu0 %v601
    %914 = vmatpush.bf16.msra.mxu0 %v597
    %915 = vmatpush.bf16.msra.mxu0 %v593
    %916 = vmatpush.bf16.msra.mxu0 %v589
    %917 = vmatpush.bf16.msra.mxu0 %v585
    %918 = vmatpush.bf16.msra.mxu0 %v581
    %919 = vmatmul.bf16.gmra.mxu0 %v890
    %v920 = vpop.f32.mrf.mxu0
    %v921 = vadd.f32 0.0, %v920
    %v922 = vpop.f32.mrf.mxu0
    %923 = vdwg.mxu0
    %924 = vmatpush.bf16.msra.mxu0 %v610
    %925 = vmatpush.bf16.msra.mxu0 %v606
    %926 = vmatpush.bf16.msra.mxu0 %v602
    %927 = vmatpush.bf16.msra.mxu0 %v598
    %928 = vmatpush.bf16.msra.mxu0 %v594
    %929 = vmatpush.bf16.msra.mxu0 %v590
    %930 = vmatpush.bf16.msra.mxu0 %v586
    %931 = vmatpush.bf16.msra.mxu0 %v582
    %932 = vmatmul.bf16.gmra.mxu0 %v890
    %v933 = vpop.f32.mrf.mxu0
    %v934 = vadd.f32 0.0, %v933
    %v935 = vpop.f32.mrf.mxu0
    %936 = vdwg.mxu0
    %937 = vmatpush.bf16.msra.mxu0 %v611
    %938 = vmatpush.bf16.msra.mxu0 %v607
    %939 = vmatpush.bf16.msra.mxu0 %v603
    %940 = vmatpush.bf16.msra.mxu0 %v599
    %941 = vmatpush.bf16.msra.mxu0 %v595
    %942 = vmatpush.bf16.msra.mxu0 %v591
    %943 = vmatpush.bf16.msra.mxu0 %v587
    %944 = vmatpush.bf16.msra.mxu0 %v583
    %945 = vmatmul.bf16.gmra.mxu0 %v890
    %v946 = vpop.f32.mrf.mxu0
    %v947 = vadd.f32 0.0, %v946
    %v948 = vpop.f32.mrf.mxu0
    %949 = vdwg.mxu0
    %v950 = vadd.f32 %v894, %v908
    %v951 = vadd.f32 %v895, %v921
    %v952 = vadd.f32 %v896, %v934
    %v953 = vadd.f32 %v897, %v947
    %v954 = vxor.u32 %v950, 2147483648
    %v955 = vmul.f32 %v954, 1.442695
    %v956 = vpow.pop %v955
    %v957 = vadd.f32 %v956, 1.0
    %v958 = vrcp.pop %v957
    %v959 = vmul.f32 %v957, %v958
    %v960 = vsub.f32 1.0, %v959
    %v961 = vmul.f32 %v958, %v960
    %v962 = vadd.f32 %v958, %v961
    %vm963 = vweird.f32 %v957
    %vm964 = vweird.f32 %v958
    %vm965 = vmor %vm963, %vm964
    %v966 = vsel %vm965, %v958, %v962
    %v967 = vand.u32 2147483647, %v957
    %vm968 = vcmp.eq.f32.partialorder %v967, 8.507059e+37
    %v969 = vand.u32 %v957, 2147483648
    %v970 = vor.u32 1.1754944e-38, %v969
    %v971 = vsel %vm968, %v970, %v966
    %v972 = vmul.f32 1.0, %v971
    %v973 = vxor.u32 %v951, 2147483648
    %v974 = vmul.f32 %v973, 1.442695
    %v975 = vpow.pop %v974
    %v976 = vadd.f32 %v975, 1.0
    %v977 = vrcp.pop %v976
    %v978 = vmul.f32 %v976, %v977
    %v979 = vsub.f32 1.0, %v978
    %v980 = vmul.f32 %v977, %v979
    %v981 = vadd.f32 %v977, %v980
    %vm982 = vweird.f32 %v976
    %vm983 = vweird.f32 %v977
    %vm984 = vmor %vm982, %vm983
    %v985 = vsel %vm984, %v977, %v981
    %v986 = vand.u32 2147483647, %v976
    %vm987 = vcmp.eq.f32.partialorder %v986, 8.507059e+37
    %v988 = vand.u32 %v976, 2147483648
    %v989 = vor.u32 1.1754944e-38, %v988
    %v990 = vsel %vm987, %v989, %v985
    %v991 = vmul.f32 1.0, %v990
    %v992 = vtanh.pop %v952
    %v993 = vxor.u32 %v953, 2147483648
    %v994 = vmul.f32 %v993, 1.442695
    %v995 = vpow.pop %v994
    %v996 = vadd.f32 %v995, 1.0
    %v997 = vrcp.pop %v996
    %v998 = vmul.f32 %v996, %v997
    %v999 = vsub.f32 1.0, %v998
    %v1000 = vmul.f32 %v997, %v999
    %v1001 = vadd.f32 %v997, %v1000
    %vm1002 = vweird.f32 %v996
    %vm1003 = vweird.f32 %v997
    %vm1004 = vmor %vm1002, %vm1003
    %v1005 = vsel %vm1004, %v997, %v1001
    %v1006 = vand.u32 2147483647, %v996
    %vm1007 = vcmp.eq.f32.partialorder %v1006, 8.507059e+37
    %v1008 = vand.u32 %v996, 2147483648
    %v1009 = vor.u32 1.1754944e-38, %v1008
    %v1010 = vsel %vm1007, %v1009, %v1005
    %v1011 = vmul.f32 1.0, %v1010
    %v1012 = vmul.f32 %v991, %v887
    %v1013 = vmul.f32 %v972, %v992
    %v1014 = vadd.f32 %v1012, %v1013
    %v1015 = vtanh.pop %v1014
    %v1016 = vmul.f32 %v1011, %v1015
    %v1017 = vpack.c.bf16 %v1016, %v1016
    %s1018 = smul.u32 3, 4
    %s1019 = smul.addr %s1018, 8
    %s1020 = scalar_lea.vmem [#allocation4], %s1019
    %v1021 = vld [vmem:[%s1020] sm:$0xff]
    %v1022 = vld [vmem:[%s1020 + $0x8] sm:$0xff]
    %v1023 = vld [vmem:[%s1020 + $0x10] sm:$0xff]
    %v1024 = vld [vmem:[%s1020 + $0x18] sm:$0xff]
    %1025 = vmatpush.bf16.msra.mxu0 %v608
    %1026 = vmatpush.bf16.msra.mxu0 %v604
    %1027 = vmatpush.bf16.msra.mxu0 %v600
    %1028 = vmatpush.bf16.msra.mxu0 %v596
    %1029 = vmatpush.bf16.msra.mxu0 %v592
    %1030 = vmatpush.bf16.msra.mxu0 %v588
    %1031 = vmatpush.bf16.msra.mxu0 %v584
    %1032 = vmatpush.bf16.msra.mxu0 %v580
    %1033 = vmatmul.bf16.gmra.mxu0 %v1017
    %v1034 = vpop.f32.mrf.mxu0
    %v1035 = vadd.f32 0.0, %v1034
    %v1036 = vpop.f32.mrf.mxu0
    %1037 = vdwg.mxu0
    %1038 = vmatpush.bf16.msra.mxu0 %v609
    %1039 = vmatpush.bf16.msra.mxu0 %v605
    %1040 = vmatpush.bf16.msra.mxu0 %v601
    %1041 = vmatpush.bf16.msra.mxu0 %v597
    %1042 = vmatpush.bf16.msra.mxu0 %v593
    %1043 = vmatpush.bf16.msra.mxu0 %v589
    %1044 = vmatpush.bf16.msra.mxu0 %v585
    %1045 = vmatpush.bf16.msra.mxu0 %v581
    %1046 = vmatmul.bf16.gmra.mxu0 %v1017
    %v1047 = vpop.f32.mrf.mxu0
    %v1048 = vadd.f32 0.0, %v1047
    %v1049 = vpop.f32.mrf.mxu0
    %1050 = vdwg.mxu0
    %1051 = vmatpush.bf16.msra.mxu0 %v610
    %1052 = vmatpush.bf16.msra.mxu0 %v606
    %1053 = vmatpush.bf16.msra.mxu0 %v602
    %1054 = vmatpush.bf16.msra.mxu0 %v598
    %1055 = vmatpush.bf16.msra.mxu0 %v594
    %1056 = vmatpush.bf16.msra.mxu0 %v590
    %1057 = vmatpush.bf16.msra.mxu0 %v586
    %1058 = vmatpush.bf16.msra.mxu0 %v582
    %1059 = vmatmul.bf16.gmra.mxu0 %v1017
    %v1060 = vpop.f32.mrf.mxu0
    %v1061 = vadd.f32 0.0, %v1060
    %v1062 = vpop.f32.mrf.mxu0
    %1063 = vdwg.mxu0
    %1064 = vmatpush.bf16.msra.mxu0 %v611
    %1065 = vmatpush.bf16.msra.mxu0 %v607
    %1066 = vmatpush.bf16.msra.mxu0 %v603
    %1067 = vmatpush.bf16.msra.mxu0 %v599
    %1068 = vmatpush.bf16.msra.mxu0 %v595
    %1069 = vmatpush.bf16.msra.mxu0 %v591
    %1070 = vmatpush.bf16.msra.mxu0 %v587
    %1071 = vmatpush.bf16.msra.mxu0 %v583
    %1072 = vmatmul.bf16.gmra.mxu0 %v1017
    %v1073 = vpop.f32.mrf.mxu0
    %v1074 = vadd.f32 0.0, %v1073
    %v1075 = vpop.f32.mrf.mxu0
    %1076 = vdwg.mxu0
    %v1077 = vadd.f32 %v1021, %v1035
    %v1078 = vadd.f32 %v1022, %v1048
    %v1079 = vadd.f32 %v1023, %v1061
    %v1080 = vadd.f32 %v1024, %v1074
    %v1081 = vxor.u32 %v1077, 2147483648
    %v1082 = vmul.f32 %v1081, 1.442695
    %v1083 = vpow.pop %v1082
    %v1084 = vadd.f32 %v1083, 1.0
    %v1085 = vrcp.pop %v1084
    %v1086 = vmul.f32 %v1084, %v1085
    %v1087 = vsub.f32 1.0, %v1086
    %v1088 = vmul.f32 %v1085, %v1087
    %v1089 = vadd.f32 %v1085, %v1088
    %vm1090 = vweird.f32 %v1084
    %vm1091 = vweird.f32 %v1085
    %vm1092 = vmor %vm1090, %vm1091
    %v1093 = vsel %vm1092, %v1085, %v1089
    %v1094 = vand.u32 2147483647, %v1084
    %vm1095 = vcmp.eq.f32.partialorder %v1094, 8.507059e+37
    %v1096 = vand.u32 %v1084, 2147483648
    %v1097 = vor.u32 1.1754944e-38, %v1096
    %v1098 = vsel %vm1095, %v1097, %v1093
    %v1099 = vmul.f32 1.0, %v1098
    %v1100 = vxor.u32 %v1078, 2147483648
    %v1101 = vmul.f32 %v1100, 1.442695
    %v1102 = vpow.pop %v1101
    %v1103 = vadd.f32 %v1102, 1.0
    %v1104 = vrcp.pop %v1103
    %v1105 = vmul.f32 %v1103, %v1104
    %v1106 = vsub.f32 1.0, %v1105
    %v1107 = vmul.f32 %v1104, %v1106
    %v1108 = vadd.f32 %v1104, %v1107
    %vm1109 = vweird.f32 %v1103
    %vm1110 = vweird.f32 %v1104
    %vm1111 = vmor %vm1109, %vm1110
    %v1112 = vsel %vm1111, %v1104, %v1108
    %v1113 = vand.u32 2147483647, %v1103
    %vm1114 = vcmp.eq.f32.partialorder %v1113, 8.507059e+37
    %v1115 = vand.u32 %v1103, 2147483648
    %v1116 = vor.u32 1.1754944e-38, %v1115
    %v1117 = vsel %vm1114, %v1116, %v1112
    %v1118 = vmul.f32 1.0, %v1117
    %v1119 = vtanh.pop %v1079
    %v1120 = vxor.u32 %v1080, 2147483648
    %v1121 = vmul.f32 %v1120, 1.442695
    %v1122 = vpow.pop %v1121
    %v1123 = vadd.f32 %v1122, 1.0
    %v1124 = vrcp.pop %v1123
    %v1125 = vmul.f32 %v1123, %v1124
    %v1126 = vsub.f32 1.0, %v1125
    %v1127 = vmul.f32 %v1124, %v1126
    %v1128 = vadd.f32 %v1124, %v1127
    %vm1129 = vweird.f32 %v1123
    %vm1130 = vweird.f32 %v1124
    %vm1131 = vmor %vm1129, %vm1130
    %v1132 = vsel %vm1131, %v1124, %v1128
    %v1133 = vand.u32 2147483647, %v1123
    %vm1134 = vcmp.eq.f32.partialorder %v1133, 8.507059e+37
    %v1135 = vand.u32 %v1123, 2147483648
    %v1136 = vor.u32 1.1754944e-38, %v1135
    %v1137 = vsel %vm1134, %v1136, %v1132
    %v1138 = vmul.f32 1.0, %v1137
    %v1139 = vmul.f32 %v1118, %v1014
    %v1140 = vmul.f32 %v1099, %v1119
    %v1141 = vadd.f32 %v1139, %v1140
    %v1142 = vtanh.pop %v1141
    %v1143 = vmul.f32 %v1138, %v1142
    %v1144 = vpack.c.bf16 %v1143, %v1143
    %s1145 = smul.u32 4, 4
    %s1146 = smul.addr %s1145, 8
    %s1147 = scalar_lea.vmem [#allocation4], %s1146
    %v1148 = vld [vmem:[%s1147] sm:$0xff]
    %v1149 = vld [vmem:[%s1147 + $0x8] sm:$0xff]
    %v1150 = vld [vmem:[%s1147 + $0x10] sm:$0xff]
    %v1151 = vld [vmem:[%s1147 + $0x18] sm:$0xff]
    %1152 = vmatpush.bf16.msra.mxu0 %v608
    %1153 = vmatpush.bf16.msra.mxu0 %v604
    %1154 = vmatpush.bf16.msra.mxu0 %v600
    %1155 = vmatpush.bf16.msra.mxu0 %v596
    %1156 = vmatpush.bf16.msra.mxu0 %v592
    %1157 = vmatpush.bf16.msra.mxu0 %v588
    %1158 = vmatpush.bf16.msra.mxu0 %v584
    %1159 = vmatpush.bf16.msra.mxu0 %v580
    %1160 = vmatmul.bf16.gmra.mxu0 %v1144
    %v1161 = vpop.f32.mrf.mxu0
    %v1162 = vadd.f32 0.0, %v1161
    %v1163 = vpop.f32.mrf.mxu0
    %1164 = vdwg.mxu0
    %1165 = vmatpush.bf16.msra.mxu0 %v609
    %1166 = vmatpush.bf16.msra.mxu0 %v605
    %1167 = vmatpush.bf16.msra.mxu0 %v601
    %1168 = vmatpush.bf16.msra.mxu0 %v597
    %1169 = vmatpush.bf16.msra.mxu0 %v593
    %1170 = vmatpush.bf16.msra.mxu0 %v589
    %1171 = vmatpush.bf16.msra.mxu0 %v585
    %1172 = vmatpush.bf16.msra.mxu0 %v581
    %1173 = vmatmul.bf16.gmra.mxu0 %v1144
    %v1174 = vpop.f32.mrf.mxu0
    %v1175 = vadd.f32 0.0, %v1174
    %v1176 = vpop.f32.mrf.mxu0
    %1177 = vdwg.mxu0
    %1178 = vmatpush.bf16.msra.mxu0 %v610
    %1179 = vmatpush.bf16.msra.mxu0 %v606
    %1180 = vmatpush.bf16.msra.mxu0 %v602
    %1181 = vmatpush.bf16.msra.mxu0 %v598
    %1182 = vmatpush.bf16.msra.mxu0 %v594
    %1183 = vmatpush.bf16.msra.mxu0 %v590
    %1184 = vmatpush.bf16.msra.mxu0 %v586
    %1185 = vmatpush.bf16.msra.mxu0 %v582
    %1186 = vmatmul.bf16.gmra.mxu0 %v1144
    %v1187 = vpop.f32.mrf.mxu0
    %v1188 = vadd.f32 0.0, %v1187
    %v1189 = vpop.f32.mrf.mxu0
    %1190 = vdwg.mxu0
    %1191 = vmatpush.bf16.msra.mxu0 %v611
    %1192 = vmatpush.bf16.msra.mxu0 %v607
    %1193 = vmatpush.bf16.msra.mxu0 %v603
    %1194 = vmatpush.bf16.msra.mxu0 %v599
    %1195 = vmatpush.bf16.msra.mxu0 %v595
    %1196 = vmatpush.bf16.msra.mxu0 %v591
    %1197 = vmatpush.bf16.msra.mxu0 %v587
    %1198 = vmatpush.bf16.msra.mxu0 %v583
    %1199 = vmatmul.bf16.gmra.mxu0 %v1144
    %v1200 = vpop.f32.mrf.mxu0
    %v1201 = vadd.f32 0.0, %v1200
    %v1202 = vpop.f32.mrf.mxu0
    %1203 = vdwg.mxu0
    %v1204 = vadd.f32 %v1148, %v1162
    %v1205 = vadd.f32 %v1149, %v1175
    %v1206 = vadd.f32 %v1150, %v1188
    %v1207 = vadd.f32 %v1151, %v1201
    %v1208 = vxor.u32 %v1204, 2147483648
    %v1209 = vmul.f32 %v1208, 1.442695
    %v1210 = vpow.pop %v1209
    %v1211 = vadd.f32 %v1210, 1.0
    %v1212 = vrcp.pop %v1211
    %v1213 = vmul.f32 %v1211, %v1212
    %v1214 = vsub.f32 1.0, %v1213
    %v1215 = vmul.f32 %v1212, %v1214
    %v1216 = vadd.f32 %v1212, %v1215
    %vm1217 = vweird.f32 %v1211
    %vm1218 = vweird.f32 %v1212
    %vm1219 = vmor %vm1217, %vm1218
    %v1220 = vsel %vm1219, %v1212, %v1216
    %v1221 = vand.u32 2147483647, %v1211
    %vm1222 = vcmp.eq.f32.partialorder %v1221, 8.507059e+37
    %v1223 = vand.u32 %v1211, 2147483648
    %v1224 = vor.u32 1.1754944e-38, %v1223
    %v1225 = vsel %vm1222, %v1224, %v1220
    %v1226 = vmul.f32 1.0, %v1225
    %v1227 = vxor.u32 %v1205, 2147483648
    %v1228 = vmul.f32 %v1227, 1.442695
    %v1229 = vpow.pop %v1228
    %v1230 = vadd.f32 %v1229, 1.0
    %v1231 = vrcp.pop %v1230
    %v1232 = vmul.f32 %v1230, %v1231
    %v1233 = vsub.f32 1.0, %v1232
    %v1234 = vmul.f32 %v1231, %v1233
    %v1235 = vadd.f32 %v1231, %v1234
    %vm1236 = vweird.f32 %v1230
    %vm1237 = vweird.f32 %v1231
    %vm1238 = vmor %vm1236, %vm1237
    %v1239 = vsel %vm1238, %v1231, %v1235
    %v1240 = vand.u32 2147483647, %v1230
    %vm1241 = vcmp.eq.f32.partialorder %v1240, 8.507059e+37
    %v1242 = vand.u32 %v1230, 2147483648
    %v1243 = vor.u32 1.1754944e-38, %v1242
    %v1244 = vsel %vm1241, %v1243, %v1239
    %v1245 = vmul.f32 1.0, %v1244
    %v1246 = vtanh.pop %v1206
    %v1247 = vxor.u32 %v1207, 2147483648
    %v1248 = vmul.f32 %v1247, 1.442695
    %v1249 = vpow.pop %v1248
    %v1250 = vadd.f32 %v1249, 1.0
    %v1251 = vrcp.pop %v1250
    %v1252 = vmul.f32 %v1250, %v1251
    %v1253 = vsub.f32 1.0, %v1252
    %v1254 = vmul.f32 %v1251, %v1253
    %v1255 = vadd.f32 %v1251, %v1254
    %vm1256 = vweird.f32 %v1250
    %vm1257 = vweird.f32 %v1251
    %vm1258 = vmor %vm1256, %vm1257
    %v1259 = vsel %vm1258, %v1251, %v1255
    %v1260 = vand.u32 2147483647, %v1250
    %vm1261 = vcmp.eq.f32.partialorder %v1260, 8.507059e+37
    %v1262 = vand.u32 %v1250, 2147483648
    %v1263 = vor.u32 1.1754944e-38, %v1262
    %v1264 = vsel %vm1261, %v1263, %v1259
    %v1265 = vmul.f32 1.0, %v1264
    %v1266 = vmul.f32 %v1245, %v1141
    %v1267 = vmul.f32 %v1226, %v1246
    %v1268 = vadd.f32 %v1266, %v1267
    %v1269 = vtanh.pop %v1268
    %v1270 = vmul.f32 %v1265, %v1269
    %v1271 = vpack.c.bf16 %v1270, %v1270
    %s1272 = smul.u32 5, 4
    %s1273 = smul.addr %s1272, 8
    %s1274 = scalar_lea.vmem [#allocation4], %s1273
    %v1275 = vld [vmem:[%s1274] sm:$0xff]
    %v1276 = vld [vmem:[%s1274 + $0x8] sm:$0xff]
    %v1277 = vld [vmem:[%s1274 + $0x10] sm:$0xff]
    %v1278 = vld [vmem:[%s1274 + $0x18] sm:$0xff]
    %1279 = vmatpush.bf16.msra.mxu0 %v608
    %1280 = vmatpush.bf16.msra.mxu0 %v604
    %1281 = vmatpush.bf16.msra.mxu0 %v600
    %1282 = vmatpush.bf16.msra.mxu0 %v596
    %1283 = vmatpush.bf16.msra.mxu0 %v592
    %1284 = vmatpush.bf16.msra.mxu0 %v588
    %1285 = vmatpush.bf16.msra.mxu0 %v584
    %1286 = vmatpush.bf16.msra.mxu0 %v580
    %1287 = vmatmul.bf16.gmra.mxu0 %v1271
    %v1288 = vpop.f32.mrf.mxu0
    %v1289 = vadd.f32 0.0, %v1288
    %v1290 = vpop.f32.mrf.mxu0
    %1291 = vdwg.mxu0
    %1292 = vmatpush.bf16.msra.mxu0 %v609
    %1293 = vmatpush.bf16.msra.mxu0 %v605
    %1294 = vmatpush.bf16.msra.mxu0 %v601
    %1295 = vmatpush.bf16.msra.mxu0 %v597
    %1296 = vmatpush.bf16.msra.mxu0 %v593
    %1297 = vmatpush.bf16.msra.mxu0 %v589
    %1298 = vmatpush.bf16.msra.mxu0 %v585
    %1299 = vmatpush.bf16.msra.mxu0 %v581
    %1300 = vmatmul.bf16.gmra.mxu0 %v1271
    %v1301 = vpop.f32.mrf.mxu0
    %v1302 = vadd.f32 0.0, %v1301
    %v1303 = vpop.f32.mrf.mxu0
    %1304 = vdwg.mxu0
    %1305 = vmatpush.bf16.msra.mxu0 %v610
    %1306 = vmatpush.bf16.msra.mxu0 %v606
    %1307 = vmatpush.bf16.msra.mxu0 %v602
    %1308 = vmatpush.bf16.msra.mxu0 %v598
    %1309 = vmatpush.bf16.msra.mxu0 %v594
    %1310 = vmatpush.bf16.msra.mxu0 %v590
    %1311 = vmatpush.bf16.msra.mxu0 %v586
    %1312 = vmatpush.bf16.msra.mxu0 %v582
    %1313 = vmatmul.bf16.gmra.mxu0 %v1271
    %v1314 = vpop.f32.mrf.mxu0
    %v1315 = vadd.f32 0.0, %v1314
    %v1316 = vpop.f32.mrf.mxu0
    %1317 = vdwg.mxu0
    %1318 = vmatpush.bf16.msra.mxu0 %v611
    %1319 = vmatpush.bf16.msra.mxu0 %v607
    %1320 = vmatpush.bf16.msra.mxu0 %v603
    %1321 = vmatpush.bf16.msra.mxu0 %v599
    %1322 = vmatpush.bf16.msra.mxu0 %v595
    %1323 = vmatpush.bf16.msra.mxu0 %v591
    %1324 = vmatpush.bf16.msra.mxu0 %v587
    %1325 = vmatpush.bf16.msra.mxu0 %v583
    %1326 = vmatmul.bf16.gmra.mxu0 %v1271
    %v1327 = vpop.f32.mrf.mxu0
    %v1328 = vadd.f32 0.0, %v1327
    %v1329 = vpop.f32.mrf.mxu0
    %1330 = vdwg.mxu0
    %v1331 = vadd.f32 %v1275, %v1289
    %v1332 = vadd.f32 %v1276, %v1302
    %v1333 = vadd.f32 %v1277, %v1315
    %v1334 = vadd.f32 %v1278, %v1328
    %v1335 = vxor.u32 %v1331, 2147483648
    %v1336 = vmul.f32 %v1335, 1.442695
    %v1337 = vpow.pop %v1336
    %v1338 = vadd.f32 %v1337, 1.0
    %v1339 = vrcp.pop %v1338
    %v1340 = vmul.f32 %v1338, %v1339
    %v1341 = vsub.f32 1.0, %v1340
    %v1342 = vmul.f32 %v1339, %v1341
    %v1343 = vadd.f32 %v1339, %v1342
    %vm1344 = vweird.f32 %v1338
    %vm1345 = vweird.f32 %v1339
    %vm1346 = vmor %vm1344, %vm1345
    %v1347 = vsel %vm1346, %v1339, %v1343
    %v1348 = vand.u32 2147483647, %v1338
    %vm1349 = vcmp.eq.f32.partialorder %v1348, 8.507059e+37
    %v1350 = vand.u32 %v1338, 2147483648
    %v1351 = vor.u32 1.1754944e-38, %v1350
    %v1352 = vsel %vm1349, %v1351, %v1347
    %v1353 = vmul.f32 1.0, %v1352
    %v1354 = vxor.u32 %v1332, 2147483648
    %v1355 = vmul.f32 %v1354, 1.442695
    %v1356 = vpow.pop %v1355
    %v1357 = vadd.f32 %v1356, 1.0
    %v1358 = vrcp.pop %v1357
    %v1359 = vmul.f32 %v1357, %v1358
    %v1360 = vsub.f32 1.0, %v1359
    %v1361 = vmul.f32 %v1358, %v1360
    %v1362 = vadd.f32 %v1358, %v1361
    %vm1363 = vweird.f32 %v1357
    %vm1364 = vweird.f32 %v1358
    %vm1365 = vmor %vm1363, %vm1364
    %v1366 = vsel %vm1365, %v1358, %v1362
    %v1367 = vand.u32 2147483647, %v1357
    %vm1368 = vcmp.eq.f32.partialorder %v1367, 8.507059e+37
    %v1369 = vand.u32 %v1357, 2147483648
    %v1370 = vor.u32 1.1754944e-38, %v1369
    %v1371 = vsel %vm1368, %v1370, %v1366
    %v1372 = vmul.f32 1.0, %v1371
    %v1373 = vtanh.pop %v1333
    %v1374 = vxor.u32 %v1334, 2147483648
    %v1375 = vmul.f32 %v1374, 1.442695
    %v1376 = vpow.pop %v1375
    %v1377 = vadd.f32 %v1376, 1.0
    %v1378 = vrcp.pop %v1377
    %v1379 = vmul.f32 %v1377, %v1378
    %v1380 = vsub.f32 1.0, %v1379
    %v1381 = vmul.f32 %v1378, %v1380
    %v1382 = vadd.f32 %v1378, %v1381
    %vm1383 = vweird.f32 %v1377
    %vm1384 = vweird.f32 %v1378
    %vm1385 = vmor %vm1383, %vm1384
    %v1386 = vsel %vm1385, %v1378, %v1382
    %v1387 = vand.u32 2147483647, %v1377
    %vm1388 = vcmp.eq.f32.partialorder %v1387, 8.507059e+37
    %v1389 = vand.u32 %v1377, 2147483648
    %v1390 = vor.u32 1.1754944e-38, %v1389
    %v1391 = vsel %vm1388, %v1390, %v1386
    %v1392 = vmul.f32 1.0, %v1391
    %v1393 = vmul.f32 %v1372, %v1268
    %v1394 = vmul.f32 %v1353, %v1373
    %v1395 = vadd.f32 %v1393, %v1394
    %v1396 = vtanh.pop %v1395
    %v1397 = vmul.f32 %v1392, %v1396
    %v1398 = vpack.c.bf16 %v1397, %v1397
    %s1399 = smul.u32 6, 4
    %s1400 = smul.addr %s1399, 8
    %s1401 = scalar_lea.vmem [#allocation4], %s1400
    %v1402 = vld [vmem:[%s1401] sm:$0xff]
    %v1403 = vld [vmem:[%s1401 + $0x8] sm:$0xff]
    %v1404 = vld [vmem:[%s1401 + $0x10] sm:$0xff]
    %v1405 = vld [vmem:[%s1401 + $0x18] sm:$0xff]
    %1406 = vmatpush.bf16.msra.mxu0 %v608
    %1407 = vmatpush.bf16.msra.mxu0 %v604
    %1408 = vmatpush.bf16.msra.mxu0 %v600
    %1409 = vmatpush.bf16.msra.mxu0 %v596
    %1410 = vmatpush.bf16.msra.mxu0 %v592
    %1411 = vmatpush.bf16.msra.mxu0 %v588
    %1412 = vmatpush.bf16.msra.mxu0 %v584
    %1413 = vmatpush.bf16.msra.mxu0 %v580
    %1414 = vmatmul.bf16.gmra.mxu0 %v1398
    %v1415 = vpop.f32.mrf.mxu0
    %v1416 = vadd.f32 0.0, %v1415
    %v1417 = vpop.f32.mrf.mxu0
    %1418 = vdwg.mxu0
    %1419 = vmatpush.bf16.msra.mxu0 %v609
    %1420 = vmatpush.bf16.msra.mxu0 %v605
    %1421 = vmatpush.bf16.msra.mxu0 %v601
    %1422 = vmatpush.bf16.msra.mxu0 %v597
    %1423 = vmatpush.bf16.msra.mxu0 %v593
    %1424 = vmatpush.bf16.msra.mxu0 %v589
    %1425 = vmatpush.bf16.msra.mxu0 %v585
    %1426 = vmatpush.bf16.msra.mxu0 %v581
    %1427 = vmatmul.bf16.gmra.mxu0 %v1398
    %v1428 = vpop.f32.mrf.mxu0
    %v1429 = vadd.f32 0.0, %v1428
    %v1430 = vpop.f32.mrf.mxu0
    %1431 = vdwg.mxu0
    %1432 = vmatpush.bf16.msra.mxu0 %v610
    %1433 = vmatpush.bf16.msra.mxu0 %v606
    %1434 = vmatpush.bf16.msra.mxu0 %v602
    %1435 = vmatpush.bf16.msra.mxu0 %v598
    %1436 = vmatpush.bf16.msra.mxu0 %v594
    %1437 = vmatpush.bf16.msra.mxu0 %v590
    %1438 = vmatpush.bf16.msra.mxu0 %v586
    %1439 = vmatpush.bf16.msra.mxu0 %v582
    %1440 = vmatmul.bf16.gmra.mxu0 %v1398
    %v1441 = vpop.f32.mrf.mxu0
    %v1442 = vadd.f32 0.0, %v1441
    %v1443 = vpop.f32.mrf.mxu0
    %1444 = vdwg.mxu0
    %1445 = vmatpush.bf16.msra.mxu0 %v611
    %1446 = vmatpush.bf16.msra.mxu0 %v607
    %1447 = vmatpush.bf16.msra.mxu0 %v603
    %1448 = vmatpush.bf16.msra.mxu0 %v599
    %1449 = vmatpush.bf16.msra.mxu0 %v595
    %1450 = vmatpush.bf16.msra.mxu0 %v591
    %1451 = vmatpush.bf16.msra.mxu0 %v587
    %1452 = vmatpush.bf16.msra.mxu0 %v583
    %1453 = vmatmul.bf16.gmra.mxu0 %v1398
    %v1454 = vpop.f32.mrf.mxu0
    %v1455 = vadd.f32 0.0, %v1454
    %v1456 = vpop.f32.mrf.mxu0
    %1457 = vdwg.mxu0
    %v1458 = vadd.f32 %v1402, %v1416
    %v1459 = vadd.f32 %v1403, %v1429
    %v1460 = vadd.f32 %v1404, %v1442
    %v1461 = vadd.f32 %v1405, %v1455
    %v1462 = vxor.u32 %v1458, 2147483648
    %v1463 = vmul.f32 %v1462, 1.442695
    %v1464 = vpow.pop %v1463
    %v1465 = vadd.f32 %v1464, 1.0
    %v1466 = vrcp.pop %v1465
    %v1467 = vmul.f32 %v1465, %v1466
    %v1468 = vsub.f32 1.0, %v1467
    %v1469 = vmul.f32 %v1466, %v1468
    %v1470 = vadd.f32 %v1466, %v1469
    %vm1471 = vweird.f32 %v1465
    %vm1472 = vweird.f32 %v1466
    %vm1473 = vmor %vm1471, %vm1472
    %v1474 = vsel %vm1473, %v1466, %v1470
    %v1475 = vand.u32 2147483647, %v1465
    %vm1476 = vcmp.eq.f32.partialorder %v1475, 8.507059e+37
    %v1477 = vand.u32 %v1465, 2147483648
    %v1478 = vor.u32 1.1754944e-38, %v1477
    %v1479 = vsel %vm1476, %v1478, %v1474
    %v1480 = vmul.f32 1.0, %v1479
    %v1481 = vxor.u32 %v1459, 2147483648
    %v1482 = vmul.f32 %v1481, 1.442695
    %v1483 = vpow.pop %v1482
    %v1484 = vadd.f32 %v1483, 1.0
    %v1485 = vrcp.pop %v1484
    %v1486 = vmul.f32 %v1484, %v1485
    %v1487 = vsub.f32 1.0, %v1486
    %v1488 = vmul.f32 %v1485, %v1487
    %v1489 = vadd.f32 %v1485, %v1488
    %vm1490 = vweird.f32 %v1484
    %vm1491 = vweird.f32 %v1485
    %vm1492 = vmor %vm1490, %vm1491
    %v1493 = vsel %vm1492, %v1485, %v1489
    %v1494 = vand.u32 2147483647, %v1484
    %vm1495 = vcmp.eq.f32.partialorder %v1494, 8.507059e+37
    %v1496 = vand.u32 %v1484, 2147483648
    %v1497 = vor.u32 1.1754944e-38, %v1496
    %v1498 = vsel %vm1495, %v1497, %v1493
    %v1499 = vmul.f32 1.0, %v1498
    %v1500 = vtanh.pop %v1460
    %v1501 = vxor.u32 %v1461, 2147483648
    %v1502 = vmul.f32 %v1501, 1.442695
    %v1503 = vpow.pop %v1502
    %v1504 = vadd.f32 %v1503, 1.0
    %v1505 = vrcp.pop %v1504
    %v1506 = vmul.f32 %v1504, %v1505
    %v1507 = vsub.f32 1.0, %v1506
    %v1508 = vmul.f32 %v1505, %v1507
    %v1509 = vadd.f32 %v1505, %v1508
    %vm1510 = vweird.f32 %v1504
    %vm1511 = vweird.f32 %v1505
    %vm1512 = vmor %vm1510, %vm1511
    %v1513 = vsel %vm1512, %v1505, %v1509
    %v1514 = vand.u32 2147483647, %v1504
    %vm1515 = vcmp.eq.f32.partialorder %v1514, 8.507059e+37
    %v1516 = vand.u32 %v1504, 2147483648
    %v1517 = vor.u32 1.1754944e-38, %v1516
    %v1518 = vsel %vm1515, %v1517, %v1513
    %v1519 = vmul.f32 1.0, %v1518
    %v1520 = vmul.f32 %v1499, %v1395
    %v1521 = vmul.f32 %v1480, %v1500
    %v1522 = vadd.f32 %v1520, %v1521
    %v1523 = vtanh.pop %v1522
    %v1524 = vmul.f32 %v1519, %v1523
    %v1525 = vpack.c.bf16 %v1524, %v1524
    %s1526 = smul.u32 7, 4
    %s1527 = smul.addr %s1526, 8
    %s1528 = scalar_lea.vmem [#allocation4], %s1527
    %v1529 = vld [vmem:[%s1528] sm:$0xff]
    %v1530 = vld [vmem:[%s1528 + $0x8] sm:$0xff]
    %v1531 = vld [vmem:[%s1528 + $0x10] sm:$0xff]
    %v1532 = vld [vmem:[%s1528 + $0x18] sm:$0xff]
    %1533 = vmatpush.bf16.msra.mxu0 %v608
    %1534 = vmatpush.bf16.msra.mxu0 %v604
    %1535 = vmatpush.bf16.msra.mxu0 %v600
    %1536 = vmatpush.bf16.msra.mxu0 %v596
    %1537 = vmatpush.bf16.msra.mxu0 %v592
    %1538 = vmatpush.bf16.msra.mxu0 %v588
    %1539 = vmatpush.bf16.msra.mxu0 %v584
    %1540 = vmatpush.bf16.msra.mxu0 %v580
    %1541 = vmatmul.bf16.gmra.mxu0 %v1525
    %v1542 = vpop.f32.mrf.mxu0
    %v1543 = vadd.f32 0.0, %v1542
    %v1544 = vpop.f32.mrf.mxu0
    %1545 = vdwg.mxu0
    %1546 = vmatpush.bf16.msra.mxu0 %v609
    %1547 = vmatpush.bf16.msra.mxu0 %v605
    %1548 = vmatpush.bf16.msra.mxu0 %v601
    %1549 = vmatpush.bf16.msra.mxu0 %v597
    %1550 = vmatpush.bf16.msra.mxu0 %v593
    %1551 = vmatpush.bf16.msra.mxu0 %v589
    %1552 = vmatpush.bf16.msra.mxu0 %v585
    %1553 = vmatpush.bf16.msra.mxu0 %v581
    %1554 = vmatmul.bf16.gmra.mxu0 %v1525
    %v1555 = vpop.f32.mrf.mxu0
    %v1556 = vadd.f32 0.0, %v1555
    %v1557 = vpop.f32.mrf.mxu0
    %1558 = vdwg.mxu0
    %1559 = vmatpush.bf16.msra.mxu0 %v610
    %1560 = vmatpush.bf16.msra.mxu0 %v606
    %1561 = vmatpush.bf16.msra.mxu0 %v602
    %1562 = vmatpush.bf16.msra.mxu0 %v598
    %1563 = vmatpush.bf16.msra.mxu0 %v594
    %1564 = vmatpush.bf16.msra.mxu0 %v590
    %1565 = vmatpush.bf16.msra.mxu0 %v586
    %1566 = vmatpush.bf16.msra.mxu0 %v582
    %1567 = vmatmul.bf16.gmra.mxu0 %v1525
    %v1568 = vpop.f32.mrf.mxu0
    %v1569 = vadd.f32 0.0, %v1568
    %v1570 = vpop.f32.mrf.mxu0
    %1571 = vdwg.mxu0
    %1572 = vmatpush.bf16.msra.mxu0 %v611
    %1573 = vmatpush.bf16.msra.mxu0 %v607
    %1574 = vmatpush.bf16.msra.mxu0 %v603
    %1575 = vmatpush.bf16.msra.mxu0 %v599
    %1576 = vmatpush.bf16.msra.mxu0 %v595
    %1577 = vmatpush.bf16.msra.mxu0 %v591
    %1578 = vmatpush.bf16.msra.mxu0 %v587
    %1579 = vmatpush.bf16.msra.mxu0 %v583
    %1580 = vmatmul.bf16.gmra.mxu0 %v1525
    %v1581 = vpop.f32.mrf.mxu0
    %v1582 = vadd.f32 0.0, %v1581
    %v1583 = vpop.f32.mrf.mxu0
    %1584 = vdwg.mxu0
    %v1585 = vadd.f32 %v1529, %v1543
    %v1586 = vadd.f32 %v1530, %v1556
    %v1587 = vadd.f32 %v1531, %v1569
    %v1588 = vadd.f32 %v1532, %v1582
    %v1589 = vxor.u32 %v1585, 2147483648
    %v1590 = vmul.f32 %v1589, 1.442695
    %v1591 = vpow.pop %v1590
    %v1592 = vadd.f32 %v1591, 1.0
    %v1593 = vrcp.pop %v1592
    %v1594 = vmul.f32 %v1592, %v1593
    %v1595 = vsub.f32 1.0, %v1594
    %v1596 = vmul.f32 %v1593, %v1595
    %v1597 = vadd.f32 %v1593, %v1596
    %vm1598 = vweird.f32 %v1592
    %vm1599 = vweird.f32 %v1593
    %vm1600 = vmor %vm1598, %vm1599
    %v1601 = vsel %vm1600, %v1593, %v1597
    %v1602 = vand.u32 2147483647, %v1592
    %vm1603 = vcmp.eq.f32.partialorder %v1602, 8.507059e+37
    %v1604 = vand.u32 %v1592, 2147483648
    %v1605 = vor.u32 1.1754944e-38, %v1604
    %v1606 = vsel %vm1603, %v1605, %v1601
    %v1607 = vmul.f32 1.0, %v1606
    %v1608 = vxor.u32 %v1586, 2147483648
    %v1609 = vmul.f32 %v1608, 1.442695
    %v1610 = vpow.pop %v1609
    %v1611 = vadd.f32 %v1610, 1.0
    %v1612 = vrcp.pop %v1611
    %v1613 = vmul.f32 %v1611, %v1612
    %v1614 = vsub.f32 1.0, %v1613
    %v1615 = vmul.f32 %v1612, %v1614
    %v1616 = vadd.f32 %v1612, %v1615
    %vm1617 = vweird.f32 %v1611
    %vm1618 = vweird.f32 %v1612
    %vm1619 = vmor %vm1617, %vm1618
    %v1620 = vsel %vm1619, %v1612, %v1616
    %v1621 = vand.u32 2147483647, %v1611
    %vm1622 = vcmp.eq.f32.partialorder %v1621, 8.507059e+37
    %v1623 = vand.u32 %v1611, 2147483648
    %v1624 = vor.u32 1.1754944e-38, %v1623
    %v1625 = vsel %vm1622, %v1624, %v1620
    %v1626 = vmul.f32 1.0, %v1625
    %v1627 = vtanh.pop %v1587
    %v1628 = vxor.u32 %v1588, 2147483648
    %v1629 = vmul.f32 %v1628, 1.442695
    %v1630 = vpow.pop %v1629
    %v1631 = vadd.f32 %v1630, 1.0
    %v1632 = vrcp.pop %v1631
    %v1633 = vmul.f32 %v1631, %v1632
    %v1634 = vsub.f32 1.0, %v1633
    %v1635 = vmul.f32 %v1632, %v1634
    %v1636 = vadd.f32 %v1632, %v1635
    %vm1637 = vweird.f32 %v1631
    %vm1638 = vweird.f32 %v1632
    %vm1639 = vmor %vm1637, %vm1638
    %v1640 = vsel %vm1639, %v1632, %v1636
    %v1641 = vand.u32 2147483647, %v1631
    %vm1642 = vcmp.eq.f32.partialorder %v1641, 8.507059e+37
    %v1643 = vand.u32 %v1631, 2147483648
    %v1644 = vor.u32 1.1754944e-38, %v1643
    %v1645 = vsel %vm1642, %v1644, %v1640
    %v1646 = vmul.f32 1.0, %v1645
    %v1647 = vmul.f32 %v1626, %v1522
    %v1648 = vmul.f32 %v1607, %v1627
    %v1649 = vadd.f32 %v1647, %v1648
    %v1650 = vtanh.pop %v1649
    %v1651 = vmul.f32 %v1646, %v1650
    %v1652 = vpack.c.bf16 %v1651, %v1651
    %1653 = vst [vmem:[#allocation2] sm:$0xf] %v1652
    %1654 = vst [vmem:[#allocation3] sm:$0xff] %v1649
    // Predicated region
    $region42: #{tpu_custom_call.1} parent=1 // pred_check
      %p1655 = pneg %p47
    $region43: #{tpu_custom_call.1} parent=1 // pred_check_branch
      %1657 = sbr.rel (%p1655) target = $region45
    $region44: #{tpu_custom_call.1} parent=1 // pred_region
      %v1658 = vlaneseq
      %v1659 = vand.u32 %v1658, 127
      %vm1660 = vcmp.lt.s32.totalorder %v1659, 32
      %v1661 = vsel %vm1660, %v1649, 0.0
      %1662 = vadd.xlane.f32.xlu0 %v1661
      %v1663 = vpop.xlane.xlu0 %1662
      %v1664 = vmul.f32 %v1663, 0.03125
      %v1665 = vsub.f32 %v1649, %v1664
      %v1666 = vmul.f32 %v1665, %v1665
      %v1667 = vsel %vm1660, %v1666, 0.0
      %1668 = vadd.xlane.f32.xlu0 %v1667
      %v1669 = vpop.xlane.xlu0 %1668
      %v1670 = vmul.f32 %v1669, 0.03125
      %v1671 = vadd.f32 %v1670, 1e-05
      %v1672 = vrsqrt.pop %v1671
      %v1673 = vmul.f32 %v1672, %v1671
      %v1674 = vmul.f32 %v1673, %v1672
      %v1675 = vmul.f32 0.5, %v1674
      %v1676 = vsub.f32 1.5, %v1675
      %v1677 = vmul.f32 %v1672, %v1676
      %vm1678 = vweird.f32 %v1671
      %vm1679 = vweird.f32 %v1672
      %vm1680 = vmor %vm1678, %vm1679
      %v1681 = vsel %vm1680, %v1672, %v1677
      %v1682 = vmul.f32 %v1665, %v1681
      %v1683 = vld [vmem:[%s4] sm:$0x1]
      %v1685 = vperm.slane %v1683, 0
      %v1687 = vmul.f32 %v1682, %v1685
      %v1688 = vld [vmem:[%s5] sm:$0x1]
      %v1690 = vperm.slane %v1688, 0
      %v1692 = vadd.f32 %v1687, %v1690
      %v1693 = vld [vmem:[%s6] sm:$0xff]
      %v1694 = vld [vmem:[%s6 + $0x8] sm:$0xff]
      %v1695 = vld [vmem:[%s6 + $0x10] sm:$0xff]
      %v1696 = vld [vmem:[%s6 + $0x18] sm:$0xff]
      %v1697 = vld [vmem:[%s6 + $0x20] sm:$0xff]
      %v1698 = vld [vmem:[%s6 + $0x28] sm:$0xff]
      %v1699 = vld [vmem:[%s6 + $0x30] sm:$0xff]
      %v1700 = vld [vmem:[%s6 + $0x38] sm:$0xff]
      %v1701 = vld [vmem:[%s6 + $0x40] sm:$0xff]
      %v1702 = vld [vmem:[%s6 + $0x48] sm:$0xff]
      %v1703 = vld [vmem:[%s6 + $0x50] sm:$0xff]
      %v1704 = vld [vmem:[%s6 + $0x58] sm:$0xff]
      %v1705 = vld [vmem:[%s6 + $0x60] sm:$0xff]
      %v1706 = vld [vmem:[%s6 + $0x68] sm:$0xff]
      %v1707 = vld [vmem:[%s6 + $0x70] sm:$0xff]
      %v1708 = vld [vmem:[%s6 + $0x78] sm:$0xff]
      %v1709 = vld [vmem:[%s7] sm:$0x1]
      %v1711 = vperm.slane %v1709, 0
      %1713 = vmatpush.msra.mxu0 %v1708
      %1714 = vmatpush.msra.mxu0 %v1707
      %1715 = vmatpush.msra.mxu0 %v1706
      %1716 = vmatpush.msra.mxu0 %v1705
      %1717 = vmatpush.msra.mxu0 %v1704
      %1718 = vmatpush.msra.mxu0 %v1703
      %1719 = vmatpush.msra.mxu0 %v1702
      %1720 = vmatpush.msra.mxu0 %v1701
      %1721 = vmatpush.msra.mxu0 %v1700
      %1722 = vmatpush.msra.mxu0 %v1699
      %1723 = vmatpush.msra.mxu0 %v1698
      %1724 = vmatpush.msra.mxu0 %v1697
      %1725 = vmatpush.msra.mxu0 %v1696
      %1726 = vmatpush.msra.mxu0 %v1695
      %1727 = vmatpush.msra.mxu0 %v1694
      %1728 = vmatpush.msra.mxu0 %v1693
      %1729 = vmatmul.f32.gmra.mxu0 %v1692
      %v1730 = vpop.f32.mrf.mxu0
      %v1731 = vadd.f32 %v1711, %v1730
      %1732 = vdwg.mxu0
      %vm1733 = vcmask 39936
      %v1734 = vsel %vm1733, %v1731, -inf
      %1735 = vmax.xlane.f32.xlu0 %v1734
      %v1736 = vpop.xlane.xlu0 %1735
      %v1737 = vsub.f32 %v1731, %v1736
      %v1738 = vmul.f32 %v1737, 1.442695
      %v1739 = vpow.pop %v1738
      %v1740 = vsel %vm1733, %v1739, 0.0
      %1741 = vadd.xlane.f32.xlu0 %v1740
      %v1742 = vpop.xlane.xlu0 %1741
      %v1743 = vlog2.pop %v1742
      %v1744 = vmul.f32 %v1743, 0.6931472
      %v1745 = vsub.f32 %v1737, %v1744
      %1746 = vst.msk [vmem:[#allocation8] sm:$0xff] %vm1733, %v1745
    $region45: #{tpu_custom_call.1} parent=1 // pred_fallthru
      _
    // Predicated region
    $region46: #{tpu_custom_call.1} parent=1 // pred_check
      _
    $region47: #{tpu_custom_call.1} parent=1 // pred_check_branch
      %1748 = sbr.rel (0) target = $region49
    $region48: #{tpu_custom_call.1} parent=1 // pred_region
      %1750 = vsyncadd [#allocation7], 0
      %s1752 = sshll.u32 [#allocation8], 4
      %s1753 = int_to_ptr.vmem [resolvable:$true] %s1752
      %s1754 = sshll.u32 %s8, 4
      %s1755 = int_to_ptr.hbm [resolvable:$true] %s1754
      %1757 = dma.vmem_to_hbm [thread:$0]  %s1753, 128, %s1755, [#allocation7]
    $region49: #{tpu_custom_call.1} parent=1 // pred_fallthru
      _
    // Predicated region
    $region50: #{tpu_custom_call.1} parent=1 // pred_check
      _
    $region51: #{tpu_custom_call.1} parent=1 // pred_check_branch
      %1759 = sbr.rel (0) target = $region53
    $region52: #{tpu_custom_call.1} parent=1 // pred_region
      %1761 = dma.done [#allocation7], 128
    $region53: #{tpu_custom_call.1} parent=1 // pred_fallthru
      _
    %1762 = vsyncpa [#allocation6], 1
    %1763 = vsyncpa [#allocation7], 1

</llo_original>
